<compile_context>
chip_gen: v6e
topology: v6e:2x2x1
jax: 0.10.0
libtpu: 0.0.40
codegen_flags: <defaults>
</compile_context>

<pallas_src>
import functools

import jax
import jax.numpy as jnp
import numpy as np
from jax.experimental import pallas as pl
from jax.experimental.pallas import tpu as pltpu


# ----------------------------------------------------------------------------
# Fused kernel: all LSTM layers over the whole sequence + FC on the last step.
# ----------------------------------------------------------------------------
def _lstm_fc_kernel(x_ref, wih_ref, whh_ref, b_ref, fcw_ref, fcb_ref,
                    out_ref, seq_sc, *, seq_len, batch):
    """
    x_ref  : (T*B, P)    layer-0 input, time-major rows [t0b0, t0b1, t1b0, ...],
                         zero-padded from input_size to P = max(input_size, H)
    wih_ref: (L, P, 4H)  per layer W_ih^T, zero rows beyond the layer's true d_in
    whh_ref: (L, H, 4H)  per layer W_hh^T
    b_ref  : (L, 1, 4H)  per layer b_ih + b_hh
    fcw_ref: (H, O)      final Linear weight, transposed
    fcb_ref: (1, O)      final Linear bias
    out_ref: (B, O)      logits for the last time step
    seq_sc : (T*B, P)    VMEM scratch: previous layer's hidden-state sequence
    """
    T, B = seq_len, batch
    L = wih_ref.shape[0]
    P = wih_ref.shape[1]
    H = whh_ref.shape[1]
    G = 4 * H

    # Columns H..P of the scratch are never written (layers >= 1 have
    # d_in == H); zero the scratch once so the zero-padded weight rows never
    # multiply stale/NaN VMEM contents.  One tiny store, off the hot loop.
    seq_sc[...] = jnp.zeros_like(seq_sc)

    # Lane mask for the single-tanh gate activation, hoisted out of all loops
    # (JAX does not CSE broadcast/iota).
    lane = jax.lax.broadcasted_iota(jnp.int32, (B, G), 1)
    is_g = (lane >= 2 * H) & (lane < 3 * H)

    h = None
    for l in range(L):
        # Per-layer weight / bias loads hoisted out of the time loop.
        w_ih = wih_ref[l]                                   # (P, 4H)
        w_hh = whh_ref[l]                                   # (H, 4H)
        b = b_ref[l]                                        # (1, 4H)

        # Whole-sequence input projection: ONE batched MXU matmul per layer,
        # entirely off the recurrent dependency chain.
        x_in = x_ref[...] if l == 0 else seq_sc[...]        # (T*B, P)
        x_proj = (jnp.dot(x_in, w_ih, preferred_element_type=jnp.float32)
                  + b)                                      # (T*B, 4H)

        h = jnp.zeros((B, H), jnp.float32)
        c = jnp.zeros((B, H), jnp.float32)
        for t in range(T):
            # Serial step: only the (B,H)@(H,4H) recurrent matmul remains.
            gates = x_proj[t * B:(t + 1) * B, :] + jnp.dot(
                h, w_hh, preferred_element_type=jnp.float32)        # (B, 4H)
            # sigmoid(x) == 0.5 * (1 + tanh(x/2)) -> one tanh EUP pass total.
            pre = jnp.where(is_g, gates, 0.5 * gates)
            th = jnp.tanh(pre)
            act = jnp.where(is_g, th, 0.5 * th + 0.5)
            i_g = act[:, 0 * H:1 * H]
            f_g = act[:, 1 * H:2 * H]
            g_g = act[:, 2 * H:3 * H]
            o_g = act[:, 3 * H:4 * H]
            c = f_g * c + i_g * g_g
            h = o_g * jnp.tanh(c)
            if l + 1 < L:
                # Feed the next layer.  Never read inside this layer's
                # recurrence -> stays off the critical chain.
                seq_sc[t * B:(t + 1) * B, 0:H] = h
        # h now holds this layer's final hidden state.

    # FC head on the top layer's final hidden state only (== out[:, -1, :]).
    out_ref[...] = (
        jnp.dot(h, fcw_ref[...], preferred_element_type=jnp.float32)
        + fcb_ref[...]
    ).astype(out_ref.dtype)


# ----------------------------------------------------------------------------
# Wrappers
# ----------------------------------------------------------------------------
def fused_lstm_fc(x_flat, w_ih, w_hh, b, fc_w, fc_b, *, seq_len, batch):
    """x_flat: (T*B, P) -> logits (B, O) via one fused kernel."""
    P = w_ih.shape[1]
    O = fc_w.shape[1]
    vmem = pltpu.MemorySpace.VMEM
    kernel = functools.partial(_lstm_fc_kernel, seq_len=seq_len, batch=batch)
    return pl.pallas_call(
        kernel,
        out_shape=jax.ShapeDtypeStruct((batch, O), jnp.float32),
        in_specs=[pl.BlockSpec(memory_space=vmem)] * 6,
        out_specs=pl.BlockSpec(memory_space=vmem),
        scratch_shapes=[pltpu.VMEM((seq_len * batch, P), jnp.float32)],
    )(x_flat, w_ih, w_hh, b, fc_w, fc_b)


def init_params(key, input_size, hidden_size, num_layers, output_size):
    """PyTorch-style uniform(-1/sqrt(H), 1/sqrt(H)) init + kernel-friendly packing."""
    H = hidden_size
    P = max(input_size, H)
    bound = 1.0 / (H ** 0.5)

    raw_layers = []
    for layer in range(num_layers):
        d_in = input_size if layer == 0 else H
        key, k1, k2, k3, k4 = jax.random.split(key, 5)
        w_ih = jax.random.uniform(k1, (4 * H, d_in), jnp.float32, -bound, bound)
        w_hh = jax.random.uniform(k2, (4 * H, H), jnp.float32, -bound, bound)
        b_ih = jax.random.uniform(k3, (4 * H,), jnp.float32, -bound, bound)
        b_hh = jax.random.uniform(k4, (4 * H,), jnp.float32, -bound, bound)
        raw_layers.append(dict(w_ih=w_ih, w_hh=w_hh, b=b_ih + b_hh))

    key, k1, k2 = jax.random.split(key, 3)
    w_fc = jax.random.uniform(k1, (output_size, H), jnp.float32, -bound, bound)
    b_fc = jax.random.uniform(k2, (output_size,), jnp.float32, -bound, bound)

    # Pack W_ih^T (zero-padded rows to P) and W_hh^T separately so each layer
    # runs one batched input-projection matmul + T small recurrent matmuls.
    wih_list, whh_list, b_list = [], [], []
    for p in raw_layers:
        wx = p["w_ih"].T                                    # (d_in, 4H)
        wx = jnp.pad(wx, ((0, P - wx.shape[0]), (0, 0)))    # (P, 4H), zero rows
        wih_list.append(wx)
        whh_list.append(p["w_hh"].T)                        # (H, 4H)
        b_list.append(p["b"].reshape(1, 4 * H))

    packed = dict(
        w_ih=jnp.stack(wih_list, axis=0),       # (L, P, 4H)
        w_hh=jnp.stack(whh_list, axis=0),       # (L, H, 4H)
        b=jnp.stack(b_list, axis=0),            # (L, 1, 4H)
        fc_w=w_fc.T,                            # (H, O)
        fc_b=b_fc.reshape(1, output_size),      # (1, O)
    )
    raw = dict(layers=raw_layers, fc_w=w_fc, fc_b=b_fc)
    return packed, raw


@jax.jit
def lstm_model_forward(params, x_btd):
    """Equivalent of LSTMModel.forward: (B, T, input_size) -> (B, output_size).

    Note: B=2 uses only 2 of 8 f32 sublanes / 2 MXU rows; stacking more
    sequences into the batch dimension (up to B~128) is essentially free in
    latency, so callers with more traffic should batch them here.
    """
    B, T, D = x_btd.shape
    P = params["w_ih"].shape[1]
    x_tbd = jnp.transpose(x_btd, (1, 0, 2)).astype(jnp.float32)  # time-major
    x_flat = x_tbd.reshape(T * B, D)
    if D < P:
        # Zero-pad input lanes; matches the zero-padded W_ih rows.
        x_flat = jnp.pad(x_flat, ((0, 0), (0, P - D)))
    return fused_lstm_fc(x_flat, params["w_ih"], params["w_hh"], params["b"],
                         params["fc_w"], params["fc_b"], seq_len=T, batch=B)


def lstm_model_reference(raw, x_btd):
    """Pure-numpy reference mirroring torch.nn.LSTM + Linear semantics."""
    def sigmoid(v):
        return 1.0 / (1.0 + np.exp(-v))

    x = np.asarray(x_btd, np.float32)
    B, T, _ = x.shape
    seq = x
    for p in raw["layers"]:
        w_ih = np.asarray(p["w_ih"])
        w_hh = np.asarray(p["w_hh"])
        b = np.asarray(p["b"])
        H = w_hh.shape[1]
        h = np.zeros((B, H), np.float32)
        c = np.zeros((B, H), np.float32)
        outs = []
        for t in range(T):
            g = seq[:, t, :] @ w_ih.T + h @ w_hh.T + b
            i = sigmoid(g[:, 0:H])
            f = sigmoid(g[:, H:2 * H])
            gg = np.tanh(g[:, 2 * H:3 * H])
            o = sigmoid(g[:, 3 * H:4 * H])
            c = f * c + i * gg
            h = o * np.tanh(c)
            outs.append(h)
        seq = np.stack(outs, axis=1)
    return seq[:, -1, :] @ np.asarray(raw["fc_w"]).T + np.asarray(raw["fc_b"])


if __name__ == "__main__":
    batch = 2
    seq_len = 8
    input_size = 16
    hidden_size = 32
    num_layers = 5
    output_size = 4   # len({'Browsing', 'CHAT', 'P2P', 'VOIP'})

    key = jax.random.PRNGKey(0)
    key, pkey, xkey = jax.random.split(key, 3)
    params, raw = init_params(pkey, input_size, hidden_size, num_layers,
                              output_size)
    x = jax.random.normal(xkey, (batch, seq_len, input_size), dtype=jnp.float32)

    out = lstm_model_forward(params, x)
    jax.block_until_ready(out)
    assert out.shape == (batch, output_size), out.shape

    # Sanity check against a pure-numpy reference of the same math.
    ref = lstm_model_reference(raw, x)
    np.testing.assert_allclose(np.asarray(out), ref, rtol=5e-3, atol=5e-3)

    print("KERNEL_OK")
</pallas_src>

<mosaic_0001>
module attributes {stable_mosaic.version = 11 : i64} {
  func.func @_lstm_fc_kernel(%arg0: memref<16x32xf32, #tpu.memory_space<vmem>>, %arg1: memref<5x32x128xf32, #tpu.memory_space<vmem>>, %arg2: memref<5x32x128xf32, #tpu.memory_space<vmem>>, %arg3: memref<5x1x128xf32, #tpu.memory_space<vmem>>, %arg4: memref<32x4xf32, #tpu.memory_space<vmem>>, %arg5: memref<1x4xf32, #tpu.memory_space<vmem>>, %arg6: memref<2x4xf32, #tpu.memory_space<vmem>>, %arg7: memref<16x32xf32, #tpu.memory_space<vmem>>) attributes {dimension_semantics = [], scalar_prefetch = 0 : i64, scratch_operands = 1 : i64, tpu.core_type = #tpu.core_type<tc>} {
    %cst = arith.constant 0.000000e+00 : f32
    %0 = vector.broadcast %cst : f32 to vector<16x32xf32>
    %c0 = arith.constant 0 : index
    %c0_0 = arith.constant 0 : index
    %1 = vector.load %arg7[%c0, %c0_0] : memref<16x32xf32, #tpu.memory_space<vmem>>, vector<16x32xf32>
    tpu.vector_store %arg7[%c0, %c0_0], %0 {strides = array<i32>} : memref<16x32xf32, #tpu.memory_space<vmem>>, vector<16x32xf32>,
    %2 = tpu.iota {dimensions = array<i32: 1>} : vector<2x128xi32>
    %c64_i32 = arith.constant 64 : i32
    %3 = vector.broadcast %c64_i32 : i32 to vector<2x128xi32>
    %4 = arith.cmpi sge, %2, %3 : vector<2x128xi32>
    %c96_i32 = arith.constant 96 : i32
    %5 = vector.broadcast %c96_i32 : i32 to vector<2x128xi32>
    %6 = arith.cmpi slt, %2, %5 : vector<2x128xi32>
    %7 = arith.andi %4, %6 : vector<2x128xi1>
    %c0_1 = arith.constant 0 : index
    %c0_2 = arith.constant 0 : index
    %c0_3 = arith.constant 0 : index
    %8 = vector.load %arg1[%c0_1, %c0_2, %c0_3] : memref<5x32x128xf32, #tpu.memory_space<vmem>>, vector<1x32x128xf32>
    %9 = vector.shape_cast %8 : vector<1x32x128xf32> to vector<32x128xf32>
    %c0_4 = arith.constant 0 : index
    %c0_5 = arith.constant 0 : index
    %c0_6 = arith.constant 0 : index
    %10 = vector.load %arg2[%c0_4, %c0_5, %c0_6] : memref<5x32x128xf32, #tpu.memory_space<vmem>>, vector<1x32x128xf32>
    %11 = vector.shape_cast %10 : vector<1x32x128xf32> to vector<32x128xf32>
    %c0_7 = arith.constant 0 : index
    %c0_8 = arith.constant 0 : index
    %c0_9 = arith.constant 0 : index
    %12 = vector.load %arg3[%c0_7, %c0_8, %c0_9] : memref<5x1x128xf32, #tpu.memory_space<vmem>>, vector<1x1x128xf32>
    %13 = vector.shape_cast %12 : vector<1x1x128xf32> to vector<1x128xf32>
    %c0_10 = arith.constant 0 : index
    %c0_11 = arith.constant 0 : index
    %14 = vector.load %arg0[%c0_10, %c0_11] : memref<16x32xf32, #tpu.memory_space<vmem>>, vector<16x32xf32>
    %cst_12 = arith.constant dense<0.000000e+00> : vector<16x128xf32>
    %15 = tpu.matmul %14, %9, %cst_12 {dimension_numbers = #tpu.dot_dimension_numbers<[1], [0], [0], [1], [0, 0, 1, 1], [], []>} : vector<16x32xf32>, vector<32x128xf32>, vector<16x128xf32> -> vector<16x128xf32>
    %16 = vector.broadcast %13 : vector<1x128xf32> to vector<16x128xf32>
    %17 = arith.addf %15, %16 : vector<16x128xf32>
    %cst_13 = arith.constant 0.000000e+00 : f32
    %18 = vector.broadcast %cst_13 : f32 to vector<2x32xf32>
    %cst_14 = arith.constant 0.000000e+00 : f32
    %19 = vector.broadcast %cst_14 : f32 to vector<2x32xf32>
    %20 = vector.extract_strided_slice %17 {offsets = [0, 0], sizes = [2, 128], strides = [1, 1]} : vector<16x128xf32> to vector<2x128xf32>
    %cst_15 = arith.constant dense<0.000000e+00> : vector<2x128xf32>
    %21 = tpu.matmul %18, %11, %cst_15 {dimension_numbers = #tpu.dot_dimension_numbers<[1], [0], [0], [1], [0, 0, 1, 1], [], []>} : vector<2x32xf32>, vector<32x128xf32>, vector<2x128xf32> -> vector<2x128xf32>
    %22 = arith.addf %20, %21 : vector<2x128xf32>
    %cst_16 = arith.constant 5.000000e-01 : f32
    %23 = vector.broadcast %cst_16 : f32 to vector<2x128xf32>
    %24 = arith.mulf %23, %22 : vector<2x128xf32>
    %25 = arith.select %7, %22, %24 : vector<2x128xi1>, vector<2x128xf32>
    %26 = math.tanh %25 : vector<2x128xf32>
    %cst_17 = arith.constant 5.000000e-01 : f32
    %27 = vector.broadcast %cst_17 : f32 to vector<2x128xf32>
    %28 = arith.mulf %27, %26 : vector<2x128xf32>
    %cst_18 = arith.constant 5.000000e-01 : f32
    %29 = vector.broadcast %cst_18 : f32 to vector<2x128xf32>
    %30 = arith.addf %28, %29 : vector<2x128xf32>
    %31 = arith.select %7, %26, %30 : vector<2x128xi1>, vector<2x128xf32>
    %32 = vector.extract_strided_slice %31 {offsets = [0, 0], sizes = [2, 32], strides = [1, 1]} : vector<2x128xf32> to vector<2x32xf32>
    %33 = vector.extract_strided_slice %31 {offsets = [0, 32], sizes = [2, 32], strides = [1, 1]} : vector<2x128xf32> to vector<2x32xf32>
    %34 = vector.extract_strided_slice %31 {offsets = [0, 64], sizes = [2, 32], strides = [1, 1]} : vector<2x128xf32> to vector<2x32xf32>
    %35 = vector.extract_strided_slice %31 {offsets = [0, 96], sizes = [2, 32], strides = [1, 1]} : vector<2x128xf32> to vector<2x32xf32>
    %36 = arith.mulf %33, %19 : vector<2x32xf32>
    %37 = arith.mulf %32, %34 : vector<2x32xf32>
    %38 = arith.addf %36, %37 : vector<2x32xf32>
    %39 = math.tanh %38 : vector<2x32xf32>
    %40 = arith.mulf %35, %39 : vector<2x32xf32>
    %c0_19 = arith.constant 0 : index
    %c0_20 = arith.constant 0 : index
    %41 = vector.load %arg7[%c0_19, %c0_20] : memref<16x32xf32, #tpu.memory_space<vmem>>, vector<2x32xf32>
    tpu.vector_store %arg7[%c0_19, %c0_20], %40 {strides = array<i32>} : memref<16x32xf32, #tpu.memory_space<vmem>>, vector<2x32xf32>,
    %42 = vector.extract_strided_slice %17 {offsets = [2, 0], sizes = [2, 128], strides = [1, 1]} : vector<16x128xf32> to vector<2x128xf32>
    %cst_21 = arith.constant dense<0.000000e+00> : vector<2x128xf32>
    %43 = tpu.matmul %40, %11, %cst_21 {dimension_numbers = #tpu.dot_dimension_numbers<[1], [0], [0], [1], [0, 0, 1, 1], [], []>} : vector<2x32xf32>, vector<32x128xf32>, vector<2x128xf32> -> vector<2x128xf32>
    %44 = arith.addf %42, %43 : vector<2x128xf32>
    %cst_22 = arith.constant 5.000000e-01 : f32
    %45 = vector.broadcast %cst_22 : f32 to vector<2x128xf32>
    %46 = arith.mulf %45, %44 : vector<2x128xf32>
    %47 = arith.select %7, %44, %46 : vector<2x128xi1>, vector<2x128xf32>
    %48 = math.tanh %47 : vector<2x128xf32>
    %cst_23 = arith.constant 5.000000e-01 : f32
    %49 = vector.broadcast %cst_23 : f32 to vector<2x128xf32>
    %50 = arith.mulf %49, %48 : vector<2x128xf32>
    %cst_24 = arith.constant 5.000000e-01 : f32
    %51 = vector.broadcast %cst_24 : f32 to vector<2x128xf32>
    %52 = arith.addf %50, %51 : vector<2x128xf32>
    %53 = arith.select %7, %48, %52 : vector<2x128xi1>, vector<2x128xf32>
    %54 = vector.extract_strided_slice %53 {offsets = [0, 0], sizes = [2, 32], strides = [1, 1]} : vector<2x128xf32> to vector<2x32xf32>
    %55 = vector.extract_strided_slice %53 {offsets = [0, 32], sizes = [2, 32], strides = [1, 1]} : vector<2x128xf32> to vector<2x32xf32>
    %56 = vector.extract_strided_slice %53 {offsets = [0, 64], sizes = [2, 32], strides = [1, 1]} : vector<2x128xf32> to vector<2x32xf32>
    %57 = vector.extract_strided_slice %53 {offsets = [0, 96], sizes = [2, 32], strides = [1, 1]} : vector<2x128xf32> to vector<2x32xf32>
    %58 = arith.mulf %55, %38 : vector<2x32xf32>
    %59 = arith.mulf %54, %56 : vector<2x32xf32>
    %60 = arith.addf %58, %59 : vector<2x32xf32>
    %61 = math.tanh %60 : vector<2x32xf32>
    %62 = arith.mulf %57, %61 : vector<2x32xf32>
    %c2 = arith.constant 2 : index
    %c0_25 = arith.constant 0 : index
    %63 = vector.load %arg7[%c2, %c0_25] : memref<16x32xf32, #tpu.memory_space<vmem>>, vector<2x32xf32>
    tpu.vector_store %arg7[%c2, %c0_25], %62 {strides = array<i32>} : memref<16x32xf32, #tpu.memory_space<vmem>>, vector<2x32xf32>,
    %64 = vector.extract_strided_slice %17 {offsets = [4, 0], sizes = [2, 128], strides = [1, 1]} : vector<16x128xf32> to vector<2x128xf32>
    %cst_26 = arith.constant dense<0.000000e+00> : vector<2x128xf32>
    %65 = tpu.matmul %62, %11, %cst_26 {dimension_numbers = #tpu.dot_dimension_numbers<[1], [0], [0], [1], [0, 0, 1, 1], [], []>} : vector<2x32xf32>, vector<32x128xf32>, vector<2x128xf32> -> vector<2x128xf32>
    %66 = arith.addf %64, %65 : vector<2x128xf32>
    %cst_27 = arith.constant 5.000000e-01 : f32
    %67 = vector.broadcast %cst_27 : f32 to vector<2x128xf32>
    %68 = arith.mulf %67, %66 : vector<2x128xf32>
    %69 = arith.select %7, %66, %68 : vector<2x128xi1>, vector<2x128xf32>
    %70 = math.tanh %69 : vector<2x128xf32>
    %cst_28 = arith.constant 5.000000e-01 : f32
    %71 = vector.broadcast %cst_28 : f32 to vector<2x128xf32>
    %72 = arith.mulf %71, %70 : vector<2x128xf32>
    %cst_29 = arith.constant 5.000000e-01 : f32
    %73 = vector.broadcast %cst_29 : f32 to vector<2x128xf32>
    %74 = arith.addf %72, %73 : vector<2x128xf32>
    %75 = arith.select %7, %70, %74 : vector<2x128xi1>, vector<2x128xf32>
    %76 = vector.extract_strided_slice %75 {offsets = [0, 0], sizes = [2, 32], strides = [1, 1]} : vector<2x128xf32> to vector<2x32xf32>
    %77 = vector.extract_strided_slice %75 {offsets = [0, 32], sizes = [2, 32], strides = [1, 1]} : vector<2x128xf32> to vector<2x32xf32>
    %78 = vector.extract_strided_slice %75 {offsets = [0, 64], sizes = [2, 32], strides = [1, 1]} : vector<2x128xf32> to vector<2x32xf32>
    %79 = vector.extract_strided_slice %75 {offsets = [0, 96], sizes = [2, 32], strides = [1, 1]} : vector<2x128xf32> to vector<2x32xf32>
    %80 = arith.mulf %77, %60 : vector<2x32xf32>
    %81 = arith.mulf %76, %78 : vector<2x32xf32>
    %82 = arith.addf %80, %81 : vector<2x32xf32>
    %83 = math.tanh %82 : vector<2x32xf32>
    %84 = arith.mulf %79, %83 : vector<2x32xf32>
    %c4 = arith.constant 4 : index
    %c0_30 = arith.constant 0 : index
    %85 = vector.load %arg7[%c4, %c0_30] : memref<16x32xf32, #tpu.memory_space<vmem>>, vector<2x32xf32>
    tpu.vector_store %arg7[%c4, %c0_30], %84 {strides = array<i32>} : memref<16x32xf32, #tpu.memory_space<vmem>>, vector<2x32xf32>,
    %86 = vector.extract_strided_slice %17 {offsets = [6, 0], sizes = [2, 128], strides = [1, 1]} : vector<16x128xf32> to vector<2x128xf32>
    %cst_31 = arith.constant dense<0.000000e+00> : vector<2x128xf32>
    %87 = tpu.matmul %84, %11, %cst_31 {dimension_numbers = #tpu.dot_dimension_numbers<[1], [0], [0], [1], [0, 0, 1, 1], [], []>} : vector<2x32xf32>, vector<32x128xf32>, vector<2x128xf32> -> vector<2x128xf32>
    %88 = arith.addf %86, %87 : vector<2x128xf32>
    %cst_32 = arith.constant 5.000000e-01 : f32
    %89 = vector.broadcast %cst_32 : f32 to vector<2x128xf32>
    %90 = arith.mulf %89, %88 : vector<2x128xf32>
    %91 = arith.select %7, %88, %90 : vector<2x128xi1>, vector<2x128xf32>
    %92 = math.tanh %91 : vector<2x128xf32>
    %cst_33 = arith.constant 5.000000e-01 : f32
    %93 = vector.broadcast %cst_33 : f32 to vector<2x128xf32>
    %94 = arith.mulf %93, %92 : vector<2x128xf32>
    %cst_34 = arith.constant 5.000000e-01 : f32
    %95 = vector.broadcast %cst_34 : f32 to vector<2x128xf32>
    %96 = arith.addf %94, %95 : vector<2x128xf32>
    %97 = arith.select %7, %92, %96 : vector<2x128xi1>, vector<2x128xf32>
    %98 = vector.extract_strided_slice %97 {offsets = [0, 0], sizes = [2, 32], strides = [1, 1]} : vector<2x128xf32> to vector<2x32xf32>
    %99 = vector.extract_strided_slice %97 {offsets = [0, 32], sizes = [2, 32], strides = [1, 1]} : vector<2x128xf32> to vector<2x32xf32>
    %100 = vector.extract_strided_slice %97 {offsets = [0, 64], sizes = [2, 32], strides = [1, 1]} : vector<2x128xf32> to vector<2x32xf32>
    %101 = vector.extract_strided_slice %97 {offsets = [0, 96], sizes = [2, 32], strides = [1, 1]} : vector<2x128xf32> to vector<2x32xf32>
    %102 = arith.mulf %99, %82 : vector<2x32xf32>
    %103 = arith.mulf %98, %100 : vector<2x32xf32>
    %104 = arith.addf %102, %103 : vector<2x32xf32>
    %105 = math.tanh %104 : vector<2x32xf32>
    %106 = arith.mulf %101, %105 : vector<2x32xf32>
    %c6 = arith.constant 6 : index
    %c0_35 = arith.constant 0 : index
    %107 = vector.load %arg7[%c6, %c0_35] : memref<16x32xf32, #tpu.memory_space<vmem>>, vector<2x32xf32>
    tpu.vector_store %arg7[%c6, %c0_35], %106 {strides = array<i32>} : memref<16x32xf32, #tpu.memory_space<vmem>>, vector<2x32xf32>,
    %108 = vector.extract_strided_slice %17 {offsets = [8, 0], sizes = [2, 128], strides = [1, 1]} : vector<16x128xf32> to vector<2x128xf32>
    %cst_36 = arith.constant dense<0.000000e+00> : vector<2x128xf32>
    %109 = tpu.matmul %106, %11, %cst_36 {dimension_numbers = #tpu.dot_dimension_numbers<[1], [0], [0], [1], [0, 0, 1, 1], [], []>} : vector<2x32xf32>, vector<32x128xf32>, vector<2x128xf32> -> vector<2x128xf32>
    %110 = arith.addf %108, %109 : vector<2x128xf32>
    %cst_37 = arith.constant 5.000000e-01 : f32
    %111 = vector.broadcast %cst_37 : f32 to vector<2x128xf32>
    %112 = arith.mulf %111, %110 : vector<2x128xf32>
    %113 = arith.select %7, %110, %112 : vector<2x128xi1>, vector<2x128xf32>
    %114 = math.tanh %113 : vector<2x128xf32>
    %cst_38 = arith.constant 5.000000e-01 : f32
    %115 = vector.broadcast %cst_38 : f32 to vector<2x128xf32>
    %116 = arith.mulf %115, %114 : vector<2x128xf32>
    %cst_39 = arith.constant 5.000000e-01 : f32
    %117 = vector.broadcast %cst_39 : f32 to vector<2x128xf32>
    %118 = arith.addf %116, %117 : vector<2x128xf32>
    %119 = arith.select %7, %114, %118 : vector<2x128xi1>, vector<2x128xf32>
    %120 = vector.extract_strided_slice %119 {offsets = [0, 0], sizes = [2, 32], strides = [1, 1]} : vector<2x128xf32> to vector<2x32xf32>
    %121 = vector.extract_strided_slice %119 {offsets = [0, 32], sizes = [2, 32], strides = [1, 1]} : vector<2x128xf32> to vector<2x32xf32>
    %122 = vector.extract_strided_slice %119 {offsets = [0, 64], sizes = [2, 32], strides = [1, 1]} : vector<2x128xf32> to vector<2x32xf32>
    %123 = vector.extract_strided_slice %119 {offsets = [0, 96], sizes = [2, 32], strides = [1, 1]} : vector<2x128xf32> to vector<2x32xf32>
    %124 = arith.mulf %121, %104 : vector<2x32xf32>
    %125 = arith.mulf %120, %122 : vector<2x32xf32>
    %126 = arith.addf %124, %125 : vector<2x32xf32>
    %127 = math.tanh %126 : vector<2x32xf32>
    %128 = arith.mulf %123, %127 : vector<2x32xf32>
    %c8 = arith.constant 8 : index
    %c0_40 = arith.constant 0 : index
    %129 = vector.load %arg7[%c8, %c0_40] : memref<16x32xf32, #tpu.memory_space<vmem>>, vector<2x32xf32>
    tpu.vector_store %arg7[%c8, %c0_40], %128 {strides = array<i32>} : memref<16x32xf32, #tpu.memory_space<vmem>>, vector<2x32xf32>,
    %130 = vector.extract_strided_slice %17 {offsets = [10, 0], sizes = [2, 128], strides = [1, 1]} : vector<16x128xf32> to vector<2x128xf32>
    %cst_41 = arith.constant dense<0.000000e+00> : vector<2x128xf32>
    %131 = tpu.matmul %128, %11, %cst_41 {dimension_numbers = #tpu.dot_dimension_numbers<[1], [0], [0], [1], [0, 0, 1, 1], [], []>} : vector<2x32xf32>, vector<32x128xf32>, vector<2x128xf32> -> vector<2x128xf32>
    %132 = arith.addf %130, %131 : vector<2x128xf32>
    %cst_42 = arith.constant 5.000000e-01 : f32
    %133 = vector.broadcast %cst_42 : f32 to vector<2x128xf32>
    %134 = arith.mulf %133, %132 : vector<2x128xf32>
    %135 = arith.select %7, %132, %134 : vector<2x128xi1>, vector<2x128xf32>
    %136 = math.tanh %135 : vector<2x128xf32>
    %cst_43 = arith.constant 5.000000e-01 : f32
    %137 = vector.broadcast %cst_43 : f32 to vector<2x128xf32>
    %138 = arith.mulf %137, %136 : vector<2x128xf32>
    %cst_44 = arith.constant 5.000000e-01 : f32
    %139 = vector.broadcast %cst_44 : f32 to vector<2x128xf32>
    %140 = arith.addf %138, %139 : vector<2x128xf32>
    %141 = arith.select %7, %136, %140 : vector<2x128xi1>, vector<2x128xf32>
    %142 = vector.extract_strided_slice %141 {offsets = [0, 0], sizes = [2, 32], strides = [1, 1]} : vector<2x128xf32> to vector<2x32xf32>
    %143 = vector.extract_strided_slice %141 {offsets = [0, 32], sizes = [2, 32], strides = [1, 1]} : vector<2x128xf32> to vector<2x32xf32>
    %144 = vector.extract_strided_slice %141 {offsets = [0, 64], sizes = [2, 32], strides = [1, 1]} : vector<2x128xf32> to vector<2x32xf32>
    %145 = vector.extract_strided_slice %141 {offsets = [0, 96], sizes = [2, 32], strides = [1, 1]} : vector<2x128xf32> to vector<2x32xf32>
    %146 = arith.mulf %143, %126 : vector<2x32xf32>
    %147 = arith.mulf %142, %144 : vector<2x32xf32>
    %148 = arith.addf %146, %147 : vector<2x32xf32>
    %149 = math.tanh %148 : vector<2x32xf32>
    %150 = arith.mulf %145, %149 : vector<2x32xf32>
    %c10 = arith.constant 10 : index
    %c0_45 = arith.constant 0 : index
    %151 = vector.load %arg7[%c10, %c0_45] : memref<16x32xf32, #tpu.memory_space<vmem>>, vector<2x32xf32>
    tpu.vector_store %arg7[%c10, %c0_45], %150 {strides = array<i32>} : memref<16x32xf32, #tpu.memory_space<vmem>>, vector<2x32xf32>,
    %152 = vector.extract_strided_slice %17 {offsets = [12, 0], sizes = [2, 128], strides = [1, 1]} : vector<16x128xf32> to vector<2x128xf32>
    %cst_46 = arith.constant dense<0.000000e+00> : vector<2x128xf32>
    %153 = tpu.matmul %150, %11, %cst_46 {dimension_numbers = #tpu.dot_dimension_numbers<[1], [0], [0], [1], [0, 0, 1, 1], [], []>} : vector<2x32xf32>, vector<32x128xf32>, vector<2x128xf32> -> vector<2x128xf32>
    %154 = arith.addf %152, %153 : vector<2x128xf32>
    %cst_47 = arith.constant 5.000000e-01 : f32
    %155 = vector.broadcast %cst_47 : f32 to vector<2x128xf32>
    %156 = arith.mulf %155, %154 : vector<2x128xf32>
    %157 = arith.select %7, %154, %156 : vector<2x128xi1>, vector<2x128xf32>
    %158 = math.tanh %157 : vector<2x128xf32>
    %cst_48 = arith.constant 5.000000e-01 : f32
    %159 = vector.broadcast %cst_48 : f32 to vector<2x128xf32>
    %160 = arith.mulf %159, %158 : vector<2x128xf32>
    %cst_49 = arith.constant 5.000000e-01 : f32
    %161 = vector.broadcast %cst_49 : f32 to vector<2x128xf32>
    %162 = arith.addf %160, %161 : vector<2x128xf32>
    %163 = arith.select %7, %158, %162 : vector<2x128xi1>, vector<2x128xf32>
    %164 = vector.extract_strided_slice %163 {offsets = [0, 0], sizes = [2, 32], strides = [1, 1]} : vector<2x128xf32> to vector<2x32xf32>
    %165 = vector.extract_strided_slice %163 {offsets = [0, 32], sizes = [2, 32], strides = [1, 1]} : vector<2x128xf32> to vector<2x32xf32>
    %166 = vector.extract_strided_slice %163 {offsets = [0, 64], sizes = [2, 32], strides = [1, 1]} : vector<2x128xf32> to vector<2x32xf32>
    %167 = vector.extract_strided_slice %163 {offsets = [0, 96], sizes = [2, 32], strides = [1, 1]} : vector<2x128xf32> to vector<2x32xf32>
    %168 = arith.mulf %165, %148 : vector<2x32xf32>
    %169 = arith.mulf %164, %166 : vector<2x32xf32>
    %170 = arith.addf %168, %169 : vector<2x32xf32>
    %171 = math.tanh %170 : vector<2x32xf32>
    %172 = arith.mulf %167, %171 : vector<2x32xf32>
    %c12 = arith.constant 12 : index
    %c0_50 = arith.constant 0 : index
    %173 = vector.load %arg7[%c12, %c0_50] : memref<16x32xf32, #tpu.memory_space<vmem>>, vector<2x32xf32>
    tpu.vector_store %arg7[%c12, %c0_50], %172 {strides = array<i32>} : memref<16x32xf32, #tpu.memory_space<vmem>>, vector<2x32xf32>,
    %174 = vector.extract_strided_slice %17 {offsets = [14, 0], sizes = [2, 128], strides = [1, 1]} : vector<16x128xf32> to vector<2x128xf32>
    %cst_51 = arith.constant dense<0.000000e+00> : vector<2x128xf32>
    %175 = tpu.matmul %172, %11, %cst_51 {dimension_numbers = #tpu.dot_dimension_numbers<[1], [0], [0], [1], [0, 0, 1, 1], [], []>} : vector<2x32xf32>, vector<32x128xf32>, vector<2x128xf32> -> vector<2x128xf32>
    %176 = arith.addf %174, %175 : vector<2x128xf32>
    %cst_52 = arith.constant 5.000000e-01 : f32
    %177 = vector.broadcast %cst_52 : f32 to vector<2x128xf32>
    %178 = arith.mulf %177, %176 : vector<2x128xf32>
    %179 = arith.select %7, %176, %178 : vector<2x128xi1>, vector<2x128xf32>
    %180 = math.tanh %179 : vector<2x128xf32>
    %cst_53 = arith.constant 5.000000e-01 : f32
    %181 = vector.broadcast %cst_53 : f32 to vector<2x128xf32>
    %182 = arith.mulf %181, %180 : vector<2x128xf32>
    %cst_54 = arith.constant 5.000000e-01 : f32
    %183 = vector.broadcast %cst_54 : f32 to vector<2x128xf32>
    %184 = arith.addf %182, %183 : vector<2x128xf32>
    %185 = arith.select %7, %180, %184 : vector<2x128xi1>, vector<2x128xf32>
    %186 = vector.extract_strided_slice %185 {offsets = [0, 0], sizes = [2, 32], strides = [1, 1]} : vector<2x128xf32> to vector<2x32xf32>
    %187 = vector.extract_strided_slice %185 {offsets = [0, 32], sizes = [2, 32], strides = [1, 1]} : vector<2x128xf32> to vector<2x32xf32>
    %188 = vector.extract_strided_slice %185 {offsets = [0, 64], sizes = [2, 32], strides = [1, 1]} : vector<2x128xf32> to vector<2x32xf32>
    %189 = vector.extract_strided_slice %185 {offsets = [0, 96], sizes = [2, 32], strides = [1, 1]} : vector<2x128xf32> to vector<2x32xf32>
    %190 = arith.mulf %187, %170 : vector<2x32xf32>
    %191 = arith.mulf %186, %188 : vector<2x32xf32>
    %192 = arith.addf %190, %191 : vector<2x32xf32>
    %193 = math.tanh %192 : vector<2x32xf32>
    %194 = arith.mulf %189, %193 : vector<2x32xf32>
    %c14 = arith.constant 14 : index
    %c0_55 = arith.constant 0 : index
    %195 = vector.load %arg7[%c14, %c0_55] : memref<16x32xf32, #tpu.memory_space<vmem>>, vector<2x32xf32>
    tpu.vector_store %arg7[%c14, %c0_55], %194 {strides = array<i32>} : memref<16x32xf32, #tpu.memory_space<vmem>>, vector<2x32xf32>,
    %c1 = arith.constant 1 : index
    %c0_56 = arith.constant 0 : index
    %c0_57 = arith.constant 0 : index
    %196 = vector.load %arg1[%c1, %c0_56, %c0_57] : memref<5x32x128xf32, #tpu.memory_space<vmem>>, vector<1x32x128xf32>
    %197 = vector.shape_cast %196 : vector<1x32x128xf32> to vector<32x128xf32>
    %c1_58 = arith.constant 1 : index
    %c0_59 = arith.constant 0 : index
    %c0_60 = arith.constant 0 : index
    %198 = vector.load %arg2[%c1_58, %c0_59, %c0_60] : memref<5x32x128xf32, #tpu.memory_space<vmem>>, vector<1x32x128xf32>
    %199 = vector.shape_cast %198 : vector<1x32x128xf32> to vector<32x128xf32>
    %c1_61 = arith.constant 1 : index
    %c0_62 = arith.constant 0 : index
    %c0_63 = arith.constant 0 : index
    %200 = vector.load %arg3[%c1_61, %c0_62, %c0_63] : memref<5x1x128xf32, #tpu.memory_space<vmem>>, vector<1x1x128xf32>
    %201 = vector.shape_cast %200 : vector<1x1x128xf32> to vector<1x128xf32>
    %c0_64 = arith.constant 0 : index
    %c0_65 = arith.constant 0 : index
    %202 = vector.load %arg7[%c0_64, %c0_65] : memref<16x32xf32, #tpu.memory_space<vmem>>, vector<16x32xf32>
    %cst_66 = arith.constant dense<0.000000e+00> : vector<16x128xf32>
    %203 = tpu.matmul %202, %197, %cst_66 {dimension_numbers = #tpu.dot_dimension_numbers<[1], [0], [0], [1], [0, 0, 1, 1], [], []>} : vector<16x32xf32>, vector<32x128xf32>, vector<16x128xf32> -> vector<16x128xf32>
    %204 = vector.broadcast %201 : vector<1x128xf32> to vector<16x128xf32>
    %205 = arith.addf %203, %204 : vector<16x128xf32>
    %cst_67 = arith.constant 0.000000e+00 : f32
    %206 = vector.broadcast %cst_67 : f32 to vector<2x32xf32>
    %cst_68 = arith.constant 0.000000e+00 : f32
    %207 = vector.broadcast %cst_68 : f32 to vector<2x32xf32>
    %208 = vector.extract_strided_slice %205 {offsets = [0, 0], sizes = [2, 128], strides = [1, 1]} : vector<16x128xf32> to vector<2x128xf32>
    %cst_69 = arith.constant dense<0.000000e+00> : vector<2x128xf32>
    %209 = tpu.matmul %206, %199, %cst_69 {dimension_numbers = #tpu.dot_dimension_numbers<[1], [0], [0], [1], [0, 0, 1, 1], [], []>} : vector<2x32xf32>, vector<32x128xf32>, vector<2x128xf32> -> vector<2x128xf32>
    %210 = arith.addf %208, %209 : vector<2x128xf32>
    %cst_70 = arith.constant 5.000000e-01 : f32
    %211 = vector.broadcast %cst_70 : f32 to vector<2x128xf32>
    %212 = arith.mulf %211, %210 : vector<2x128xf32>
    %213 = arith.select %7, %210, %212 : vector<2x128xi1>, vector<2x128xf32>
    %214 = math.tanh %213 : vector<2x128xf32>
    %cst_71 = arith.constant 5.000000e-01 : f32
    %215 = vector.broadcast %cst_71 : f32 to vector<2x128xf32>
    %216 = arith.mulf %215, %214 : vector<2x128xf32>
    %cst_72 = arith.constant 5.000000e-01 : f32
    %217 = vector.broadcast %cst_72 : f32 to vector<2x128xf32>
    %218 = arith.addf %216, %217 : vector<2x128xf32>
    %219 = arith.select %7, %214, %218 : vector<2x128xi1>, vector<2x128xf32>
    %220 = vector.extract_strided_slice %219 {offsets = [0, 0], sizes = [2, 32], strides = [1, 1]} : vector<2x128xf32> to vector<2x32xf32>
    %221 = vector.extract_strided_slice %219 {offsets = [0, 32], sizes = [2, 32], strides = [1, 1]} : vector<2x128xf32> to vector<2x32xf32>
    %222 = vector.extract_strided_slice %219 {offsets = [0, 64], sizes = [2, 32], strides = [1, 1]} : vector<2x128xf32> to vector<2x32xf32>
    %223 = vector.extract_strided_slice %219 {offsets = [0, 96], sizes = [2, 32], strides = [1, 1]} : vector<2x128xf32> to vector<2x32xf32>
    %224 = arith.mulf %221, %207 : vector<2x32xf32>
    %225 = arith.mulf %220, %222 : vector<2x32xf32>
    %226 = arith.addf %224, %225 : vector<2x32xf32>
    %227 = math.tanh %226 : vector<2x32xf32>
    %228 = arith.mulf %223, %227 : vector<2x32xf32>
    %c0_73 = arith.constant 0 : index
    %c0_74 = arith.constant 0 : index
    %229 = vector.load %arg7[%c0_73, %c0_74] : memref<16x32xf32, #tpu.memory_space<vmem>>, vector<2x32xf32>
    tpu.vector_store %arg7[%c0_73, %c0_74], %228 {strides = array<i32>} : memref<16x32xf32, #tpu.memory_space<vmem>>, vector<2x32xf32>,
    %230 = vector.extract_strided_slice %205 {offsets = [2, 0], sizes = [2, 128], strides = [1, 1]} : vector<16x128xf32> to vector<2x128xf32>
    %cst_75 = arith.constant dense<0.000000e+00> : vector<2x128xf32>
    %231 = tpu.matmul %228, %199, %cst_75 {dimension_numbers = #tpu.dot_dimension_numbers<[1], [0], [0], [1], [0, 0, 1, 1], [], []>} : vector<2x32xf32>, vector<32x128xf32>, vector<2x128xf32> -> vector<2x128xf32>
    %232 = arith.addf %230, %231 : vector<2x128xf32>
    %cst_76 = arith.constant 5.000000e-01 : f32
    %233 = vector.broadcast %cst_76 : f32 to vector<2x128xf32>
    %234 = arith.mulf %233, %232 : vector<2x128xf32>
    %235 = arith.select %7, %232, %234 : vector<2x128xi1>, vector<2x128xf32>
    %236 = math.tanh %235 : vector<2x128xf32>
    %cst_77 = arith.constant 5.000000e-01 : f32
    %237 = vector.broadcast %cst_77 : f32 to vector<2x128xf32>
    %238 = arith.mulf %237, %236 : vector<2x128xf32>
    %cst_78 = arith.constant 5.000000e-01 : f32
    %239 = vector.broadcast %cst_78 : f32 to vector<2x128xf32>
    %240 = arith.addf %238, %239 : vector<2x128xf32>
    %241 = arith.select %7, %236, %240 : vector<2x128xi1>, vector<2x128xf32>
    %242 = vector.extract_strided_slice %241 {offsets = [0, 0], sizes = [2, 32], strides = [1, 1]} : vector<2x128xf32> to vector<2x32xf32>
    %243 = vector.extract_strided_slice %241 {offsets = [0, 32], sizes = [2, 32], strides = [1, 1]} : vector<2x128xf32> to vector<2x32xf32>
    %244 = vector.extract_strided_slice %241 {offsets = [0, 64], sizes = [2, 32], strides = [1, 1]} : vector<2x128xf32> to vector<2x32xf32>
    %245 = vector.extract_strided_slice %241 {offsets = [0, 96], sizes = [2, 32], strides = [1, 1]} : vector<2x128xf32> to vector<2x32xf32>
    %246 = arith.mulf %243, %226 : vector<2x32xf32>
    %247 = arith.mulf %242, %244 : vector<2x32xf32>
    %248 = arith.addf %246, %247 : vector<2x32xf32>
    %249 = math.tanh %248 : vector<2x32xf32>
    %250 = arith.mulf %245, %249 : vector<2x32xf32>
    %c2_79 = arith.constant 2 : index
    %c0_80 = arith.constant 0 : index
    %251 = vector.load %arg7[%c2_79, %c0_80] : memref<16x32xf32, #tpu.memory_space<vmem>>, vector<2x32xf32>
    tpu.vector_store %arg7[%c2_79, %c0_80], %250 {strides = array<i32>} : memref<16x32xf32, #tpu.memory_space<vmem>>, vector<2x32xf32>,
    %252 = vector.extract_strided_slice %205 {offsets = [4, 0], sizes = [2, 128], strides = [1, 1]} : vector<16x128xf32> to vector<2x128xf32>
    %cst_81 = arith.constant dense<0.000000e+00> : vector<2x128xf32>
    %253 = tpu.matmul %250, %199, %cst_81 {dimension_numbers = #tpu.dot_dimension_numbers<[1], [0], [0], [1], [0, 0, 1, 1], [], []>} : vector<2x32xf32>, vector<32x128xf32>, vector<2x128xf32> -> vector<2x128xf32>
    %254 = arith.addf %252, %253 : vector<2x128xf32>
    %cst_82 = arith.constant 5.000000e-01 : f32
    %255 = vector.broadcast %cst_82 : f32 to vector<2x128xf32>
    %256 = arith.mulf %255, %254 : vector<2x128xf32>
    %257 = arith.select %7, %254, %256 : vector<2x128xi1>, vector<2x128xf32>
    %258 = math.tanh %257 : vector<2x128xf32>
    %cst_83 = arith.constant 5.000000e-01 : f32
    %259 = vector.broadcast %cst_83 : f32 to vector<2x128xf32>
    %260 = arith.mulf %259, %258 : vector<2x128xf32>
    %cst_84 = arith.constant 5.000000e-01 : f32
    %261 = vector.broadcast %cst_84 : f32 to vector<2x128xf32>
    %262 = arith.addf %260, %261 : vector<2x128xf32>
    %263 = arith.select %7, %258, %262 : vector<2x128xi1>, vector<2x128xf32>
    %264 = vector.extract_strided_slice %263 {offsets = [0, 0], sizes = [2, 32], strides = [1, 1]} : vector<2x128xf32> to vector<2x32xf32>
    %265 = vector.extract_strided_slice %263 {offsets = [0, 32], sizes = [2, 32], strides = [1, 1]} : vector<2x128xf32> to vector<2x32xf32>
    %266 = vector.extract_strided_slice %263 {offsets = [0, 64], sizes = [2, 32], strides = [1, 1]} : vector<2x128xf32> to vector<2x32xf32>
    %267 = vector.extract_strided_slice %263 {offsets = [0, 96], sizes = [2, 32], strides = [1, 1]} : vector<2x128xf32> to vector<2x32xf32>
    %268 = arith.mulf %265, %248 : vector<2x32xf32>
    %269 = arith.mulf %264, %266 : vector<2x32xf32>
    %270 = arith.addf %268, %269 : vector<2x32xf32>
    %271 = math.tanh %270 : vector<2x32xf32>
    %272 = arith.mulf %267, %271 : vector<2x32xf32>
    %c4_85 = arith.constant 4 : index
    %c0_86 = arith.constant 0 : index
    %273 = vector.load %arg7[%c4_85, %c0_86] : memref<16x32xf32, #tpu.memory_space<vmem>>, vector<2x32xf32>
    tpu.vector_store %arg7[%c4_85, %c0_86], %272 {strides = array<i32>} : memref<16x32xf32, #tpu.memory_space<vmem>>, vector<2x32xf32>,
    %274 = vector.extract_strided_slice %205 {offsets = [6, 0], sizes = [2, 128], strides = [1, 1]} : vector<16x128xf32> to vector<2x128xf32>
    %cst_87 = arith.constant dense<0.000000e+00> : vector<2x128xf32>
    %275 = tpu.matmul %272, %199, %cst_87 {dimension_numbers = #tpu.dot_dimension_numbers<[1], [0], [0], [1], [0, 0, 1, 1], [], []>} : vector<2x32xf32>, vector<32x128xf32>, vector<2x128xf32> -> vector<2x128xf32>
    %276 = arith.addf %274, %275 : vector<2x128xf32>
    %cst_88 = arith.constant 5.000000e-01 : f32
    %277 = vector.broadcast %cst_88 : f32 to vector<2x128xf32>
    %278 = arith.mulf %277, %276 : vector<2x128xf32>
    %279 = arith.select %7, %276, %278 : vector<2x128xi1>, vector<2x128xf32>
    %280 = math.tanh %279 : vector<2x128xf32>
    %cst_89 = arith.constant 5.000000e-01 : f32
    %281 = vector.broadcast %cst_89 : f32 to vector<2x128xf32>
    %282 = arith.mulf %281, %280 : vector<2x128xf32>
    %cst_90 = arith.constant 5.000000e-01 : f32
    %283 = vector.broadcast %cst_90 : f32 to vector<2x128xf32>
    %284 = arith.addf %282, %283 : vector<2x128xf32>
    %285 = arith.select %7, %280, %284 : vector<2x128xi1>, vector<2x128xf32>
    %286 = vector.extract_strided_slice %285 {offsets = [0, 0], sizes = [2, 32], strides = [1, 1]} : vector<2x128xf32> to vector<2x32xf32>
    %287 = vector.extract_strided_slice %285 {offsets = [0, 32], sizes = [2, 32], strides = [1, 1]} : vector<2x128xf32> to vector<2x32xf32>
    %288 = vector.extract_strided_slice %285 {offsets = [0, 64], sizes = [2, 32], strides = [1, 1]} : vector<2x128xf32> to vector<2x32xf32>
    %289 = vector.extract_strided_slice %285 {offsets = [0, 96], sizes = [2, 32], strides = [1, 1]} : vector<2x128xf32> to vector<2x32xf32>
    %290 = arith.mulf %287, %270 : vector<2x32xf32>
    %291 = arith.mulf %286, %288 : vector<2x32xf32>
    %292 = arith.addf %290, %291 : vector<2x32xf32>
    %293 = math.tanh %292 : vector<2x32xf32>
    %294 = arith.mulf %289, %293 : vector<2x32xf32>
    %c6_91 = arith.constant 6 : index
    %c0_92 = arith.constant 0 : index
    %295 = vector.load %arg7[%c6_91, %c0_92] : memref<16x32xf32, #tpu.memory_space<vmem>>, vector<2x32xf32>
    tpu.vector_store %arg7[%c6_91, %c0_92], %294 {strides = array<i32>} : memref<16x32xf32, #tpu.memory_space<vmem>>, vector<2x32xf32>,
    %296 = vector.extract_strided_slice %205 {offsets = [8, 0], sizes = [2, 128], strides = [1, 1]} : vector<16x128xf32> to vector<2x128xf32>
    %cst_93 = arith.constant dense<0.000000e+00> : vector<2x128xf32>
    %297 = tpu.matmul %294, %199, %cst_93 {dimension_numbers = #tpu.dot_dimension_numbers<[1], [0], [0], [1], [0, 0, 1, 1], [], []>} : vector<2x32xf32>, vector<32x128xf32>, vector<2x128xf32> -> vector<2x128xf32>
    %298 = arith.addf %296, %297 : vector<2x128xf32>
    %cst_94 = arith.constant 5.000000e-01 : f32
    %299 = vector.broadcast %cst_94 : f32 to vector<2x128xf32>
    %300 = arith.mulf %299, %298 : vector<2x128xf32>
    %301 = arith.select %7, %298, %300 : vector<2x128xi1>, vector<2x128xf32>
    %302 = math.tanh %301 : vector<2x128xf32>
    %cst_95 = arith.constant 5.000000e-01 : f32
    %303 = vector.broadcast %cst_95 : f32 to vector<2x128xf32>
    %304 = arith.mulf %303, %302 : vector<2x128xf32>
    %cst_96 = arith.constant 5.000000e-01 : f32
    %305 = vector.broadcast %cst_96 : f32 to vector<2x128xf32>
    %306 = arith.addf %304, %305 : vector<2x128xf32>
    %307 = arith.select %7, %302, %306 : vector<2x128xi1>, vector<2x128xf32>
    %308 = vector.extract_strided_slice %307 {offsets = [0, 0], sizes = [2, 32], strides = [1, 1]} : vector<2x128xf32> to vector<2x32xf32>
    %309 = vector.extract_strided_slice %307 {offsets = [0, 32], sizes = [2, 32], strides = [1, 1]} : vector<2x128xf32> to vector<2x32xf32>
    %310 = vector.extract_strided_slice %307 {offsets = [0, 64], sizes = [2, 32], strides = [1, 1]} : vector<2x128xf32> to vector<2x32xf32>
    %311 = vector.extract_strided_slice %307 {offsets = [0, 96], sizes = [2, 32], strides = [1, 1]} : vector<2x128xf32> to vector<2x32xf32>
    %312 = arith.mulf %309, %292 : vector<2x32xf32>
    %313 = arith.mulf %308, %310 : vector<2x32xf32>
    %314 = arith.addf %312, %313 : vector<2x32xf32>
    %315 = math.tanh %314 : vector<2x32xf32>
    %316 = arith.mulf %311, %315 : vector<2x32xf32>
    %c8_97 = arith.constant 8 : index
    %c0_98 = arith.constant 0 : index
    %317 = vector.load %arg7[%c8_97, %c0_98] : memref<16x32xf32, #tpu.memory_space<vmem>>, vector<2x32xf32>
    tpu.vector_store %arg7[%c8_97, %c0_98], %316 {strides = array<i32>} : memref<16x32xf32, #tpu.memory_space<vmem>>, vector<2x32xf32>,
    %318 = vector.extract_strided_slice %205 {offsets = [10, 0], sizes = [2, 128], strides = [1, 1]} : vector<16x128xf32> to vector<2x128xf32>
    %cst_99 = arith.constant dense<0.000000e+00> : vector<2x128xf32>
    %319 = tpu.matmul %316, %199, %cst_99 {dimension_numbers = #tpu.dot_dimension_numbers<[1], [0], [0], [1], [0, 0, 1, 1], [], []>} : vector<2x32xf32>, vector<32x128xf32>, vector<2x128xf32> -> vector<2x128xf32>
    %320 = arith.addf %318, %319 : vector<2x128xf32>
    %cst_100 = arith.constant 5.000000e-01 : f32
    %321 = vector.broadcast %cst_100 : f32 to vector<2x128xf32>
    %322 = arith.mulf %321, %320 : vector<2x128xf32>
    %323 = arith.select %7, %320, %322 : vector<2x128xi1>, vector<2x128xf32>
    %324 = math.tanh %323 : vector<2x128xf32>
    %cst_101 = arith.constant 5.000000e-01 : f32
    %325 = vector.broadcast %cst_101 : f32 to vector<2x128xf32>
    %326 = arith.mulf %325, %324 : vector<2x128xf32>
    %cst_102 = arith.constant 5.000000e-01 : f32
    %327 = vector.broadcast %cst_102 : f32 to vector<2x128xf32>
    %328 = arith.addf %326, %327 : vector<2x128xf32>
    %329 = arith.select %7, %324, %328 : vector<2x128xi1>, vector<2x128xf32>
    %330 = vector.extract_strided_slice %329 {offsets = [0, 0], sizes = [2, 32], strides = [1, 1]} : vector<2x128xf32> to vector<2x32xf32>
    %331 = vector.extract_strided_slice %329 {offsets = [0, 32], sizes = [2, 32], strides = [1, 1]} : vector<2x128xf32> to vector<2x32xf32>
    %332 = vector.extract_strided_slice %329 {offsets = [0, 64], sizes = [2, 32], strides = [1, 1]} : vector<2x128xf32> to vector<2x32xf32>
    %333 = vector.extract_strided_slice %329 {offsets = [0, 96], sizes = [2, 32], strides = [1, 1]} : vector<2x128xf32> to vector<2x32xf32>
    %334 = arith.mulf %331, %314 : vector<2x32xf32>
    %335 = arith.mulf %330, %332 : vector<2x32xf32>
    %336 = arith.addf %334, %335 : vector<2x32xf32>
    %337 = math.tanh %336 : vector<2x32xf32>
    %338 = arith.mulf %333, %337 : vector<2x32xf32>
    %c10_103 = arith.constant 10 : index
    %c0_104 = arith.constant 0 : index
    %339 = vector.load %arg7[%c10_103, %c0_104] : memref<16x32xf32, #tpu.memory_space<vmem>>, vector<2x32xf32>
    tpu.vector_store %arg7[%c10_103, %c0_104], %338 {strides = array<i32>} : memref<16x32xf32, #tpu.memory_space<vmem>>, vector<2x32xf32>,
    %340 = vector.extract_strided_slice %205 {offsets = [12, 0], sizes = [2, 128], strides = [1, 1]} : vector<16x128xf32> to vector<2x128xf32>
    %cst_105 = arith.constant dense<0.000000e+00> : vector<2x128xf32>
    %341 = tpu.matmul %338, %199, %cst_105 {dimension_numbers = #tpu.dot_dimension_numbers<[1], [0], [0], [1], [0, 0, 1, 1], [], []>} : vector<2x32xf32>, vector<32x128xf32>, vector<2x128xf32> -> vector<2x128xf32>
    %342 = arith.addf %340, %341 : vector<2x128xf32>
    %cst_106 = arith.constant 5.000000e-01 : f32
    %343 = vector.broadcast %cst_106 : f32 to vector<2x128xf32>
    %344 = arith.mulf %343, %342 : vector<2x128xf32>
    %345 = arith.select %7, %342, %344 : vector<2x128xi1>, vector<2x128xf32>
    %346 = math.tanh %345 : vector<2x128xf32>
    %cst_107 = arith.constant 5.000000e-01 : f32
    %347 = vector.broadcast %cst_107 : f32 to vector<2x128xf32>
    %348 = arith.mulf %347, %346 : vector<2x128xf32>
    %cst_108 = arith.constant 5.000000e-01 : f32
    %349 = vector.broadcast %cst_108 : f32 to vector<2x128xf32>
    %350 = arith.addf %348, %349 : vector<2x128xf32>
    %351 = arith.select %7, %346, %350 : vector<2x128xi1>, vector<2x128xf32>
    %352 = vector.extract_strided_slice %351 {offsets = [0, 0], sizes = [2, 32], strides = [1, 1]} : vector<2x128xf32> to vector<2x32xf32>
    %353 = vector.extract_strided_slice %351 {offsets = [0, 32], sizes = [2, 32], strides = [1, 1]} : vector<2x128xf32> to vector<2x32xf32>
    %354 = vector.extract_strided_slice %351 {offsets = [0, 64], sizes = [2, 32], strides = [1, 1]} : vector<2x128xf32> to vector<2x32xf32>
    %355 = vector.extract_strided_slice %351 {offsets = [0, 96], sizes = [2, 32], strides = [1, 1]} : vector<2x128xf32> to vector<2x32xf32>
    %356 = arith.mulf %353, %336 : vector<2x32xf32>
    %357 = arith.mulf %352, %354 : vector<2x32xf32>
    %358 = arith.addf %356, %357 : vector<2x32xf32>
    %359 = math.tanh %358 : vector<2x32xf32>
    %360 = arith.mulf %355, %359 : vector<2x32xf32>
    %c12_109 = arith.constant 12 : index
    %c0_110 = arith.constant 0 : index
    %361 = vector.load %arg7[%c12_109, %c0_110] : memref<16x32xf32, #tpu.memory_space<vmem>>, vector<2x32xf32>
    tpu.vector_store %arg7[%c12_109, %c0_110], %360 {strides = array<i32>} : memref<16x32xf32, #tpu.memory_space<vmem>>, vector<2x32xf32>,
    %362 = vector.extract_strided_slice %205 {offsets = [14, 0], sizes = [2, 128], strides = [1, 1]} : vector<16x128xf32> to vector<2x128xf32>
    %cst_111 = arith.constant dense<0.000000e+00> : vector<2x128xf32>
    %363 = tpu.matmul %360, %199, %cst_111 {dimension_numbers = #tpu.dot_dimension_numbers<[1], [0], [0], [1], [0, 0, 1, 1], [], []>} : vector<2x32xf32>, vector<32x128xf32>, vector<2x128xf32> -> vector<2x128xf32>
    %364 = arith.addf %362, %363 : vector<2x128xf32>
    %cst_112 = arith.constant 5.000000e-01 : f32
    %365 = vector.broadcast %cst_112 : f32 to vector<2x128xf32>
    %366 = arith.mulf %365, %364 : vector<2x128xf32>
    %367 = arith.select %7, %364, %366 : vector<2x128xi1>, vector<2x128xf32>
    %368 = math.tanh %367 : vector<2x128xf32>
    %cst_113 = arith.constant 5.000000e-01 : f32
    %369 = vector.broadcast %cst_113 : f32 to vector<2x128xf32>
    %370 = arith.mulf %369, %368 : vector<2x128xf32>
    %cst_114 = arith.constant 5.000000e-01 : f32
    %371 = vector.broadcast %cst_114 : f32 to vector<2x128xf32>
    %372 = arith.addf %370, %371 : vector<2x128xf32>
    %373 = arith.select %7, %368, %372 : vector<2x128xi1>, vector<2x128xf32>
    %374 = vector.extract_strided_slice %373 {offsets = [0, 0], sizes = [2, 32], strides = [1, 1]} : vector<2x128xf32> to vector<2x32xf32>
    %375 = vector.extract_strided_slice %373 {offsets = [0, 32], sizes = [2, 32], strides = [1, 1]} : vector<2x128xf32> to vector<2x32xf32>
    %376 = vector.extract_strided_slice %373 {offsets = [0, 64], sizes = [2, 32], strides = [1, 1]} : vector<2x128xf32> to vector<2x32xf32>
    %377 = vector.extract_strided_slice %373 {offsets = [0, 96], sizes = [2, 32], strides = [1, 1]} : vector<2x128xf32> to vector<2x32xf32>
    %378 = arith.mulf %375, %358 : vector<2x32xf32>
    %379 = arith.mulf %374, %376 : vector<2x32xf32>
    %380 = arith.addf %378, %379 : vector<2x32xf32>
    %381 = math.tanh %380 : vector<2x32xf32>
    %382 = arith.mulf %377, %381 : vector<2x32xf32>
    %c14_115 = arith.constant 14 : index
    %c0_116 = arith.constant 0 : index
    %383 = vector.load %arg7[%c14_115, %c0_116] : memref<16x32xf32, #tpu.memory_space<vmem>>, vector<2x32xf32>
    tpu.vector_store %arg7[%c14_115, %c0_116], %382 {strides = array<i32>} : memref<16x32xf32, #tpu.memory_space<vmem>>, vector<2x32xf32>,
    %c2_117 = arith.constant 2 : index
    %c0_118 = arith.constant 0 : index
    %c0_119 = arith.constant 0 : index
    %384 = vector.load %arg1[%c2_117, %c0_118, %c0_119] : memref<5x32x128xf32, #tpu.memory_space<vmem>>, vector<1x32x128xf32>
    %385 = vector.shape_cast %384 : vector<1x32x128xf32> to vector<32x128xf32>
    %c2_120 = arith.constant 2 : index
    %c0_121 = arith.constant 0 : index
    %c0_122 = arith.constant 0 : index
    %386 = vector.load %arg2[%c2_120, %c0_121, %c0_122] : memref<5x32x128xf32, #tpu.memory_space<vmem>>, vector<1x32x128xf32>
    %387 = vector.shape_cast %386 : vector<1x32x128xf32> to vector<32x128xf32>
    %c2_123 = arith.constant 2 : index
    %c0_124 = arith.constant 0 : index
    %c0_125 = arith.constant 0 : index
    %388 = vector.load %arg3[%c2_123, %c0_124, %c0_125] : memref<5x1x128xf32, #tpu.memory_space<vmem>>, vector<1x1x128xf32>
    %389 = vector.shape_cast %388 : vector<1x1x128xf32> to vector<1x128xf32>
    %c0_126 = arith.constant 0 : index
    %c0_127 = arith.constant 0 : index
    %390 = vector.load %arg7[%c0_126, %c0_127] : memref<16x32xf32, #tpu.memory_space<vmem>>, vector<16x32xf32>
    %cst_128 = arith.constant dense<0.000000e+00> : vector<16x128xf32>
    %391 = tpu.matmul %390, %385, %cst_128 {dimension_numbers = #tpu.dot_dimension_numbers<[1], [0], [0], [1], [0, 0, 1, 1], [], []>} : vector<16x32xf32>, vector<32x128xf32>, vector<16x128xf32> -> vector<16x128xf32>
    %392 = vector.broadcast %389 : vector<1x128xf32> to vector<16x128xf32>
    %393 = arith.addf %391, %392 : vector<16x128xf32>
    %cst_129 = arith.constant 0.000000e+00 : f32
    %394 = vector.broadcast %cst_129 : f32 to vector<2x32xf32>
    %cst_130 = arith.constant 0.000000e+00 : f32
    %395 = vector.broadcast %cst_130 : f32 to vector<2x32xf32>
    %396 = vector.extract_strided_slice %393 {offsets = [0, 0], sizes = [2, 128], strides = [1, 1]} : vector<16x128xf32> to vector<2x128xf32>
    %cst_131 = arith.constant dense<0.000000e+00> : vector<2x128xf32>
    %397 = tpu.matmul %394, %387, %cst_131 {dimension_numbers = #tpu.dot_dimension_numbers<[1], [0], [0], [1], [0, 0, 1, 1], [], []>} : vector<2x32xf32>, vector<32x128xf32>, vector<2x128xf32> -> vector<2x128xf32>
    %398 = arith.addf %396, %397 : vector<2x128xf32>
    %cst_132 = arith.constant 5.000000e-01 : f32
    %399 = vector.broadcast %cst_132 : f32 to vector<2x128xf32>
    %400 = arith.mulf %399, %398 : vector<2x128xf32>
    %401 = arith.select %7, %398, %400 : vector<2x128xi1>, vector<2x128xf32>
    %402 = math.tanh %401 : vector<2x128xf32>
    %cst_133 = arith.constant 5.000000e-01 : f32
    %403 = vector.broadcast %cst_133 : f32 to vector<2x128xf32>
    %404 = arith.mulf %403, %402 : vector<2x128xf32>
    %cst_134 = arith.constant 5.000000e-01 : f32
    %405 = vector.broadcast %cst_134 : f32 to vector<2x128xf32>
    %406 = arith.addf %404, %405 : vector<2x128xf32>
    %407 = arith.select %7, %402, %406 : vector<2x128xi1>, vector<2x128xf32>
    %408 = vector.extract_strided_slice %407 {offsets = [0, 0], sizes = [2, 32], strides = [1, 1]} : vector<2x128xf32> to vector<2x32xf32>
    %409 = vector.extract_strided_slice %407 {offsets = [0, 32], sizes = [2, 32], strides = [1, 1]} : vector<2x128xf32> to vector<2x32xf32>
    %410 = vector.extract_strided_slice %407 {offsets = [0, 64], sizes = [2, 32], strides = [1, 1]} : vector<2x128xf32> to vector<2x32xf32>
    %411 = vector.extract_strided_slice %407 {offsets = [0, 96], sizes = [2, 32], strides = [1, 1]} : vector<2x128xf32> to vector<2x32xf32>
    %412 = arith.mulf %409, %395 : vector<2x32xf32>
    %413 = arith.mulf %408, %410 : vector<2x32xf32>
    %414 = arith.addf %412, %413 : vector<2x32xf32>
    %415 = math.tanh %414 : vector<2x32xf32>
    %416 = arith.mulf %411, %415 : vector<2x32xf32>
    %c0_135 = arith.constant 0 : index
    %c0_136 = arith.constant 0 : index
    %417 = vector.load %arg7[%c0_135, %c0_136] : memref<16x32xf32, #tpu.memory_space<vmem>>, vector<2x32xf32>
    tpu.vector_store %arg7[%c0_135, %c0_136], %416 {strides = array<i32>} : memref<16x32xf32, #tpu.memory_space<vmem>>, vector<2x32xf32>,
    %418 = vector.extract_strided_slice %393 {offsets = [2, 0], sizes = [2, 128], strides = [1, 1]} : vector<16x128xf32> to vector<2x128xf32>
    %cst_137 = arith.constant dense<0.000000e+00> : vector<2x128xf32>
    %419 = tpu.matmul %416, %387, %cst_137 {dimension_numbers = #tpu.dot_dimension_numbers<[1], [0], [0], [1], [0, 0, 1, 1], [], []>} : vector<2x32xf32>, vector<32x128xf32>, vector<2x128xf32> -> vector<2x128xf32>
    %420 = arith.addf %418, %419 : vector<2x128xf32>
    %cst_138 = arith.constant 5.000000e-01 : f32
    %421 = vector.broadcast %cst_138 : f32 to vector<2x128xf32>
    %422 = arith.mulf %421, %420 : vector<2x128xf32>
    %423 = arith.select %7, %420, %422 : vector<2x128xi1>, vector<2x128xf32>
    %424 = math.tanh %423 : vector<2x128xf32>
    %cst_139 = arith.constant 5.000000e-01 : f32
    %425 = vector.broadcast %cst_139 : f32 to vector<2x128xf32>
    %426 = arith.mulf %425, %424 : vector<2x128xf32>
    %cst_140 = arith.constant 5.000000e-01 : f32
    %427 = vector.broadcast %cst_140 : f32 to vector<2x128xf32>
    %428 = arith.addf %426, %427 : vector<2x128xf32>
    %429 = arith.select %7, %424, %428 : vector<2x128xi1>, vector<2x128xf32>
    %430 = vector.extract_strided_slice %429 {offsets = [0, 0], sizes = [2, 32], strides = [1, 1]} : vector<2x128xf32> to vector<2x32xf32>
    %431 = vector.extract_strided_slice %429 {offsets = [0, 32], sizes = [2, 32], strides = [1, 1]} : vector<2x128xf32> to vector<2x32xf32>
    %432 = vector.extract_strided_slice %429 {offsets = [0, 64], sizes = [2, 32], strides = [1, 1]} : vector<2x128xf32> to vector<2x32xf32>
    %433 = vector.extract_strided_slice %429 {offsets = [0, 96], sizes = [2, 32], strides = [1, 1]} : vector<2x128xf32> to vector<2x32xf32>
    %434 = arith.mulf %431, %414 : vector<2x32xf32>
    %435 = arith.mulf %430, %432 : vector<2x32xf32>
    %436 = arith.addf %434, %435 : vector<2x32xf32>
    %437 = math.tanh %436 : vector<2x32xf32>
    %438 = arith.mulf %433, %437 : vector<2x32xf32>
    %c2_141 = arith.constant 2 : index
    %c0_142 = arith.constant 0 : index
    %439 = vector.load %arg7[%c2_141, %c0_142] : memref<16x32xf32, #tpu.memory_space<vmem>>, vector<2x32xf32>
    tpu.vector_store %arg7[%c2_141, %c0_142], %438 {strides = array<i32>} : memref<16x32xf32, #tpu.memory_space<vmem>>, vector<2x32xf32>,
    %440 = vector.extract_strided_slice %393 {offsets = [4, 0], sizes = [2, 128], strides = [1, 1]} : vector<16x128xf32> to vector<2x128xf32>
    %cst_143 = arith.constant dense<0.000000e+00> : vector<2x128xf32>
    %441 = tpu.matmul %438, %387, %cst_143 {dimension_numbers = #tpu.dot_dimension_numbers<[1], [0], [0], [1], [0, 0, 1, 1], [], []>} : vector<2x32xf32>, vector<32x128xf32>, vector<2x128xf32> -> vector<2x128xf32>
    %442 = arith.addf %440, %441 : vector<2x128xf32>
    %cst_144 = arith.constant 5.000000e-01 : f32
    %443 = vector.broadcast %cst_144 : f32 to vector<2x128xf32>
    %444 = arith.mulf %443, %442 : vector<2x128xf32>
    %445 = arith.select %7, %442, %444 : vector<2x128xi1>, vector<2x128xf32>
    %446 = math.tanh %445 : vector<2x128xf32>
    %cst_145 = arith.constant 5.000000e-01 : f32
    %447 = vector.broadcast %cst_145 : f32 to vector<2x128xf32>
    %448 = arith.mulf %447, %446 : vector<2x128xf32>
    %cst_146 = arith.constant 5.000000e-01 : f32
    %449 = vector.broadcast %cst_146 : f32 to vector<2x128xf32>
    %450 = arith.addf %448, %449 : vector<2x128xf32>
    %451 = arith.select %7, %446, %450 : vector<2x128xi1>, vector<2x128xf32>
    %452 = vector.extract_strided_slice %451 {offsets = [0, 0], sizes = [2, 32], strides = [1, 1]} : vector<2x128xf32> to vector<2x32xf32>
    %453 = vector.extract_strided_slice %451 {offsets = [0, 32], sizes = [2, 32], strides = [1, 1]} : vector<2x128xf32> to vector<2x32xf32>
    %454 = vector.extract_strided_slice %451 {offsets = [0, 64], sizes = [2, 32], strides = [1, 1]} : vector<2x128xf32> to vector<2x32xf32>
    %455 = vector.extract_strided_slice %451 {offsets = [0, 96], sizes = [2, 32], strides = [1, 1]} : vector<2x128xf32> to vector<2x32xf32>
    %456 = arith.mulf %453, %436 : vector<2x32xf32>
    %457 = arith.mulf %452, %454 : vector<2x32xf32>
    %458 = arith.addf %456, %457 : vector<2x32xf32>
    %459 = math.tanh %458 : vector<2x32xf32>
    %460 = arith.mulf %455, %459 : vector<2x32xf32>
    %c4_147 = arith.constant 4 : index
    %c0_148 = arith.constant 0 : index
    %461 = vector.load %arg7[%c4_147, %c0_148] : memref<16x32xf32, #tpu.memory_space<vmem>>, vector<2x32xf32>
    tpu.vector_store %arg7[%c4_147, %c0_148], %460 {strides = array<i32>} : memref<16x32xf32, #tpu.memory_space<vmem>>, vector<2x32xf32>,
    %462 = vector.extract_strided_slice %393 {offsets = [6, 0], sizes = [2, 128], strides = [1, 1]} : vector<16x128xf32> to vector<2x128xf32>
    %cst_149 = arith.constant dense<0.000000e+00> : vector<2x128xf32>
    %463 = tpu.matmul %460, %387, %cst_149 {dimension_numbers = #tpu.dot_dimension_numbers<[1], [0], [0], [1], [0, 0, 1, 1], [], []>} : vector<2x32xf32>, vector<32x128xf32>, vector<2x128xf32> -> vector<2x128xf32>
    %464 = arith.addf %462, %463 : vector<2x128xf32>
    %cst_150 = arith.constant 5.000000e-01 : f32
    %465 = vector.broadcast %cst_150 : f32 to vector<2x128xf32>
    %466 = arith.mulf %465, %464 : vector<2x128xf32>
    %467 = arith.select %7, %464, %466 : vector<2x128xi1>, vector<2x128xf32>
    %468 = math.tanh %467 : vector<2x128xf32>
    %cst_151 = arith.constant 5.000000e-01 : f32
    %469 = vector.broadcast %cst_151 : f32 to vector<2x128xf32>
    %470 = arith.mulf %469, %468 : vector<2x128xf32>
    %cst_152 = arith.constant 5.000000e-01 : f32
    %471 = vector.broadcast %cst_152 : f32 to vector<2x128xf32>
    %472 = arith.addf %470, %471 : vector<2x128xf32>
    %473 = arith.select %7, %468, %472 : vector<2x128xi1>, vector<2x128xf32>
    %474 = vector.extract_strided_slice %473 {offsets = [0, 0], sizes = [2, 32], strides = [1, 1]} : vector<2x128xf32> to vector<2x32xf32>
    %475 = vector.extract_strided_slice %473 {offsets = [0, 32], sizes = [2, 32], strides = [1, 1]} : vector<2x128xf32> to vector<2x32xf32>
    %476 = vector.extract_strided_slice %473 {offsets = [0, 64], sizes = [2, 32], strides = [1, 1]} : vector<2x128xf32> to vector<2x32xf32>
    %477 = vector.extract_strided_slice %473 {offsets = [0, 96], sizes = [2, 32], strides = [1, 1]} : vector<2x128xf32> to vector<2x32xf32>
    %478 = arith.mulf %475, %458 : vector<2x32xf32>
    %479 = arith.mulf %474, %476 : vector<2x32xf32>
    %480 = arith.addf %478, %479 : vector<2x32xf32>
    %481 = math.tanh %480 : vector<2x32xf32>
    %482 = arith.mulf %477, %481 : vector<2x32xf32>
    %c6_153 = arith.constant 6 : index
    %c0_154 = arith.constant 0 : index
    %483 = vector.load %arg7[%c6_153, %c0_154] : memref<16x32xf32, #tpu.memory_space<vmem>>, vector<2x32xf32>
    tpu.vector_store %arg7[%c6_153, %c0_154], %482 {strides = array<i32>} : memref<16x32xf32, #tpu.memory_space<vmem>>, vector<2x32xf32>,
    %484 = vector.extract_strided_slice %393 {offsets = [8, 0], sizes = [2, 128], strides = [1, 1]} : vector<16x128xf32> to vector<2x128xf32>
    %cst_155 = arith.constant dense<0.000000e+00> : vector<2x128xf32>
    %485 = tpu.matmul %482, %387, %cst_155 {dimension_numbers = #tpu.dot_dimension_numbers<[1], [0], [0], [1], [0, 0, 1, 1], [], []>} : vector<2x32xf32>, vector<32x128xf32>, vector<2x128xf32> -> vector<2x128xf32>
    %486 = arith.addf %484, %485 : vector<2x128xf32>
    %cst_156 = arith.constant 5.000000e-01 : f32
    %487 = vector.broadcast %cst_156 : f32 to vector<2x128xf32>
    %488 = arith.mulf %487, %486 : vector<2x128xf32>
    %489 = arith.select %7, %486, %488 : vector<2x128xi1>, vector<2x128xf32>
    %490 = math.tanh %489 : vector<2x128xf32>
    %cst_157 = arith.constant 5.000000e-01 : f32
    %491 = vector.broadcast %cst_157 : f32 to vector<2x128xf32>
    %492 = arith.mulf %491, %490 : vector<2x128xf32>
    %cst_158 = arith.constant 5.000000e-01 : f32
    %493 = vector.broadcast %cst_158 : f32 to vector<2x128xf32>
    %494 = arith.addf %492, %493 : vector<2x128xf32>
    %495 = arith.select %7, %490, %494 : vector<2x128xi1>, vector<2x128xf32>
    %496 = vector.extract_strided_slice %495 {offsets = [0, 0], sizes = [2, 32], strides = [1, 1]} : vector<2x128xf32> to vector<2x32xf32>
    %497 = vector.extract_strided_slice %495 {offsets = [0, 32], sizes = [2, 32], strides = [1, 1]} : vector<2x128xf32> to vector<2x32xf32>
    %498 = vector.extract_strided_slice %495 {offsets = [0, 64], sizes = [2, 32], strides = [1, 1]} : vector<2x128xf32> to vector<2x32xf32>
    %499 = vector.extract_strided_slice %495 {offsets = [0, 96], sizes = [2, 32], strides = [1, 1]} : vector<2x128xf32> to vector<2x32xf32>
    %500 = arith.mulf %497, %480 : vector<2x32xf32>
    %501 = arith.mulf %496, %498 : vector<2x32xf32>
    %502 = arith.addf %500, %501 : vector<2x32xf32>
    %503 = math.tanh %502 : vector<2x32xf32>
    %504 = arith.mulf %499, %503 : vector<2x32xf32>
    %c8_159 = arith.constant 8 : index
    %c0_160 = arith.constant 0 : index
    %505 = vector.load %arg7[%c8_159, %c0_160] : memref<16x32xf32, #tpu.memory_space<vmem>>, vector<2x32xf32>
    tpu.vector_store %arg7[%c8_159, %c0_160], %504 {strides = array<i32>} : memref<16x32xf32, #tpu.memory_space<vmem>>, vector<2x32xf32>,
    %506 = vector.extract_strided_slice %393 {offsets = [10, 0], sizes = [2, 128], strides = [1, 1]} : vector<16x128xf32> to vector<2x128xf32>
    %cst_161 = arith.constant dense<0.000000e+00> : vector<2x128xf32>
    %507 = tpu.matmul %504, %387, %cst_161 {dimension_numbers = #tpu.dot_dimension_numbers<[1], [0], [0], [1], [0, 0, 1, 1], [], []>} : vector<2x32xf32>, vector<32x128xf32>, vector<2x128xf32> -> vector<2x128xf32>
    %508 = arith.addf %506, %507 : vector<2x128xf32>
    %cst_162 = arith.constant 5.000000e-01 : f32
    %509 = vector.broadcast %cst_162 : f32 to vector<2x128xf32>
    %510 = arith.mulf %509, %508 : vector<2x128xf32>
    %511 = arith.select %7, %508, %510 : vector<2x128xi1>, vector<2x128xf32>
    %512 = math.tanh %511 : vector<2x128xf32>
    %cst_163 = arith.constant 5.000000e-01 : f32
    %513 = vector.broadcast %cst_163 : f32 to vector<2x128xf32>
    %514 = arith.mulf %513, %512 : vector<2x128xf32>
    %cst_164 = arith.constant 5.000000e-01 : f32
    %515 = vector.broadcast %cst_164 : f32 to vector<2x128xf32>
    %516 = arith.addf %514, %515 : vector<2x128xf32>
    %517 = arith.select %7, %512, %516 : vector<2x128xi1>, vector<2x128xf32>
    %518 = vector.extract_strided_slice %517 {offsets = [0, 0], sizes = [2, 32], strides = [1, 1]} : vector<2x128xf32> to vector<2x32xf32>
    %519 = vector.extract_strided_slice %517 {offsets = [0, 32], sizes = [2, 32], strides = [1, 1]} : vector<2x128xf32> to vector<2x32xf32>
    %520 = vector.extract_strided_slice %517 {offsets = [0, 64], sizes = [2, 32], strides = [1, 1]} : vector<2x128xf32> to vector<2x32xf32>
    %521 = vector.extract_strided_slice %517 {offsets = [0, 96], sizes = [2, 32], strides = [1, 1]} : vector<2x128xf32> to vector<2x32xf32>
    %522 = arith.mulf %519, %502 : vector<2x32xf32>
    %523 = arith.mulf %518, %520 : vector<2x32xf32>
    %524 = arith.addf %522, %523 : vector<2x32xf32>
    %525 = math.tanh %524 : vector<2x32xf32>
    %526 = arith.mulf %521, %525 : vector<2x32xf32>
    %c10_165 = arith.constant 10 : index
    %c0_166 = arith.constant 0 : index
    %527 = vector.load %arg7[%c10_165, %c0_166] : memref<16x32xf32, #tpu.memory_space<vmem>>, vector<2x32xf32>
    tpu.vector_store %arg7[%c10_165, %c0_166], %526 {strides = array<i32>} : memref<16x32xf32, #tpu.memory_space<vmem>>, vector<2x32xf32>,
    %528 = vector.extract_strided_slice %393 {offsets = [12, 0], sizes = [2, 128], strides = [1, 1]} : vector<16x128xf32> to vector<2x128xf32>
    %cst_167 = arith.constant dense<0.000000e+00> : vector<2x128xf32>
    %529 = tpu.matmul %526, %387, %cst_167 {dimension_numbers = #tpu.dot_dimension_numbers<[1], [0], [0], [1], [0, 0, 1, 1], [], []>} : vector<2x32xf32>, vector<32x128xf32>, vector<2x128xf32> -> vector<2x128xf32>
    %530 = arith.addf %528, %529 : vector<2x128xf32>
    %cst_168 = arith.constant 5.000000e-01 : f32
    %531 = vector.broadcast %cst_168 : f32 to vector<2x128xf32>
    %532 = arith.mulf %531, %530 : vector<2x128xf32>
    %533 = arith.select %7, %530, %532 : vector<2x128xi1>, vector<2x128xf32>
    %534 = math.tanh %533 : vector<2x128xf32>
    %cst_169 = arith.constant 5.000000e-01 : f32
    %535 = vector.broadcast %cst_169 : f32 to vector<2x128xf32>
    %536 = arith.mulf %535, %534 : vector<2x128xf32>
    %cst_170 = arith.constant 5.000000e-01 : f32
    %537 = vector.broadcast %cst_170 : f32 to vector<2x128xf32>
    %538 = arith.addf %536, %537 : vector<2x128xf32>
    %539 = arith.select %7, %534, %538 : vector<2x128xi1>, vector<2x128xf32>
    %540 = vector.extract_strided_slice %539 {offsets = [0, 0], sizes = [2, 32], strides = [1, 1]} : vector<2x128xf32> to vector<2x32xf32>
    %541 = vector.extract_strided_slice %539 {offsets = [0, 32], sizes = [2, 32], strides = [1, 1]} : vector<2x128xf32> to vector<2x32xf32>
    %542 = vector.extract_strided_slice %539 {offsets = [0, 64], sizes = [2, 32], strides = [1, 1]} : vector<2x128xf32> to vector<2x32xf32>
    %543 = vector.extract_strided_slice %539 {offsets = [0, 96], sizes = [2, 32], strides = [1, 1]} : vector<2x128xf32> to vector<2x32xf32>
    %544 = arith.mulf %541, %524 : vector<2x32xf32>
    %545 = arith.mulf %540, %542 : vector<2x32xf32>
    %546 = arith.addf %544, %545 : vector<2x32xf32>
    %547 = math.tanh %546 : vector<2x32xf32>
    %548 = arith.mulf %543, %547 : vector<2x32xf32>
    %c12_171 = arith.constant 12 : index
    %c0_172 = arith.constant 0 : index
    %549 = vector.load %arg7[%c12_171, %c0_172] : memref<16x32xf32, #tpu.memory_space<vmem>>, vector<2x32xf32>
    tpu.vector_store %arg7[%c12_171, %c0_172], %548 {strides = array<i32>} : memref<16x32xf32, #tpu.memory_space<vmem>>, vector<2x32xf32>,
    %550 = vector.extract_strided_slice %393 {offsets = [14, 0], sizes = [2, 128], strides = [1, 1]} : vector<16x128xf32> to vector<2x128xf32>
    %cst_173 = arith.constant dense<0.000000e+00> : vector<2x128xf32>
    %551 = tpu.matmul %548, %387, %cst_173 {dimension_numbers = #tpu.dot_dimension_numbers<[1], [0], [0], [1], [0, 0, 1, 1], [], []>} : vector<2x32xf32>, vector<32x128xf32>, vector<2x128xf32> -> vector<2x128xf32>
    %552 = arith.addf %550, %551 : vector<2x128xf32>
    %cst_174 = arith.constant 5.000000e-01 : f32
    %553 = vector.broadcast %cst_174 : f32 to vector<2x128xf32>
    %554 = arith.mulf %553, %552 : vector<2x128xf32>
    %555 = arith.select %7, %552, %554 : vector<2x128xi1>, vector<2x128xf32>
    %556 = math.tanh %555 : vector<2x128xf32>
    %cst_175 = arith.constant 5.000000e-01 : f32
    %557 = vector.broadcast %cst_175 : f32 to vector<2x128xf32>
    %558 = arith.mulf %557, %556 : vector<2x128xf32>
    %cst_176 = arith.constant 5.000000e-01 : f32
    %559 = vector.broadcast %cst_176 : f32 to vector<2x128xf32>
    %560 = arith.addf %558, %559 : vector<2x128xf32>
    %561 = arith.select %7, %556, %560 : vector<2x128xi1>, vector<2x128xf32>
    %562 = vector.extract_strided_slice %561 {offsets = [0, 0], sizes = [2, 32], strides = [1, 1]} : vector<2x128xf32> to vector<2x32xf32>
    %563 = vector.extract_strided_slice %561 {offsets = [0, 32], sizes = [2, 32], strides = [1, 1]} : vector<2x128xf32> to vector<2x32xf32>
    %564 = vector.extract_strided_slice %561 {offsets = [0, 64], sizes = [2, 32], strides = [1, 1]} : vector<2x128xf32> to vector<2x32xf32>
    %565 = vector.extract_strided_slice %561 {offsets = [0, 96], sizes = [2, 32], strides = [1, 1]} : vector<2x128xf32> to vector<2x32xf32>
    %566 = arith.mulf %563, %546 : vector<2x32xf32>
    %567 = arith.mulf %562, %564 : vector<2x32xf32>
    %568 = arith.addf %566, %567 : vector<2x32xf32>
    %569 = math.tanh %568 : vector<2x32xf32>
    %570 = arith.mulf %565, %569 : vector<2x32xf32>
    %c14_177 = arith.constant 14 : index
    %c0_178 = arith.constant 0 : index
    %571 = vector.load %arg7[%c14_177, %c0_178] : memref<16x32xf32, #tpu.memory_space<vmem>>, vector<2x32xf32>
    tpu.vector_store %arg7[%c14_177, %c0_178], %570 {strides = array<i32>} : memref<16x32xf32, #tpu.memory_space<vmem>>, vector<2x32xf32>,
    %c3 = arith.constant 3 : index
    %c0_179 = arith.constant 0 : index
    %c0_180 = arith.constant 0 : index
    %572 = vector.load %arg1[%c3, %c0_179, %c0_180] : memref<5x32x128xf32, #tpu.memory_space<vmem>>, vector<1x32x128xf32>
    %573 = vector.shape_cast %572 : vector<1x32x128xf32> to vector<32x128xf32>
    %c3_181 = arith.constant 3 : index
    %c0_182 = arith.constant 0 : index
    %c0_183 = arith.constant 0 : index
    %574 = vector.load %arg2[%c3_181, %c0_182, %c0_183] : memref<5x32x128xf32, #tpu.memory_space<vmem>>, vector<1x32x128xf32>
    %575 = vector.shape_cast %574 : vector<1x32x128xf32> to vector<32x128xf32>
    %c3_184 = arith.constant 3 : index
    %c0_185 = arith.constant 0 : index
    %c0_186 = arith.constant 0 : index
    %576 = vector.load %arg3[%c3_184, %c0_185, %c0_186] : memref<5x1x128xf32, #tpu.memory_space<vmem>>, vector<1x1x128xf32>
    %577 = vector.shape_cast %576 : vector<1x1x128xf32> to vector<1x128xf32>
    %c0_187 = arith.constant 0 : index
    %c0_188 = arith.constant 0 : index
    %578 = vector.load %arg7[%c0_187, %c0_188] : memref<16x32xf32, #tpu.memory_space<vmem>>, vector<16x32xf32>
    %cst_189 = arith.constant dense<0.000000e+00> : vector<16x128xf32>
    %579 = tpu.matmul %578, %573, %cst_189 {dimension_numbers = #tpu.dot_dimension_numbers<[1], [0], [0], [1], [0, 0, 1, 1], [], []>} : vector<16x32xf32>, vector<32x128xf32>, vector<16x128xf32> -> vector<16x128xf32>
    %580 = vector.broadcast %577 : vector<1x128xf32> to vector<16x128xf32>
    %581 = arith.addf %579, %580 : vector<16x128xf32>
    %cst_190 = arith.constant 0.000000e+00 : f32
    %582 = vector.broadcast %cst_190 : f32 to vector<2x32xf32>
    %cst_191 = arith.constant 0.000000e+00 : f32
    %583 = vector.broadcast %cst_191 : f32 to vector<2x32xf32>
    %584 = vector.extract_strided_slice %581 {offsets = [0, 0], sizes = [2, 128], strides = [1, 1]} : vector<16x128xf32> to vector<2x128xf32>
    %cst_192 = arith.constant dense<0.000000e+00> : vector<2x128xf32>
    %585 = tpu.matmul %582, %575, %cst_192 {dimension_numbers = #tpu.dot_dimension_numbers<[1], [0], [0], [1], [0, 0, 1, 1], [], []>} : vector<2x32xf32>, vector<32x128xf32>, vector<2x128xf32> -> vector<2x128xf32>
    %586 = arith.addf %584, %585 : vector<2x128xf32>
    %cst_193 = arith.constant 5.000000e-01 : f32
    %587 = vector.broadcast %cst_193 : f32 to vector<2x128xf32>
    %588 = arith.mulf %587, %586 : vector<2x128xf32>
    %589 = arith.select %7, %586, %588 : vector<2x128xi1>, vector<2x128xf32>
    %590 = math.tanh %589 : vector<2x128xf32>
    %cst_194 = arith.constant 5.000000e-01 : f32
    %591 = vector.broadcast %cst_194 : f32 to vector<2x128xf32>
    %592 = arith.mulf %591, %590 : vector<2x128xf32>
    %cst_195 = arith.constant 5.000000e-01 : f32
    %593 = vector.broadcast %cst_195 : f32 to vector<2x128xf32>
    %594 = arith.addf %592, %593 : vector<2x128xf32>
    %595 = arith.select %7, %590, %594 : vector<2x128xi1>, vector<2x128xf32>
    %596 = vector.extract_strided_slice %595 {offsets = [0, 0], sizes = [2, 32], strides = [1, 1]} : vector<2x128xf32> to vector<2x32xf32>
    %597 = vector.extract_strided_slice %595 {offsets = [0, 32], sizes = [2, 32], strides = [1, 1]} : vector<2x128xf32> to vector<2x32xf32>
    %598 = vector.extract_strided_slice %595 {offsets = [0, 64], sizes = [2, 32], strides = [1, 1]} : vector<2x128xf32> to vector<2x32xf32>
    %599 = vector.extract_strided_slice %595 {offsets = [0, 96], sizes = [2, 32], strides = [1, 1]} : vector<2x128xf32> to vector<2x32xf32>
    %600 = arith.mulf %597, %583 : vector<2x32xf32>
    %601 = arith.mulf %596, %598 : vector<2x32xf32>
    %602 = arith.addf %600, %601 : vector<2x32xf32>
    %603 = math.tanh %602 : vector<2x32xf32>
    %604 = arith.mulf %599, %603 : vector<2x32xf32>
    %c0_196 = arith.constant 0 : index
    %c0_197 = arith.constant 0 : index
    %605 = vector.load %arg7[%c0_196, %c0_197] : memref<16x32xf32, #tpu.memory_space<vmem>>, vector<2x32xf32>
    tpu.vector_store %arg7[%c0_196, %c0_197], %604 {strides = array<i32>} : memref<16x32xf32, #tpu.memory_space<vmem>>, vector<2x32xf32>,
    %606 = vector.extract_strided_slice %581 {offsets = [2, 0], sizes = [2, 128], strides = [1, 1]} : vector<16x128xf32> to vector<2x128xf32>
    %cst_198 = arith.constant dense<0.000000e+00> : vector<2x128xf32>
    %607 = tpu.matmul %604, %575, %cst_198 {dimension_numbers = #tpu.dot_dimension_numbers<[1], [0], [0], [1], [0, 0, 1, 1], [], []>} : vector<2x32xf32>, vector<32x128xf32>, vector<2x128xf32> -> vector<2x128xf32>
    %608 = arith.addf %606, %607 : vector<2x128xf32>
    %cst_199 = arith.constant 5.000000e-01 : f32
    %609 = vector.broadcast %cst_199 : f32 to vector<2x128xf32>
    %610 = arith.mulf %609, %608 : vector<2x128xf32>
    %611 = arith.select %7, %608, %610 : vector<2x128xi1>, vector<2x128xf32>
    %612 = math.tanh %611 : vector<2x128xf32>
    %cst_200 = arith.constant 5.000000e-01 : f32
    %613 = vector.broadcast %cst_200 : f32 to vector<2x128xf32>
    %614 = arith.mulf %613, %612 : vector<2x128xf32>
    %cst_201 = arith.constant 5.000000e-01 : f32
    %615 = vector.broadcast %cst_201 : f32 to vector<2x128xf32>
    %616 = arith.addf %614, %615 : vector<2x128xf32>
    %617 = arith.select %7, %612, %616 : vector<2x128xi1>, vector<2x128xf32>
    %618 = vector.extract_strided_slice %617 {offsets = [0, 0], sizes = [2, 32], strides = [1, 1]} : vector<2x128xf32> to vector<2x32xf32>
    %619 = vector.extract_strided_slice %617 {offsets = [0, 32], sizes = [2, 32], strides = [1, 1]} : vector<2x128xf32> to vector<2x32xf32>
    %620 = vector.extract_strided_slice %617 {offsets = [0, 64], sizes = [2, 32], strides = [1, 1]} : vector<2x128xf32> to vector<2x32xf32>
    %621 = vector.extract_strided_slice %617 {offsets = [0, 96], sizes = [2, 32], strides = [1, 1]} : vector<2x128xf32> to vector<2x32xf32>
    %622 = arith.mulf %619, %602 : vector<2x32xf32>
    %623 = arith.mulf %618, %620 : vector<2x32xf32>
    %624 = arith.addf %622, %623 : vector<2x32xf32>
    %625 = math.tanh %624 : vector<2x32xf32>
    %626 = arith.mulf %621, %625 : vector<2x32xf32>
    %c2_202 = arith.constant 2 : index
    %c0_203 = arith.constant 0 : index
    %627 = vector.load %arg7[%c2_202, %c0_203] : memref<16x32xf32, #tpu.memory_space<vmem>>, vector<2x32xf32>
    tpu.vector_store %arg7[%c2_202, %c0_203], %626 {strides = array<i32>} : memref<16x32xf32, #tpu.memory_space<vmem>>, vector<2x32xf32>,
    %628 = vector.extract_strided_slice %581 {offsets = [4, 0], sizes = [2, 128], strides = [1, 1]} : vector<16x128xf32> to vector<2x128xf32>
    %cst_204 = arith.constant dense<0.000000e+00> : vector<2x128xf32>
    %629 = tpu.matmul %626, %575, %cst_204 {dimension_numbers = #tpu.dot_dimension_numbers<[1], [0], [0], [1], [0, 0, 1, 1], [], []>} : vector<2x32xf32>, vector<32x128xf32>, vector<2x128xf32> -> vector<2x128xf32>
    %630 = arith.addf %628, %629 : vector<2x128xf32>
    %cst_205 = arith.constant 5.000000e-01 : f32
    %631 = vector.broadcast %cst_205 : f32 to vector<2x128xf32>
    %632 = arith.mulf %631, %630 : vector<2x128xf32>
    %633 = arith.select %7, %630, %632 : vector<2x128xi1>, vector<2x128xf32>
    %634 = math.tanh %633 : vector<2x128xf32>
    %cst_206 = arith.constant 5.000000e-01 : f32
    %635 = vector.broadcast %cst_206 : f32 to vector<2x128xf32>
    %636 = arith.mulf %635, %634 : vector<2x128xf32>
    %cst_207 = arith.constant 5.000000e-01 : f32
    %637 = vector.broadcast %cst_207 : f32 to vector<2x128xf32>
    %638 = arith.addf %636, %637 : vector<2x128xf32>
    %639 = arith.select %7, %634, %638 : vector<2x128xi1>, vector<2x128xf32>
    %640 = vector.extract_strided_slice %639 {offsets = [0, 0], sizes = [2, 32], strides = [1, 1]} : vector<2x128xf32> to vector<2x32xf32>
    %641 = vector.extract_strided_slice %639 {offsets = [0, 32], sizes = [2, 32], strides = [1, 1]} : vector<2x128xf32> to vector<2x32xf32>
    %642 = vector.extract_strided_slice %639 {offsets = [0, 64], sizes = [2, 32], strides = [1, 1]} : vector<2x128xf32> to vector<2x32xf32>
    %643 = vector.extract_strided_slice %639 {offsets = [0, 96], sizes = [2, 32], strides = [1, 1]} : vector<2x128xf32> to vector<2x32xf32>
    %644 = arith.mulf %641, %624 : vector<2x32xf32>
    %645 = arith.mulf %640, %642 : vector<2x32xf32>
    %646 = arith.addf %644, %645 : vector<2x32xf32>
    %647 = math.tanh %646 : vector<2x32xf32>
    %648 = arith.mulf %643, %647 : vector<2x32xf32>
    %c4_208 = arith.constant 4 : index
    %c0_209 = arith.constant 0 : index
    %649 = vector.load %arg7[%c4_208, %c0_209] : memref<16x32xf32, #tpu.memory_space<vmem>>, vector<2x32xf32>
    tpu.vector_store %arg7[%c4_208, %c0_209], %648 {strides = array<i32>} : memref<16x32xf32, #tpu.memory_space<vmem>>, vector<2x32xf32>,
    %650 = vector.extract_strided_slice %581 {offsets = [6, 0], sizes = [2, 128], strides = [1, 1]} : vector<16x128xf32> to vector<2x128xf32>
    %cst_210 = arith.constant dense<0.000000e+00> : vector<2x128xf32>
    %651 = tpu.matmul %648, %575, %cst_210 {dimension_numbers = #tpu.dot_dimension_numbers<[1], [0], [0], [1], [0, 0, 1, 1], [], []>} : vector<2x32xf32>, vector<32x128xf32>, vector<2x128xf32> -> vector<2x128xf32>
    %652 = arith.addf %650, %651 : vector<2x128xf32>
    %cst_211 = arith.constant 5.000000e-01 : f32
    %653 = vector.broadcast %cst_211 : f32 to vector<2x128xf32>
    %654 = arith.mulf %653, %652 : vector<2x128xf32>
    %655 = arith.select %7, %652, %654 : vector<2x128xi1>, vector<2x128xf32>
    %656 = math.tanh %655 : vector<2x128xf32>
    %cst_212 = arith.constant 5.000000e-01 : f32
    %657 = vector.broadcast %cst_212 : f32 to vector<2x128xf32>
    %658 = arith.mulf %657, %656 : vector<2x128xf32>
    %cst_213 = arith.constant 5.000000e-01 : f32
    %659 = vector.broadcast %cst_213 : f32 to vector<2x128xf32>
    %660 = arith.addf %658, %659 : vector<2x128xf32>
    %661 = arith.select %7, %656, %660 : vector<2x128xi1>, vector<2x128xf32>
    %662 = vector.extract_strided_slice %661 {offsets = [0, 0], sizes = [2, 32], strides = [1, 1]} : vector<2x128xf32> to vector<2x32xf32>
    %663 = vector.extract_strided_slice %661 {offsets = [0, 32], sizes = [2, 32], strides = [1, 1]} : vector<2x128xf32> to vector<2x32xf32>
    %664 = vector.extract_strided_slice %661 {offsets = [0, 64], sizes = [2, 32], strides = [1, 1]} : vector<2x128xf32> to vector<2x32xf32>
    %665 = vector.extract_strided_slice %661 {offsets = [0, 96], sizes = [2, 32], strides = [1, 1]} : vector<2x128xf32> to vector<2x32xf32>
    %666 = arith.mulf %663, %646 : vector<2x32xf32>
    %667 = arith.mulf %662, %664 : vector<2x32xf32>
    %668 = arith.addf %666, %667 : vector<2x32xf32>
    %669 = math.tanh %668 : vector<2x32xf32>
    %670 = arith.mulf %665, %669 : vector<2x32xf32>
    %c6_214 = arith.constant 6 : index
    %c0_215 = arith.constant 0 : index
    %671 = vector.load %arg7[%c6_214, %c0_215] : memref<16x32xf32, #tpu.memory_space<vmem>>, vector<2x32xf32>
    tpu.vector_store %arg7[%c6_214, %c0_215], %670 {strides = array<i32>} : memref<16x32xf32, #tpu.memory_space<vmem>>, vector<2x32xf32>,
    %672 = vector.extract_strided_slice %581 {offsets = [8, 0], sizes = [2, 128], strides = [1, 1]} : vector<16x128xf32> to vector<2x128xf32>
    %cst_216 = arith.constant dense<0.000000e+00> : vector<2x128xf32>
    %673 = tpu.matmul %670, %575, %cst_216 {dimension_numbers = #tpu.dot_dimension_numbers<[1], [0], [0], [1], [0, 0, 1, 1], [], []>} : vector<2x32xf32>, vector<32x128xf32>, vector<2x128xf32> -> vector<2x128xf32>
    %674 = arith.addf %672, %673 : vector<2x128xf32>
    %cst_217 = arith.constant 5.000000e-01 : f32
    %675 = vector.broadcast %cst_217 : f32 to vector<2x128xf32>
    %676 = arith.mulf %675, %674 : vector<2x128xf32>
    %677 = arith.select %7, %674, %676 : vector<2x128xi1>, vector<2x128xf32>
    %678 = math.tanh %677 : vector<2x128xf32>
    %cst_218 = arith.constant 5.000000e-01 : f32
    %679 = vector.broadcast %cst_218 : f32 to vector<2x128xf32>
    %680 = arith.mulf %679, %678 : vector<2x128xf32>
    %cst_219 = arith.constant 5.000000e-01 : f32
    %681 = vector.broadcast %cst_219 : f32 to vector<2x128xf32>
    %682 = arith.addf %680, %681 : vector<2x128xf32>
    %683 = arith.select %7, %678, %682 : vector<2x128xi1>, vector<2x128xf32>
    %684 = vector.extract_strided_slice %683 {offsets = [0, 0], sizes = [2, 32], strides = [1, 1]} : vector<2x128xf32> to vector<2x32xf32>
    %685 = vector.extract_strided_slice %683 {offsets = [0, 32], sizes = [2, 32], strides = [1, 1]} : vector<2x128xf32> to vector<2x32xf32>
    %686 = vector.extract_strided_slice %683 {offsets = [0, 64], sizes = [2, 32], strides = [1, 1]} : vector<2x128xf32> to vector<2x32xf32>
    %687 = vector.extract_strided_slice %683 {offsets = [0, 96], sizes = [2, 32], strides = [1, 1]} : vector<2x128xf32> to vector<2x32xf32>
    %688 = arith.mulf %685, %668 : vector<2x32xf32>
    %689 = arith.mulf %684, %686 : vector<2x32xf32>
    %690 = arith.addf %688, %689 : vector<2x32xf32>
    %691 = math.tanh %690 : vector<2x32xf32>
    %692 = arith.mulf %687, %691 : vector<2x32xf32>
    %c8_220 = arith.constant 8 : index
    %c0_221 = arith.constant 0 : index
    %693 = vector.load %arg7[%c8_220, %c0_221] : memref<16x32xf32, #tpu.memory_space<vmem>>, vector<2x32xf32>
    tpu.vector_store %arg7[%c8_220, %c0_221], %692 {strides = array<i32>} : memref<16x32xf32, #tpu.memory_space<vmem>>, vector<2x32xf32>,
    %694 = vector.extract_strided_slice %581 {offsets = [10, 0], sizes = [2, 128], strides = [1, 1]} : vector<16x128xf32> to vector<2x128xf32>
    %cst_222 = arith.constant dense<0.000000e+00> : vector<2x128xf32>
    %695 = tpu.matmul %692, %575, %cst_222 {dimension_numbers = #tpu.dot_dimension_numbers<[1], [0], [0], [1], [0, 0, 1, 1], [], []>} : vector<2x32xf32>, vector<32x128xf32>, vector<2x128xf32> -> vector<2x128xf32>
    %696 = arith.addf %694, %695 : vector<2x128xf32>
    %cst_223 = arith.constant 5.000000e-01 : f32
    %697 = vector.broadcast %cst_223 : f32 to vector<2x128xf32>
    %698 = arith.mulf %697, %696 : vector<2x128xf32>
    %699 = arith.select %7, %696, %698 : vector<2x128xi1>, vector<2x128xf32>
    %700 = math.tanh %699 : vector<2x128xf32>
    %cst_224 = arith.constant 5.000000e-01 : f32
    %701 = vector.broadcast %cst_224 : f32 to vector<2x128xf32>
    %702 = arith.mulf %701, %700 : vector<2x128xf32>
    %cst_225 = arith.constant 5.000000e-01 : f32
    %703 = vector.broadcast %cst_225 : f32 to vector<2x128xf32>
    %704 = arith.addf %702, %703 : vector<2x128xf32>
    %705 = arith.select %7, %700, %704 : vector<2x128xi1>, vector<2x128xf32>
    %706 = vector.extract_strided_slice %705 {offsets = [0, 0], sizes = [2, 32], strides = [1, 1]} : vector<2x128xf32> to vector<2x32xf32>
    %707 = vector.extract_strided_slice %705 {offsets = [0, 32], sizes = [2, 32], strides = [1, 1]} : vector<2x128xf32> to vector<2x32xf32>
    %708 = vector.extract_strided_slice %705 {offsets = [0, 64], sizes = [2, 32], strides = [1, 1]} : vector<2x128xf32> to vector<2x32xf32>
    %709 = vector.extract_strided_slice %705 {offsets = [0, 96], sizes = [2, 32], strides = [1, 1]} : vector<2x128xf32> to vector<2x32xf32>
    %710 = arith.mulf %707, %690 : vector<2x32xf32>
    %711 = arith.mulf %706, %708 : vector<2x32xf32>
    %712 = arith.addf %710, %711 : vector<2x32xf32>
    %713 = math.tanh %712 : vector<2x32xf32>
    %714 = arith.mulf %709, %713 : vector<2x32xf32>
    %c10_226 = arith.constant 10 : index
    %c0_227 = arith.constant 0 : index
    %715 = vector.load %arg7[%c10_226, %c0_227] : memref<16x32xf32, #tpu.memory_space<vmem>>, vector<2x32xf32>
    tpu.vector_store %arg7[%c10_226, %c0_227], %714 {strides = array<i32>} : memref<16x32xf32, #tpu.memory_space<vmem>>, vector<2x32xf32>,
    %716 = vector.extract_strided_slice %581 {offsets = [12, 0], sizes = [2, 128], strides = [1, 1]} : vector<16x128xf32> to vector<2x128xf32>
    %cst_228 = arith.constant dense<0.000000e+00> : vector<2x128xf32>
    %717 = tpu.matmul %714, %575, %cst_228 {dimension_numbers = #tpu.dot_dimension_numbers<[1], [0], [0], [1], [0, 0, 1, 1], [], []>} : vector<2x32xf32>, vector<32x128xf32>, vector<2x128xf32> -> vector<2x128xf32>
    %718 = arith.addf %716, %717 : vector<2x128xf32>
    %cst_229 = arith.constant 5.000000e-01 : f32
    %719 = vector.broadcast %cst_229 : f32 to vector<2x128xf32>
    %720 = arith.mulf %719, %718 : vector<2x128xf32>
    %721 = arith.select %7, %718, %720 : vector<2x128xi1>, vector<2x128xf32>
    %722 = math.tanh %721 : vector<2x128xf32>
    %cst_230 = arith.constant 5.000000e-01 : f32
    %723 = vector.broadcast %cst_230 : f32 to vector<2x128xf32>
    %724 = arith.mulf %723, %722 : vector<2x128xf32>
    %cst_231 = arith.constant 5.000000e-01 : f32
    %725 = vector.broadcast %cst_231 : f32 to vector<2x128xf32>
    %726 = arith.addf %724, %725 : vector<2x128xf32>
    %727 = arith.select %7, %722, %726 : vector<2x128xi1>, vector<2x128xf32>
    %728 = vector.extract_strided_slice %727 {offsets = [0, 0], sizes = [2, 32], strides = [1, 1]} : vector<2x128xf32> to vector<2x32xf32>
    %729 = vector.extract_strided_slice %727 {offsets = [0, 32], sizes = [2, 32], strides = [1, 1]} : vector<2x128xf32> to vector<2x32xf32>
    %730 = vector.extract_strided_slice %727 {offsets = [0, 64], sizes = [2, 32], strides = [1, 1]} : vector<2x128xf32> to vector<2x32xf32>
    %731 = vector.extract_strided_slice %727 {offsets = [0, 96], sizes = [2, 32], strides = [1, 1]} : vector<2x128xf32> to vector<2x32xf32>
    %732 = arith.mulf %729, %712 : vector<2x32xf32>
    %733 = arith.mulf %728, %730 : vector<2x32xf32>
    %734 = arith.addf %732, %733 : vector<2x32xf32>
    %735 = math.tanh %734 : vector<2x32xf32>
    %736 = arith.mulf %731, %735 : vector<2x32xf32>
    %c12_232 = arith.constant 12 : index
    %c0_233 = arith.constant 0 : index
    %737 = vector.load %arg7[%c12_232, %c0_233] : memref<16x32xf32, #tpu.memory_space<vmem>>, vector<2x32xf32>
    tpu.vector_store %arg7[%c12_232, %c0_233], %736 {strides = array<i32>} : memref<16x32xf32, #tpu.memory_space<vmem>>, vector<2x32xf32>,
    %738 = vector.extract_strided_slice %581 {offsets = [14, 0], sizes = [2, 128], strides = [1, 1]} : vector<16x128xf32> to vector<2x128xf32>
    %cst_234 = arith.constant dense<0.000000e+00> : vector<2x128xf32>
    %739 = tpu.matmul %736, %575, %cst_234 {dimension_numbers = #tpu.dot_dimension_numbers<[1], [0], [0], [1], [0, 0, 1, 1], [], []>} : vector<2x32xf32>, vector<32x128xf32>, vector<2x128xf32> -> vector<2x128xf32>
    %740 = arith.addf %738, %739 : vector<2x128xf32>
    %cst_235 = arith.constant 5.000000e-01 : f32
    %741 = vector.broadcast %cst_235 : f32 to vector<2x128xf32>
    %742 = arith.mulf %741, %740 : vector<2x128xf32>
    %743 = arith.select %7, %740, %742 : vector<2x128xi1>, vector<2x128xf32>
    %744 = math.tanh %743 : vector<2x128xf32>
    %cst_236 = arith.constant 5.000000e-01 : f32
    %745 = vector.broadcast %cst_236 : f32 to vector<2x128xf32>
    %746 = arith.mulf %745, %744 : vector<2x128xf32>
    %cst_237 = arith.constant 5.000000e-01 : f32
    %747 = vector.broadcast %cst_237 : f32 to vector<2x128xf32>
    %748 = arith.addf %746, %747 : vector<2x128xf32>
    %749 = arith.select %7, %744, %748 : vector<2x128xi1>, vector<2x128xf32>
    %750 = vector.extract_strided_slice %749 {offsets = [0, 0], sizes = [2, 32], strides = [1, 1]} : vector<2x128xf32> to vector<2x32xf32>
    %751 = vector.extract_strided_slice %749 {offsets = [0, 32], sizes = [2, 32], strides = [1, 1]} : vector<2x128xf32> to vector<2x32xf32>
    %752 = vector.extract_strided_slice %749 {offsets = [0, 64], sizes = [2, 32], strides = [1, 1]} : vector<2x128xf32> to vector<2x32xf32>
    %753 = vector.extract_strided_slice %749 {offsets = [0, 96], sizes = [2, 32], strides = [1, 1]} : vector<2x128xf32> to vector<2x32xf32>
    %754 = arith.mulf %751, %734 : vector<2x32xf32>
    %755 = arith.mulf %750, %752 : vector<2x32xf32>
    %756 = arith.addf %754, %755 : vector<2x32xf32>
    %757 = math.tanh %756 : vector<2x32xf32>
    %758 = arith.mulf %753, %757 : vector<2x32xf32>
    %c14_238 = arith.constant 14 : index
    %c0_239 = arith.constant 0 : index
    %759 = vector.load %arg7[%c14_238, %c0_239] : memref<16x32xf32, #tpu.memory_space<vmem>>, vector<2x32xf32>
    tpu.vector_store %arg7[%c14_238, %c0_239], %758 {strides = array<i32>} : memref<16x32xf32, #tpu.memory_space<vmem>>, vector<2x32xf32>,
    %c4_240 = arith.constant 4 : index
    %c0_241 = arith.constant 0 : index
    %c0_242 = arith.constant 0 : index
    %760 = vector.load %arg1[%c4_240, %c0_241, %c0_242] : memref<5x32x128xf32, #tpu.memory_space<vmem>>, vector<1x32x128xf32>
    %761 = vector.shape_cast %760 : vector<1x32x128xf32> to vector<32x128xf32>
    %c4_243 = arith.constant 4 : index
    %c0_244 = arith.constant 0 : index
    %c0_245 = arith.constant 0 : index
    %762 = vector.load %arg2[%c4_243, %c0_244, %c0_245] : memref<5x32x128xf32, #tpu.memory_space<vmem>>, vector<1x32x128xf32>
    %763 = vector.shape_cast %762 : vector<1x32x128xf32> to vector<32x128xf32>
    %c4_246 = arith.constant 4 : index
    %c0_247 = arith.constant 0 : index
    %c0_248 = arith.constant 0 : index
    %764 = vector.load %arg3[%c4_246, %c0_247, %c0_248] : memref<5x1x128xf32, #tpu.memory_space<vmem>>, vector<1x1x128xf32>
    %765 = vector.shape_cast %764 : vector<1x1x128xf32> to vector<1x128xf32>
    %c0_249 = arith.constant 0 : index
    %c0_250 = arith.constant 0 : index
    %766 = vector.load %arg7[%c0_249, %c0_250] : memref<16x32xf32, #tpu.memory_space<vmem>>, vector<16x32xf32>
    %cst_251 = arith.constant dense<0.000000e+00> : vector<16x128xf32>
    %767 = tpu.matmul %766, %761, %cst_251 {dimension_numbers = #tpu.dot_dimension_numbers<[1], [0], [0], [1], [0, 0, 1, 1], [], []>} : vector<16x32xf32>, vector<32x128xf32>, vector<16x128xf32> -> vector<16x128xf32>
    %768 = vector.broadcast %765 : vector<1x128xf32> to vector<16x128xf32>
    %769 = arith.addf %767, %768 : vector<16x128xf32>
    %cst_252 = arith.constant 0.000000e+00 : f32
    %770 = vector.broadcast %cst_252 : f32 to vector<2x32xf32>
    %cst_253 = arith.constant 0.000000e+00 : f32
    %771 = vector.broadcast %cst_253 : f32 to vector<2x32xf32>
    %772 = vector.extract_strided_slice %769 {offsets = [0, 0], sizes = [2, 128], strides = [1, 1]} : vector<16x128xf32> to vector<2x128xf32>
    %cst_254 = arith.constant dense<0.000000e+00> : vector<2x128xf32>
    %773 = tpu.matmul %770, %763, %cst_254 {dimension_numbers = #tpu.dot_dimension_numbers<[1], [0], [0], [1], [0, 0, 1, 1], [], []>} : vector<2x32xf32>, vector<32x128xf32>, vector<2x128xf32> -> vector<2x128xf32>
    %774 = arith.addf %772, %773 : vector<2x128xf32>
    %cst_255 = arith.constant 5.000000e-01 : f32
    %775 = vector.broadcast %cst_255 : f32 to vector<2x128xf32>
    %776 = arith.mulf %775, %774 : vector<2x128xf32>
    %777 = arith.select %7, %774, %776 : vector<2x128xi1>, vector<2x128xf32>
    %778 = math.tanh %777 : vector<2x128xf32>
    %cst_256 = arith.constant 5.000000e-01 : f32
    %779 = vector.broadcast %cst_256 : f32 to vector<2x128xf32>
    %780 = arith.mulf %779, %778 : vector<2x128xf32>
    %cst_257 = arith.constant 5.000000e-01 : f32
    %781 = vector.broadcast %cst_257 : f32 to vector<2x128xf32>
    %782 = arith.addf %780, %781 : vector<2x128xf32>
    %783 = arith.select %7, %778, %782 : vector<2x128xi1>, vector<2x128xf32>
    %784 = vector.extract_strided_slice %783 {offsets = [0, 0], sizes = [2, 32], strides = [1, 1]} : vector<2x128xf32> to vector<2x32xf32>
    %785 = vector.extract_strided_slice %783 {offsets = [0, 32], sizes = [2, 32], strides = [1, 1]} : vector<2x128xf32> to vector<2x32xf32>
    %786 = vector.extract_strided_slice %783 {offsets = [0, 64], sizes = [2, 32], strides = [1, 1]} : vector<2x128xf32> to vector<2x32xf32>
    %787 = vector.extract_strided_slice %783 {offsets = [0, 96], sizes = [2, 32], strides = [1, 1]} : vector<2x128xf32> to vector<2x32xf32>
    %788 = arith.mulf %785, %771 : vector<2x32xf32>
    %789 = arith.mulf %784, %786 : vector<2x32xf32>
    %790 = arith.addf %788, %789 : vector<2x32xf32>
    %791 = math.tanh %790 : vector<2x32xf32>
    %792 = arith.mulf %787, %791 : vector<2x32xf32>
    %793 = vector.extract_strided_slice %769 {offsets = [2, 0], sizes = [2, 128], strides = [1, 1]} : vector<16x128xf32> to vector<2x128xf32>
    %cst_258 = arith.constant dense<0.000000e+00> : vector<2x128xf32>
    %794 = tpu.matmul %792, %763, %cst_258 {dimension_numbers = #tpu.dot_dimension_numbers<[1], [0], [0], [1], [0, 0, 1, 1], [], []>} : vector<2x32xf32>, vector<32x128xf32>, vector<2x128xf32> -> vector<2x128xf32>
    %795 = arith.addf %793, %794 : vector<2x128xf32>
    %cst_259 = arith.constant 5.000000e-01 : f32
    %796 = vector.broadcast %cst_259 : f32 to vector<2x128xf32>
    %797 = arith.mulf %796, %795 : vector<2x128xf32>
    %798 = arith.select %7, %795, %797 : vector<2x128xi1>, vector<2x128xf32>
    %799 = math.tanh %798 : vector<2x128xf32>
    %cst_260 = arith.constant 5.000000e-01 : f32
    %800 = vector.broadcast %cst_260 : f32 to vector<2x128xf32>
    %801 = arith.mulf %800, %799 : vector<2x128xf32>
    %cst_261 = arith.constant 5.000000e-01 : f32
    %802 = vector.broadcast %cst_261 : f32 to vector<2x128xf32>
    %803 = arith.addf %801, %802 : vector<2x128xf32>
    %804 = arith.select %7, %799, %803 : vector<2x128xi1>, vector<2x128xf32>
    %805 = vector.extract_strided_slice %804 {offsets = [0, 0], sizes = [2, 32], strides = [1, 1]} : vector<2x128xf32> to vector<2x32xf32>
    %806 = vector.extract_strided_slice %804 {offsets = [0, 32], sizes = [2, 32], strides = [1, 1]} : vector<2x128xf32> to vector<2x32xf32>
    %807 = vector.extract_strided_slice %804 {offsets = [0, 64], sizes = [2, 32], strides = [1, 1]} : vector<2x128xf32> to vector<2x32xf32>
    %808 = vector.extract_strided_slice %804 {offsets = [0, 96], sizes = [2, 32], strides = [1, 1]} : vector<2x128xf32> to vector<2x32xf32>
    %809 = arith.mulf %806, %790 : vector<2x32xf32>
    %810 = arith.mulf %805, %807 : vector<2x32xf32>
    %811 = arith.addf %809, %810 : vector<2x32xf32>
    %812 = math.tanh %811 : vector<2x32xf32>
    %813 = arith.mulf %808, %812 : vector<2x32xf32>
    %814 = vector.extract_strided_slice %769 {offsets = [4, 0], sizes = [2, 128], strides = [1, 1]} : vector<16x128xf32> to vector<2x128xf32>
    %cst_262 = arith.constant dense<0.000000e+00> : vector<2x128xf32>
    %815 = tpu.matmul %813, %763, %cst_262 {dimension_numbers = #tpu.dot_dimension_numbers<[1], [0], [0], [1], [0, 0, 1, 1], [], []>} : vector<2x32xf32>, vector<32x128xf32>, vector<2x128xf32> -> vector<2x128xf32>
    %816 = arith.addf %814, %815 : vector<2x128xf32>
    %cst_263 = arith.constant 5.000000e-01 : f32
    %817 = vector.broadcast %cst_263 : f32 to vector<2x128xf32>
    %818 = arith.mulf %817, %816 : vector<2x128xf32>
    %819 = arith.select %7, %816, %818 : vector<2x128xi1>, vector<2x128xf32>
    %820 = math.tanh %819 : vector<2x128xf32>
    %cst_264 = arith.constant 5.000000e-01 : f32
    %821 = vector.broadcast %cst_264 : f32 to vector<2x128xf32>
    %822 = arith.mulf %821, %820 : vector<2x128xf32>
    %cst_265 = arith.constant 5.000000e-01 : f32
    %823 = vector.broadcast %cst_265 : f32 to vector<2x128xf32>
    %824 = arith.addf %822, %823 : vector<2x128xf32>
    %825 = arith.select %7, %820, %824 : vector<2x128xi1>, vector<2x128xf32>
    %826 = vector.extract_strided_slice %825 {offsets = [0, 0], sizes = [2, 32], strides = [1, 1]} : vector<2x128xf32> to vector<2x32xf32>
    %827 = vector.extract_strided_slice %825 {offsets = [0, 32], sizes = [2, 32], strides = [1, 1]} : vector<2x128xf32> to vector<2x32xf32>
    %828 = vector.extract_strided_slice %825 {offsets = [0, 64], sizes = [2, 32], strides = [1, 1]} : vector<2x128xf32> to vector<2x32xf32>
    %829 = vector.extract_strided_slice %825 {offsets = [0, 96], sizes = [2, 32], strides = [1, 1]} : vector<2x128xf32> to vector<2x32xf32>
    %830 = arith.mulf %827, %811 : vector<2x32xf32>
    %831 = arith.mulf %826, %828 : vector<2x32xf32>
    %832 = arith.addf %830, %831 : vector<2x32xf32>
    %833 = math.tanh %832 : vector<2x32xf32>
    %834 = arith.mulf %829, %833 : vector<2x32xf32>
    %835 = vector.extract_strided_slice %769 {offsets = [6, 0], sizes = [2, 128], strides = [1, 1]} : vector<16x128xf32> to vector<2x128xf32>
    %cst_266 = arith.constant dense<0.000000e+00> : vector<2x128xf32>
    %836 = tpu.matmul %834, %763, %cst_266 {dimension_numbers = #tpu.dot_dimension_numbers<[1], [0], [0], [1], [0, 0, 1, 1], [], []>} : vector<2x32xf32>, vector<32x128xf32>, vector<2x128xf32> -> vector<2x128xf32>
    %837 = arith.addf %835, %836 : vector<2x128xf32>
    %cst_267 = arith.constant 5.000000e-01 : f32
    %838 = vector.broadcast %cst_267 : f32 to vector<2x128xf32>
    %839 = arith.mulf %838, %837 : vector<2x128xf32>
    %840 = arith.select %7, %837, %839 : vector<2x128xi1>, vector<2x128xf32>
    %841 = math.tanh %840 : vector<2x128xf32>
    %cst_268 = arith.constant 5.000000e-01 : f32
    %842 = vector.broadcast %cst_268 : f32 to vector<2x128xf32>
    %843 = arith.mulf %842, %841 : vector<2x128xf32>
    %cst_269 = arith.constant 5.000000e-01 : f32
    %844 = vector.broadcast %cst_269 : f32 to vector<2x128xf32>
    %845 = arith.addf %843, %844 : vector<2x128xf32>
    %846 = arith.select %7, %841, %845 : vector<2x128xi1>, vector<2x128xf32>
    %847 = vector.extract_strided_slice %846 {offsets = [0, 0], sizes = [2, 32], strides = [1, 1]} : vector<2x128xf32> to vector<2x32xf32>
    %848 = vector.extract_strided_slice %846 {offsets = [0, 32], sizes = [2, 32], strides = [1, 1]} : vector<2x128xf32> to vector<2x32xf32>
    %849 = vector.extract_strided_slice %846 {offsets = [0, 64], sizes = [2, 32], strides = [1, 1]} : vector<2x128xf32> to vector<2x32xf32>
    %850 = vector.extract_strided_slice %846 {offsets = [0, 96], sizes = [2, 32], strides = [1, 1]} : vector<2x128xf32> to vector<2x32xf32>
    %851 = arith.mulf %848, %832 : vector<2x32xf32>
    %852 = arith.mulf %847, %849 : vector<2x32xf32>
    %853 = arith.addf %851, %852 : vector<2x32xf32>
    %854 = math.tanh %853 : vector<2x32xf32>
    %855 = arith.mulf %850, %854 : vector<2x32xf32>
    %856 = vector.extract_strided_slice %769 {offsets = [8, 0], sizes = [2, 128], strides = [1, 1]} : vector<16x128xf32> to vector<2x128xf32>
    %cst_270 = arith.constant dense<0.000000e+00> : vector<2x128xf32>
    %857 = tpu.matmul %855, %763, %cst_270 {dimension_numbers = #tpu.dot_dimension_numbers<[1], [0], [0], [1], [0, 0, 1, 1], [], []>} : vector<2x32xf32>, vector<32x128xf32>, vector<2x128xf32> -> vector<2x128xf32>
    %858 = arith.addf %856, %857 : vector<2x128xf32>
    %cst_271 = arith.constant 5.000000e-01 : f32
    %859 = vector.broadcast %cst_271 : f32 to vector<2x128xf32>
    %860 = arith.mulf %859, %858 : vector<2x128xf32>
    %861 = arith.select %7, %858, %860 : vector<2x128xi1>, vector<2x128xf32>
    %862 = math.tanh %861 : vector<2x128xf32>
    %cst_272 = arith.constant 5.000000e-01 : f32
    %863 = vector.broadcast %cst_272 : f32 to vector<2x128xf32>
    %864 = arith.mulf %863, %862 : vector<2x128xf32>
    %cst_273 = arith.constant 5.000000e-01 : f32
    %865 = vector.broadcast %cst_273 : f32 to vector<2x128xf32>
    %866 = arith.addf %864, %865 : vector<2x128xf32>
    %867 = arith.select %7, %862, %866 : vector<2x128xi1>, vector<2x128xf32>
    %868 = vector.extract_strided_slice %867 {offsets = [0, 0], sizes = [2, 32], strides = [1, 1]} : vector<2x128xf32> to vector<2x32xf32>
    %869 = vector.extract_strided_slice %867 {offsets = [0, 32], sizes = [2, 32], strides = [1, 1]} : vector<2x128xf32> to vector<2x32xf32>
    %870 = vector.extract_strided_slice %867 {offsets = [0, 64], sizes = [2, 32], strides = [1, 1]} : vector<2x128xf32> to vector<2x32xf32>
    %871 = vector.extract_strided_slice %867 {offsets = [0, 96], sizes = [2, 32], strides = [1, 1]} : vector<2x128xf32> to vector<2x32xf32>
    %872 = arith.mulf %869, %853 : vector<2x32xf32>
    %873 = arith.mulf %868, %870 : vector<2x32xf32>
    %874 = arith.addf %872, %873 : vector<2x32xf32>
    %875 = math.tanh %874 : vector<2x32xf32>
    %876 = arith.mulf %871, %875 : vector<2x32xf32>
    %877 = vector.extract_strided_slice %769 {offsets = [10, 0], sizes = [2, 128], strides = [1, 1]} : vector<16x128xf32> to vector<2x128xf32>
    %cst_274 = arith.constant dense<0.000000e+00> : vector<2x128xf32>
    %878 = tpu.matmul %876, %763, %cst_274 {dimension_numbers = #tpu.dot_dimension_numbers<[1], [0], [0], [1], [0, 0, 1, 1], [], []>} : vector<2x32xf32>, vector<32x128xf32>, vector<2x128xf32> -> vector<2x128xf32>
    %879 = arith.addf %877, %878 : vector<2x128xf32>
    %cst_275 = arith.constant 5.000000e-01 : f32
    %880 = vector.broadcast %cst_275 : f32 to vector<2x128xf32>
    %881 = arith.mulf %880, %879 : vector<2x128xf32>
    %882 = arith.select %7, %879, %881 : vector<2x128xi1>, vector<2x128xf32>
    %883 = math.tanh %882 : vector<2x128xf32>
    %cst_276 = arith.constant 5.000000e-01 : f32
    %884 = vector.broadcast %cst_276 : f32 to vector<2x128xf32>
    %885 = arith.mulf %884, %883 : vector<2x128xf32>
    %cst_277 = arith.constant 5.000000e-01 : f32
    %886 = vector.broadcast %cst_277 : f32 to vector<2x128xf32>
    %887 = arith.addf %885, %886 : vector<2x128xf32>
    %888 = arith.select %7, %883, %887 : vector<2x128xi1>, vector<2x128xf32>
    %889 = vector.extract_strided_slice %888 {offsets = [0, 0], sizes = [2, 32], strides = [1, 1]} : vector<2x128xf32> to vector<2x32xf32>
    %890 = vector.extract_strided_slice %888 {offsets = [0, 32], sizes = [2, 32], strides = [1, 1]} : vector<2x128xf32> to vector<2x32xf32>
    %891 = vector.extract_strided_slice %888 {offsets = [0, 64], sizes = [2, 32], strides = [1, 1]} : vector<2x128xf32> to vector<2x32xf32>
    %892 = vector.extract_strided_slice %888 {offsets = [0, 96], sizes = [2, 32], strides = [1, 1]} : vector<2x128xf32> to vector<2x32xf32>
    %893 = arith.mulf %890, %874 : vector<2x32xf32>
    %894 = arith.mulf %889, %891 : vector<2x32xf32>
    %895 = arith.addf %893, %894 : vector<2x32xf32>
    %896 = math.tanh %895 : vector<2x32xf32>
    %897 = arith.mulf %892, %896 : vector<2x32xf32>
    %898 = vector.extract_strided_slice %769 {offsets = [12, 0], sizes = [2, 128], strides = [1, 1]} : vector<16x128xf32> to vector<2x128xf32>
    %cst_278 = arith.constant dense<0.000000e+00> : vector<2x128xf32>
    %899 = tpu.matmul %897, %763, %cst_278 {dimension_numbers = #tpu.dot_dimension_numbers<[1], [0], [0], [1], [0, 0, 1, 1], [], []>} : vector<2x32xf32>, vector<32x128xf32>, vector<2x128xf32> -> vector<2x128xf32>
    %900 = arith.addf %898, %899 : vector<2x128xf32>
    %cst_279 = arith.constant 5.000000e-01 : f32
    %901 = vector.broadcast %cst_279 : f32 to vector<2x128xf32>
    %902 = arith.mulf %901, %900 : vector<2x128xf32>
    %903 = arith.select %7, %900, %902 : vector<2x128xi1>, vector<2x128xf32>
    %904 = math.tanh %903 : vector<2x128xf32>
    %cst_280 = arith.constant 5.000000e-01 : f32
    %905 = vector.broadcast %cst_280 : f32 to vector<2x128xf32>
    %906 = arith.mulf %905, %904 : vector<2x128xf32>
    %cst_281 = arith.constant 5.000000e-01 : f32
    %907 = vector.broadcast %cst_281 : f32 to vector<2x128xf32>
    %908 = arith.addf %906, %907 : vector<2x128xf32>
    %909 = arith.select %7, %904, %908 : vector<2x128xi1>, vector<2x128xf32>
    %910 = vector.extract_strided_slice %909 {offsets = [0, 0], sizes = [2, 32], strides = [1, 1]} : vector<2x128xf32> to vector<2x32xf32>
    %911 = vector.extract_strided_slice %909 {offsets = [0, 32], sizes = [2, 32], strides = [1, 1]} : vector<2x128xf32> to vector<2x32xf32>
    %912 = vector.extract_strided_slice %909 {offsets = [0, 64], sizes = [2, 32], strides = [1, 1]} : vector<2x128xf32> to vector<2x32xf32>
    %913 = vector.extract_strided_slice %909 {offsets = [0, 96], sizes = [2, 32], strides = [1, 1]} : vector<2x128xf32> to vector<2x32xf32>
    %914 = arith.mulf %911, %895 : vector<2x32xf32>
    %915 = arith.mulf %910, %912 : vector<2x32xf32>
    %916 = arith.addf %914, %915 : vector<2x32xf32>
    %917 = math.tanh %916 : vector<2x32xf32>
    %918 = arith.mulf %913, %917 : vector<2x32xf32>
    %919 = vector.extract_strided_slice %769 {offsets = [14, 0], sizes = [2, 128], strides = [1, 1]} : vector<16x128xf32> to vector<2x128xf32>
    %cst_282 = arith.constant dense<0.000000e+00> : vector<2x128xf32>
    %920 = tpu.matmul %918, %763, %cst_282 {dimension_numbers = #tpu.dot_dimension_numbers<[1], [0], [0], [1], [0, 0, 1, 1], [], []>} : vector<2x32xf32>, vector<32x128xf32>, vector<2x128xf32> -> vector<2x128xf32>
    %921 = arith.addf %919, %920 : vector<2x128xf32>
    %cst_283 = arith.constant 5.000000e-01 : f32
    %922 = vector.broadcast %cst_283 : f32 to vector<2x128xf32>
    %923 = arith.mulf %922, %921 : vector<2x128xf32>
    %924 = arith.select %7, %921, %923 : vector<2x128xi1>, vector<2x128xf32>
    %925 = math.tanh %924 : vector<2x128xf32>
    %cst_284 = arith.constant 5.000000e-01 : f32
    %926 = vector.broadcast %cst_284 : f32 to vector<2x128xf32>
    %927 = arith.mulf %926, %925 : vector<2x128xf32>
    %cst_285 = arith.constant 5.000000e-01 : f32
    %928 = vector.broadcast %cst_285 : f32 to vector<2x128xf32>
    %929 = arith.addf %927, %928 : vector<2x128xf32>
    %930 = arith.select %7, %925, %929 : vector<2x128xi1>, vector<2x128xf32>
    %931 = vector.extract_strided_slice %930 {offsets = [0, 0], sizes = [2, 32], strides = [1, 1]} : vector<2x128xf32> to vector<2x32xf32>
    %932 = vector.extract_strided_slice %930 {offsets = [0, 32], sizes = [2, 32], strides = [1, 1]} : vector<2x128xf32> to vector<2x32xf32>
    %933 = vector.extract_strided_slice %930 {offsets = [0, 64], sizes = [2, 32], strides = [1, 1]} : vector<2x128xf32> to vector<2x32xf32>
    %934 = vector.extract_strided_slice %930 {offsets = [0, 96], sizes = [2, 32], strides = [1, 1]} : vector<2x128xf32> to vector<2x32xf32>
    %935 = arith.mulf %932, %916 : vector<2x32xf32>
    %936 = arith.mulf %931, %933 : vector<2x32xf32>
    %937 = arith.addf %935, %936 : vector<2x32xf32>
    %938 = math.tanh %937 : vector<2x32xf32>
    %939 = arith.mulf %934, %938 : vector<2x32xf32>
    %c0_286 = arith.constant 0 : index
    %c0_287 = arith.constant 0 : index
    %940 = vector.load %arg4[%c0_286, %c0_287] : memref<32x4xf32, #tpu.memory_space<vmem>>, vector<32x4xf32>
    %cst_288 = arith.constant dense<0.000000e+00> : vector<2x4xf32>
    %941 = tpu.matmul %939, %940, %cst_288 {dimension_numbers = #tpu.dot_dimension_numbers<[1], [0], [0], [1], [0, 0, 1, 1], [], []>} : vector<2x32xf32>, vector<32x4xf32>, vector<2x4xf32> -> vector<2x4xf32>
    %c0_289 = arith.constant 0 : index
    %c0_290 = arith.constant 0 : index
    %942 = vector.load %arg5[%c0_289, %c0_290] : memref<1x4xf32, #tpu.memory_space<vmem>>, vector<1x4xf32>
    %943 = vector.broadcast %942 : vector<1x4xf32> to vector<2x4xf32>
    %944 = arith.addf %941, %943 : vector<2x4xf32>
    %c0_291 = arith.constant 0 : index
    %c0_292 = arith.constant 0 : index
    %945 = vector.load %arg6[%c0_291, %c0_292] : memref<2x4xf32, #tpu.memory_space<vmem>>, vector<2x4xf32>
    tpu.vector_store %arg6[%c0_291, %c0_292], %944 {strides = array<i32>} : memref<2x4xf32, #tpu.memory_space<vmem>>, vector<2x4xf32>,
    return
  }
}

</mosaic_0001>

<llo_original>
// kernel: lstm_model_forward.1
$region0: #{lstm_model_forward.1}
  #allocation0 [shape = 'u32[]', space=smem, size = 0x4, offset = 0x4, fixed_abs, tag = 'smem constant byte address 0x4 - core index']
  #allocation1 [shape = 'u32[144,128]{1,0:T(1,128)}', space=vmem, size = 0x12000, scoped, tag = 'internal scratch']
  #allocation2 [shape = 'f32[16,32]{1,0:T(8,128)}', space=vmem, size = 0x2000, scoped, tag = 'scratch operand']
  %s0 = inlined_call_operand.vmem [shape: f32[16,32], index: 0, kind: input, shape index: {}]
  %s1 = inlined_call_operand.hbm [shape: f32[5,32,128], index: 1, kind: input, shape index: {}]
  %s2 = inlined_call_operand.hbm [shape: f32[5,32,128], index: 2, kind: input, shape index: {}]
  %s3 = inlined_call_operand.vmem [shape: f32[5,1,128], index: 3, kind: input, shape index: {}]
  %s4 = inlined_call_operand.vmem [shape: f32[32,4], index: 4, kind: input, shape index: {}]
  %s5 = inlined_call_operand.vmem [shape: f32[1,4], index: 5, kind: input, shape index: {}]
  %s6 = inlined_call_operand.hbm [shape: f32[2,4], index: 6, kind: output, shape index: {}]
  %s7 = sld [smem:[#allocation0]]
  $region42: #{lstm_model_forward.1} parent=0
    _
  %s9 = ssub.s32 1, %s7
  %s10 = scalar_select 0, %s9, %s7
  $region1: #{lstm_model_forward.1} parent=0
    #allocation3 [shape = 'u8[81920]{0}', space=vmem, size = 0x14000, scoped, tag = 'input window, operand 1, single buffered']
    #allocation4 [shape = 's32[1]{0}', space=sflag, size = 0x4, scoped, tag = 'scoped memory for lstm_model_forward.1']
    #allocation5 [shape = 's32[1]{0}', space=sflag, size = 0x4, scoped, tag = 'scoped memory for lstm_model_forward.1']
    #allocation6 [shape = 'u8[81920]{0}', space=vmem, size = 0x14000, scoped, tag = 'input window, operand 2, single buffered']
    #allocation7 [shape = 's32[1]{0}', space=sflag, size = 0x4, scoped, tag = 'scoped memory for lstm_model_forward.1']
    #allocation8 [shape = 'u8[1024]{0}', space=vmem, size = 0x400, scoped, tag = 'output window, operand 0, single buffered']
    %11 = vsyncpa [#allocation4], 0
    %12 = vsyncpa [#allocation7], 0
    %13 = vsyncpa [#allocation5], 0
    // Predicated region
    $region2: #{lstm_model_forward.1} parent=1 // pred_check
      _
    $region3: #{lstm_model_forward.1} parent=1 // pred_check_branch
      %15 = sbr.rel (0) target = $region5
    $region4: #{lstm_model_forward.1} parent=1 // pred_region
      _
    $region5: #{lstm_model_forward.1} parent=1 // pred_fallthru
      _
    // Predicated region
    $region6: #{lstm_model_forward.1} parent=1 // pred_check
      _
    $region7: #{lstm_model_forward.1} parent=1 // pred_check_branch
      %17 = sbr.rel (0) target = $region9
    $region8: #{lstm_model_forward.1} parent=1 // pred_region
      %s19 = ssub.s32 2560, 2560
      %20 = vsyncadd [#allocation4], %s19
      %s21 = sshll.u32 [#allocation3], 4
      %s22 = int_to_ptr.vmem [resolvable:$true] %s21
      %27 = dma.hbm_to_vmem [thread:$0]  %s1, 2560, %s22, [#allocation4], 128, 128, 8
    $region9: #{lstm_model_forward.1} parent=1 // pred_fallthru
      _
    // Predicated region
    $region10: #{lstm_model_forward.1} parent=1 // pred_check
      _
    $region11: #{lstm_model_forward.1} parent=1 // pred_check_branch
      %29 = sbr.rel (0) target = $region13
    $region12: #{lstm_model_forward.1} parent=1 // pred_region
      %s31 = ssub.s32 2560, 2560
      %32 = vsyncadd [#allocation7], %s31
      %s33 = sshll.u32 [#allocation6], 4
      %s34 = int_to_ptr.vmem [resolvable:$true] %s33
      %39 = dma.hbm_to_vmem [thread:$0]  %s2, 2560, %s34, [#allocation7], 128, 128, 8
    $region13: #{lstm_model_forward.1} parent=1 // pred_fallthru
      _
    // Predicated region
    $region14: #{lstm_model_forward.1} parent=1 // pred_check
      _
    $region15: #{lstm_model_forward.1} parent=1 // pred_check_branch
      %41 = sbr.rel (0) target = $region17
    $region16: #{lstm_model_forward.1} parent=1 // pred_region
      _
    $region17: #{lstm_model_forward.1} parent=1 // pred_fallthru
      _
    // Predicated region
    $region18: #{lstm_model_forward.1} parent=1 // pred_check
      _
    $region19: #{lstm_model_forward.1} parent=1 // pred_check_branch
      %43 = sbr.rel (0) target = $region21
    $region20: #{lstm_model_forward.1} parent=1 // pred_region
      _
    $region21: #{lstm_model_forward.1} parent=1 // pred_fallthru
      _
    // Predicated region
    $region22: #{lstm_model_forward.1} parent=1 // pred_check
      _
    $region23: #{lstm_model_forward.1} parent=1 // pred_check_branch
      %45 = sbr.rel (0) target = $region25
    $region24: #{lstm_model_forward.1} parent=1 // pred_region
      _
    $region25: #{lstm_model_forward.1} parent=1 // pred_fallthru
      _
    // Predicated region
    $region26: #{lstm_model_forward.1} parent=1 // pred_check
      _
    $region27: #{lstm_model_forward.1} parent=1 // pred_check_branch
      %47 = sbr.rel (0) target = $region29
    $region28: #{lstm_model_forward.1} parent=1 // pred_region
      %48 = dma.done [#allocation4], 2560
    $region29: #{lstm_model_forward.1} parent=1 // pred_fallthru
      _
    // Predicated region
    $region30: #{lstm_model_forward.1} parent=1 // pred_check
      _
    $region31: #{lstm_model_forward.1} parent=1 // pred_check_branch
      %50 = sbr.rel (0) target = $region33
    $region32: #{lstm_model_forward.1} parent=1 // pred_region
      %51 = dma.done [#allocation7], 2560
    $region33: #{lstm_model_forward.1} parent=1 // pred_fallthru
      _
    %vm52 = vcmask 261120
    %53 = vst.msk [vmem:[#allocation2] sm:$0xff] %vm52, 0.0
    %54 = vst.msk [vmem:[#allocation2 + $0x8] sm:$0xff] %vm52, 0.0
    %v55 = vlaneseq
    %v56 = vand.u32 %v55, 127
    %vm57 = vcmp.ge.s32.totalorder %v56, 64
    %vm58 = vcmp.lt.s32.totalorder %v56, 96
    %vm59 = vmand %vm57, %vm58
    %v60 = vld [vmem:[#allocation3] sm:$0xff]
    %v61 = vld [vmem:[#allocation3 + $0x8] sm:$0xff]
    %v62 = vld [vmem:[#allocation3 + $0x10] sm:$0xff]
    %v63 = vld [vmem:[#allocation3 + $0x18] sm:$0xff]
    %v64 = vld [vmem:[#allocation6] sm:$0xff]
    %v65 = vld [vmem:[#allocation6 + $0x8] sm:$0xff]
    %v66 = vld [vmem:[#allocation6 + $0x10] sm:$0xff]
    %v67 = vld [vmem:[#allocation6 + $0x18] sm:$0xff]
    %v68 = vld [vmem:[%s3] sm:$0x1]
    %v69 = vld [vmem:[%s0] sm:$0xff]
    %v70 = vld [vmem:[%s0 + $0x8] sm:$0xff]
    %v72 = vlaneseq
    %v73 = vshrl.u32 %v72, 7
    %v74 = vsub.s32 0, %v73
    %v75 = vrot.slane %v68, %v74
    %v78 = vsel %vm52, %v69, 0
    %v81 = vsel %vm52, %v70, 0
    %83 = vmatprep.subr.mxu0 0.0
    %84 = vmatpush1.msra.mxu0 0.0
    %85 = vmatprep.subr.mxu0 0.0
    %86 = vmatpush1.msra.mxu0 0.0
    %87 = vmatprep.subr.mxu0 0.0
    %88 = vmatpush1.msra.mxu0 0.0
    %89 = vmatprep.subr.mxu0 0.0
    %90 = vmatpush1.msra.mxu0 0.0
    %91 = vmatprep.subr.mxu0 0.0
    %92 = vmatpush1.msra.mxu0 0.0
    %93 = vmatprep.subr.mxu0 0.0
    %94 = vmatpush1.msra.mxu0 0.0
    %95 = vmatprep.subr.mxu0 0.0
    %96 = vmatpush1.msra.mxu0 0.0
    %97 = vmatprep.subr.mxu0 0.0
    %98 = vmatpush1.msra.mxu0 0.0
    %99 = vmatprep.subr.mxu0 0.0
    %100 = vmatpush1.msra.mxu0 0.0
    %101 = vmatprep.subr.mxu0 0.0
    %102 = vmatpush1.msra.mxu0 0.0
    %103 = vmatprep.subr.mxu0 0.0
    %104 = vmatpush1.msra.mxu0 0.0
    %105 = vmatprep.subr.mxu0 0.0
    %106 = vmatpush1.msra.mxu0 0.0
    %107 = vmatprep.subr.mxu0 0.0
    %108 = vmatpush1.msra.mxu0 %v63
    %109 = vmatprep.subr.mxu0 0.0
    %110 = vmatpush1.msra.mxu0 %v62
    %111 = vmatprep.subr.mxu0 0.0
    %112 = vmatpush1.msra.mxu0 %v61
    %113 = vmatprep.subr.mxu0 0.0
    %114 = vmatpush1.msra.mxu0 %v60
    %115 = vmatprep.subr.mxu0 0.0
    %116 = vmatpush2.msra.mxu0 0.0
    %117 = vmatprep.subr.mxu0 0.0
    %118 = vmatpush2.msra.mxu0 0.0
    %119 = vmatprep.subr.mxu0 0.0
    %120 = vmatpush2.msra.mxu0 0.0
    %121 = vmatprep.subr.mxu0 0.0
    %122 = vmatpush2.msra.mxu0 0.0
    %123 = vmatprep.subr.mxu0 0.0
    %124 = vmatpush2.msra.mxu0 0.0
    %125 = vmatprep.subr.mxu0 0.0
    %126 = vmatpush2.msra.mxu0 0.0
    %127 = vmatprep.subr.mxu0 0.0
    %128 = vmatpush2.msra.mxu0 0.0
    %129 = vmatprep.subr.mxu0 0.0
    %130 = vmatpush2.msra.mxu0 0.0
    %131 = vmatprep.subr.mxu0 0.0
    %132 = vmatpush2.msra.mxu0 0.0
    %133 = vmatprep.subr.mxu0 0.0
    %134 = vmatpush2.msra.mxu0 0.0
    %135 = vmatprep.subr.mxu0 0.0
    %136 = vmatpush2.msra.mxu0 0.0
    %137 = vmatprep.subr.mxu0 0.0
    %138 = vmatpush2.msra.mxu0 0.0
    %139 = vmatprep.subr.mxu0 0.0
    %140 = vmatpush2.msra.mxu0 0.0
    %141 = vmatprep.subr.mxu0 0.0
    %142 = vmatpush2.msra.mxu0 0.0
    %143 = vmatprep.subr.mxu0 0.0
    %144 = vmatpush2.msra.mxu0 0.0
    %145 = vmatprep.subr.mxu0 0.0
    %146 = vmatpush2.msra.mxu0 0.0
    %147 = vmatprep.mubr.f32.mxu0 0.0
    %148 = vmatmul.mubr.f32.gmra.mxu0 %v78
    %v149 = vpop.f32.mrf.mxu0
    %v150 = vadd.f32 %v75, %v149
    %v151 = vpop.f32.mrf.mxu0
    %152 = vmatprep.mubr.f32.mxu0 0.0
    %153 = vmatmul.mubr.f32.gmra.mxu0 %v81
    %v154 = vpop.f32.mrf.mxu0
    %v155 = vadd.f32 %v75, %v154
    %v156 = vpop.f32.mrf.mxu0
    %157 = vdwg.mxu0
    %v159 = vsel %vm52, 0.0, 0
    %161 = vmatprep.subr.mxu0 0.0
    %162 = vmatpush1.msra.mxu0 0.0
    %163 = vmatprep.subr.mxu0 0.0
    %164 = vmatpush1.msra.mxu0 0.0
    %165 = vmatprep.subr.mxu0 0.0
    %166 = vmatpush1.msra.mxu0 0.0
    %167 = vmatprep.subr.mxu0 0.0
    %168 = vmatpush1.msra.mxu0 0.0
    %169 = vmatprep.subr.mxu0 0.0
    %170 = vmatpush1.msra.mxu0 0.0
    %171 = vmatprep.subr.mxu0 0.0
    %172 = vmatpush1.msra.mxu0 0.0
    %173 = vmatprep.subr.mxu0 0.0
    %174 = vmatpush1.msra.mxu0 0.0
    %175 = vmatprep.subr.mxu0 0.0
    %176 = vmatpush1.msra.mxu0 0.0
    %177 = vmatprep.subr.mxu0 0.0
    %178 = vmatpush1.msra.mxu0 0.0
    %179 = vmatprep.subr.mxu0 0.0
    %180 = vmatpush1.msra.mxu0 0.0
    %181 = vmatprep.subr.mxu0 0.0
    %182 = vmatpush1.msra.mxu0 0.0
    %183 = vmatprep.subr.mxu0 0.0
    %184 = vmatpush1.msra.mxu0 0.0
    %185 = vmatprep.subr.mxu0 0.0
    %186 = vmatpush1.msra.mxu0 %v67
    %187 = vmatprep.subr.mxu0 0.0
    %188 = vmatpush1.msra.mxu0 %v66
    %189 = vmatprep.subr.mxu0 0.0
    %190 = vmatpush1.msra.mxu0 %v65
    %191 = vmatprep.subr.mxu0 0.0
    %192 = vmatpush1.msra.mxu0 %v64
    %193 = vmatprep.subr.mxu0 0.0
    %194 = vmatpush2.msra.mxu0 0.0
    %195 = vmatprep.subr.mxu0 0.0
    %196 = vmatpush2.msra.mxu0 0.0
    %197 = vmatprep.subr.mxu0 0.0
    %198 = vmatpush2.msra.mxu0 0.0
    %199 = vmatprep.subr.mxu0 0.0
    %200 = vmatpush2.msra.mxu0 0.0
    %201 = vmatprep.subr.mxu0 0.0
    %202 = vmatpush2.msra.mxu0 0.0
    %203 = vmatprep.subr.mxu0 0.0
    %204 = vmatpush2.msra.mxu0 0.0
    %205 = vmatprep.subr.mxu0 0.0
    %206 = vmatpush2.msra.mxu0 0.0
    %207 = vmatprep.subr.mxu0 0.0
    %208 = vmatpush2.msra.mxu0 0.0
    %209 = vmatprep.subr.mxu0 0.0
    %210 = vmatpush2.msra.mxu0 0.0
    %211 = vmatprep.subr.mxu0 0.0
    %212 = vmatpush2.msra.mxu0 0.0
    %213 = vmatprep.subr.mxu0 0.0
    %214 = vmatpush2.msra.mxu0 0.0
    %215 = vmatprep.subr.mxu0 0.0
    %216 = vmatpush2.msra.mxu0 0.0
    %217 = vmatprep.subr.mxu0 0.0
    %218 = vmatpush2.msra.mxu0 0.0
    %219 = vmatprep.subr.mxu0 0.0
    %220 = vmatpush2.msra.mxu0 0.0
    %221 = vmatprep.subr.mxu0 0.0
    %222 = vmatpush2.msra.mxu0 0.0
    %223 = vmatprep.subr.mxu0 0.0
    %224 = vmatpush2.msra.mxu0 0.0
    %225 = vmatprep.mubr.f32.mxu0 0.0
    %226 = vmatmul.mubr.f32.gmra.mxu0 %v159
    %v227 = vpop.f32.mrf.mxu0
    %v228 = vadd.f32 0.0, %v227
    %v229 = vpop.f32.mrf.mxu0
    %230 = vdwg.mxu0
    %v231 = vadd.f32 %v150, %v228
    %v232 = vmul.f32 %v231, 0.5
    %v233 = vsel %vm59, %v231, %v232
    %v234 = vtanh.pop %v233
    %v235 = vmul.f32 %v234, 0.5
    %v236 = vadd.f32 %v235, 0.5
    %v237 = vsel %vm59, %v234, %v236
    %v238 = vmul.f32 %v237, 0.0
    %240 = vrot.lane.b32.xlu0 %v237, 64
    %v241 = vpop.permute.xlu0 %240
    %v243 = vmul.f32 %v237, %v241
    %245 = vrot.lane.b32.xlu0 %v243, 32
    %v246 = vpop.permute.xlu0 %245
    %v248 = vadd.f32 %v238, %v246
    %v249 = vtanh.pop %v248
    %251 = vrot.lane.b32.xlu0 %v249, 64
    %v252 = vpop.permute.xlu0 %251
    %v254 = vmul.f32 %v237, %v252
    %256 = vrot.lane.b32.xlu0 %v254, 32
    %v257 = vpop.permute.xlu0 %256
    %vm259 = vcmask 254976
    %260 = vst.msk [vmem:[#allocation2] sm:$0x3] %vm259, %v257
    %v261 = vsel %vm52, %v257, 0
    %263 = vmatprep.subr.mxu0 0.0
    %264 = vmatpush1.msra.mxu0 0.0
    %265 = vmatprep.subr.mxu0 0.0
    %266 = vmatpush1.msra.mxu0 0.0
    %267 = vmatprep.subr.mxu0 0.0
    %268 = vmatpush1.msra.mxu0 0.0
    %269 = vmatprep.subr.mxu0 0.0
    %270 = vmatpush1.msra.mxu0 0.0
    %271 = vmatprep.subr.mxu0 0.0
    %272 = vmatpush1.msra.mxu0 0.0
    %273 = vmatprep.subr.mxu0 0.0
    %274 = vmatpush1.msra.mxu0 0.0
    %275 = vmatprep.subr.mxu0 0.0
    %276 = vmatpush1.msra.mxu0 0.0
    %277 = vmatprep.subr.mxu0 0.0
    %278 = vmatpush1.msra.mxu0 0.0
    %279 = vmatprep.subr.mxu0 0.0
    %280 = vmatpush1.msra.mxu0 0.0
    %281 = vmatprep.subr.mxu0 0.0
    %282 = vmatpush1.msra.mxu0 0.0
    %283 = vmatprep.subr.mxu0 0.0
    %284 = vmatpush1.msra.mxu0 0.0
    %285 = vmatprep.subr.mxu0 0.0
    %286 = vmatpush1.msra.mxu0 0.0
    %287 = vmatprep.subr.mxu0 0.0
    %288 = vmatpush1.msra.mxu0 %v67
    %289 = vmatprep.subr.mxu0 0.0
    %290 = vmatpush1.msra.mxu0 %v66
    %291 = vmatprep.subr.mxu0 0.0
    %292 = vmatpush1.msra.mxu0 %v65
    %293 = vmatprep.subr.mxu0 0.0
    %294 = vmatpush1.msra.mxu0 %v64
    %295 = vmatprep.subr.mxu0 0.0
    %296 = vmatpush2.msra.mxu0 0.0
    %297 = vmatprep.subr.mxu0 0.0
    %298 = vmatpush2.msra.mxu0 0.0
    %299 = vmatprep.subr.mxu0 0.0
    %300 = vmatpush2.msra.mxu0 0.0
    %301 = vmatprep.subr.mxu0 0.0
    %302 = vmatpush2.msra.mxu0 0.0
    %303 = vmatprep.subr.mxu0 0.0
    %304 = vmatpush2.msra.mxu0 0.0
    %305 = vmatprep.subr.mxu0 0.0
    %306 = vmatpush2.msra.mxu0 0.0
    %307 = vmatprep.subr.mxu0 0.0
    %308 = vmatpush2.msra.mxu0 0.0
    %309 = vmatprep.subr.mxu0 0.0
    %310 = vmatpush2.msra.mxu0 0.0
    %311 = vmatprep.subr.mxu0 0.0
    %312 = vmatpush2.msra.mxu0 0.0
    %313 = vmatprep.subr.mxu0 0.0
    %314 = vmatpush2.msra.mxu0 0.0
    %315 = vmatprep.subr.mxu0 0.0
    %316 = vmatpush2.msra.mxu0 0.0
    %317 = vmatprep.subr.mxu0 0.0
    %318 = vmatpush2.msra.mxu0 0.0
    %319 = vmatprep.subr.mxu0 0.0
    %320 = vmatpush2.msra.mxu0 0.0
    %321 = vmatprep.subr.mxu0 0.0
    %322 = vmatpush2.msra.mxu0 0.0
    %323 = vmatprep.subr.mxu0 0.0
    %324 = vmatpush2.msra.mxu0 0.0
    %325 = vmatprep.subr.mxu0 0.0
    %326 = vmatpush2.msra.mxu0 0.0
    %327 = vmatprep.mubr.f32.mxu0 0.0
    %328 = vmatmul.mubr.f32.gmra.mxu0 %v261
    %v329 = vpop.f32.mrf.mxu0
    %v330 = vadd.f32 0.0, %v329
    %v331 = vpop.f32.mrf.mxu0
    %332 = vdwg.mxu0
    %v334 = vrot.slane %v330, 6
    %v336 = vadd.f32 %v150, %v334
    %v337 = vmul.f32 %v336, 0.5
    %v338 = vsel %vm59, %v336, %v337
    %v339 = vtanh.pop %v338
    %v340 = vmul.f32 %v339, 0.5
    %v341 = vadd.f32 %v340, 0.5
    %v342 = vsel %vm59, %v339, %v341
    %v344 = vrot.slane %v248, 6
    %v346 = vmul.f32 %v342, %v344
    %348 = vrot.lane.b32.xlu0 %v342, 64
    %v349 = vpop.permute.xlu0 %348
    %v351 = vmul.f32 %v342, %v349
    %353 = vrot.lane.b32.xlu0 %v351, 32
    %v354 = vpop.permute.xlu0 %353
    %v356 = vadd.f32 %v346, %v354
    %v357 = vtanh.pop %v356
    %359 = vrot.lane.b32.xlu0 %v357, 64
    %v360 = vpop.permute.xlu0 %359
    %v362 = vmul.f32 %v342, %v360
    %364 = vrot.lane.b32.xlu0 %v362, 32
    %v365 = vpop.permute.xlu0 %364
    %vm367 = vcmask 257026
    %368 = vst.msk [vmem:[#allocation2] sm:$0xc] %vm367, %v365
    %v369 = vrot.slane %v362, 2
    %370 = vrot.lane.b32.xlu0 %v369, 32
    %v371 = vpop.permute.xlu0 %370
    %v372 = vsel %vm52, %v371, 0
    %374 = vmatprep.subr.mxu0 0.0
    %375 = vmatpush1.msra.mxu0 0.0
    %376 = vmatprep.subr.mxu0 0.0
    %377 = vmatpush1.msra.mxu0 0.0
    %378 = vmatprep.subr.mxu0 0.0
    %379 = vmatpush1.msra.mxu0 0.0
    %380 = vmatprep.subr.mxu0 0.0
    %381 = vmatpush1.msra.mxu0 0.0
    %382 = vmatprep.subr.mxu0 0.0
    %383 = vmatpush1.msra.mxu0 0.0
    %384 = vmatprep.subr.mxu0 0.0
    %385 = vmatpush1.msra.mxu0 0.0
    %386 = vmatprep.subr.mxu0 0.0
    %387 = vmatpush1.msra.mxu0 0.0
    %388 = vmatprep.subr.mxu0 0.0
    %389 = vmatpush1.msra.mxu0 0.0
    %390 = vmatprep.subr.mxu0 0.0
    %391 = vmatpush1.msra.mxu0 0.0
    %392 = vmatprep.subr.mxu0 0.0
    %393 = vmatpush1.msra.mxu0 0.0
    %394 = vmatprep.subr.mxu0 0.0
    %395 = vmatpush1.msra.mxu0 0.0
    %396 = vmatprep.subr.mxu0 0.0
    %397 = vmatpush1.msra.mxu0 0.0
    %398 = vmatprep.subr.mxu0 0.0
    %399 = vmatpush1.msra.mxu0 %v67
    %400 = vmatprep.subr.mxu0 0.0
    %401 = vmatpush1.msra.mxu0 %v66
    %402 = vmatprep.subr.mxu0 0.0
    %403 = vmatpush1.msra.mxu0 %v65
    %404 = vmatprep.subr.mxu0 0.0
    %405 = vmatpush1.msra.mxu0 %v64
    %406 = vmatprep.subr.mxu0 0.0
    %407 = vmatpush2.msra.mxu0 0.0
    %408 = vmatprep.subr.mxu0 0.0
    %409 = vmatpush2.msra.mxu0 0.0
    %410 = vmatprep.subr.mxu0 0.0
    %411 = vmatpush2.msra.mxu0 0.0
    %412 = vmatprep.subr.mxu0 0.0
    %413 = vmatpush2.msra.mxu0 0.0
    %414 = vmatprep.subr.mxu0 0.0
    %415 = vmatpush2.msra.mxu0 0.0
    %416 = vmatprep.subr.mxu0 0.0
    %417 = vmatpush2.msra.mxu0 0.0
    %418 = vmatprep.subr.mxu0 0.0
    %419 = vmatpush2.msra.mxu0 0.0
    %420 = vmatprep.subr.mxu0 0.0
    %421 = vmatpush2.msra.mxu0 0.0
    %422 = vmatprep.subr.mxu0 0.0
    %423 = vmatpush2.msra.mxu0 0.0
    %424 = vmatprep.subr.mxu0 0.0
    %425 = vmatpush2.msra.mxu0 0.0
    %426 = vmatprep.subr.mxu0 0.0
    %427 = vmatpush2.msra.mxu0 0.0
    %428 = vmatprep.subr.mxu0 0.0
    %429 = vmatpush2.msra.mxu0 0.0
    %430 = vmatprep.subr.mxu0 0.0
    %431 = vmatpush2.msra.mxu0 0.0
    %432 = vmatprep.subr.mxu0 0.0
    %433 = vmatpush2.msra.mxu0 0.0
    %434 = vmatprep.subr.mxu0 0.0
    %435 = vmatpush2.msra.mxu0 0.0
    %436 = vmatprep.subr.mxu0 0.0
    %437 = vmatpush2.msra.mxu0 0.0
    %438 = vmatprep.mubr.f32.mxu0 0.0
    %439 = vmatmul.mubr.f32.gmra.mxu0 %v372
    %v440 = vpop.f32.mrf.mxu0
    %v441 = vadd.f32 0.0, %v440
    %v442 = vpop.f32.mrf.mxu0
    %443 = vdwg.mxu0
    %v445 = vrot.slane %v441, 4
    %v447 = vadd.f32 %v150, %v445
    %v448 = vmul.f32 %v447, 0.5
    %v449 = vsel %vm59, %v447, %v448
    %v450 = vtanh.pop %v449
    %v451 = vmul.f32 %v450, 0.5
    %v452 = vadd.f32 %v451, 0.5
    %v453 = vsel %vm59, %v450, %v452
    %v455 = vrot.slane %v356, 6
    %v457 = vmul.f32 %v453, %v455
    %459 = vrot.lane.b32.xlu0 %v453, 64
    %v460 = vpop.permute.xlu0 %459
    %v462 = vmul.f32 %v453, %v460
    %464 = vrot.lane.b32.xlu0 %v462, 32
    %v465 = vpop.permute.xlu0 %464
    %v467 = vadd.f32 %v457, %v465
    %v468 = vtanh.pop %v467
    %470 = vrot.lane.b32.xlu0 %v468, 64
    %v471 = vpop.permute.xlu0 %470
    %v473 = vmul.f32 %v453, %v471
    %475 = vrot.lane.b32.xlu0 %v473, 32
    %v476 = vpop.permute.xlu0 %475
    %vm478 = vcmask 259076
    %479 = vst.msk [vmem:[#allocation2] sm:$0x30] %vm478, %v476
    %v480 = vrot.slane %v473, 4
    %481 = vrot.lane.b32.xlu0 %v480, 32
    %v482 = vpop.permute.xlu0 %481
    %v483 = vsel %vm52, %v482, 0
    %485 = vmatprep.subr.mxu0 0.0
    %486 = vmatpush1.msra.mxu0 0.0
    %487 = vmatprep.subr.mxu0 0.0
    %488 = vmatpush1.msra.mxu0 0.0
    %489 = vmatprep.subr.mxu0 0.0
    %490 = vmatpush1.msra.mxu0 0.0
    %491 = vmatprep.subr.mxu0 0.0
    %492 = vmatpush1.msra.mxu0 0.0
    %493 = vmatprep.subr.mxu0 0.0
    %494 = vmatpush1.msra.mxu0 0.0
    %495 = vmatprep.subr.mxu0 0.0
    %496 = vmatpush1.msra.mxu0 0.0
    %497 = vmatprep.subr.mxu0 0.0
    %498 = vmatpush1.msra.mxu0 0.0
    %499 = vmatprep.subr.mxu0 0.0
    %500 = vmatpush1.msra.mxu0 0.0
    %501 = vmatprep.subr.mxu0 0.0
    %502 = vmatpush1.msra.mxu0 0.0
    %503 = vmatprep.subr.mxu0 0.0
    %504 = vmatpush1.msra.mxu0 0.0
    %505 = vmatprep.subr.mxu0 0.0
    %506 = vmatpush1.msra.mxu0 0.0
    %507 = vmatprep.subr.mxu0 0.0
    %508 = vmatpush1.msra.mxu0 0.0
    %509 = vmatprep.subr.mxu0 0.0
    %510 = vmatpush1.msra.mxu0 %v67
    %511 = vmatprep.subr.mxu0 0.0
    %512 = vmatpush1.msra.mxu0 %v66
    %513 = vmatprep.subr.mxu0 0.0
    %514 = vmatpush1.msra.mxu0 %v65
    %515 = vmatprep.subr.mxu0 0.0
    %516 = vmatpush1.msra.mxu0 %v64
    %517 = vmatprep.subr.mxu0 0.0
    %518 = vmatpush2.msra.mxu0 0.0
    %519 = vmatprep.subr.mxu0 0.0
    %520 = vmatpush2.msra.mxu0 0.0
    %521 = vmatprep.subr.mxu0 0.0
    %522 = vmatpush2.msra.mxu0 0.0
    %523 = vmatprep.subr.mxu0 0.0
    %524 = vmatpush2.msra.mxu0 0.0
    %525 = vmatprep.subr.mxu0 0.0
    %526 = vmatpush2.msra.mxu0 0.0
    %527 = vmatprep.subr.mxu0 0.0
    %528 = vmatpush2.msra.mxu0 0.0
    %529 = vmatprep.subr.mxu0 0.0
    %530 = vmatpush2.msra.mxu0 0.0
    %531 = vmatprep.subr.mxu0 0.0
    %532 = vmatpush2.msra.mxu0 0.0
    %533 = vmatprep.subr.mxu0 0.0
    %534 = vmatpush2.msra.mxu0 0.0
    %535 = vmatprep.subr.mxu0 0.0
    %536 = vmatpush2.msra.mxu0 0.0
    %537 = vmatprep.subr.mxu0 0.0
    %538 = vmatpush2.msra.mxu0 0.0
    %539 = vmatprep.subr.mxu0 0.0
    %540 = vmatpush2.msra.mxu0 0.0
    %541 = vmatprep.subr.mxu0 0.0
    %542 = vmatpush2.msra.mxu0 0.0
    %543 = vmatprep.subr.mxu0 0.0
    %544 = vmatpush2.msra.mxu0 0.0
    %545 = vmatprep.subr.mxu0 0.0
    %546 = vmatpush2.msra.mxu0 0.0
    %547 = vmatprep.subr.mxu0 0.0
    %548 = vmatpush2.msra.mxu0 0.0
    %549 = vmatprep.mubr.f32.mxu0 0.0
    %550 = vmatmul.mubr.f32.gmra.mxu0 %v483
    %v551 = vpop.f32.mrf.mxu0
    %v552 = vadd.f32 0.0, %v551
    %v553 = vpop.f32.mrf.mxu0
    %554 = vdwg.mxu0
    %v556 = vrot.slane %v552, 2
    %v558 = vadd.f32 %v150, %v556
    %v559 = vmul.f32 %v558, 0.5
    %v560 = vsel %vm59, %v558, %v559
    %v561 = vtanh.pop %v560
    %v562 = vmul.f32 %v561, 0.5
    %v563 = vadd.f32 %v562, 0.5
    %v564 = vsel %vm59, %v561, %v563
    %v566 = vrot.slane %v467, 6
    %v568 = vmul.f32 %v564, %v566
    %570 = vrot.lane.b32.xlu0 %v564, 64
    %v571 = vpop.permute.xlu0 %570
    %v573 = vmul.f32 %v564, %v571
    %575 = vrot.lane.b32.xlu0 %v573, 32
    %v576 = vpop.permute.xlu0 %575
    %v578 = vadd.f32 %v568, %v576
    %v579 = vtanh.pop %v578
    %581 = vrot.lane.b32.xlu0 %v579, 64
    %v582 = vpop.permute.xlu0 %581
    %v584 = vmul.f32 %v564, %v582
    %586 = vrot.lane.b32.xlu0 %v584, 32
    %v587 = vpop.permute.xlu0 %586
    %vm589 = vcmask 261126
    %590 = vst.msk [vmem:[#allocation2] sm:$0xc0] %vm589, %v587
    %v591 = vrot.slane %v584, 6
    %592 = vrot.lane.b32.xlu0 %v591, 32
    %v593 = vpop.permute.xlu0 %592
    %v594 = vsel %vm52, %v593, 0
    %596 = vmatprep.subr.mxu0 0.0
    %597 = vmatpush1.msra.mxu0 0.0
    %598 = vmatprep.subr.mxu0 0.0
    %599 = vmatpush1.msra.mxu0 0.0
    %600 = vmatprep.subr.mxu0 0.0
    %601 = vmatpush1.msra.mxu0 0.0
    %602 = vmatprep.subr.mxu0 0.0
    %603 = vmatpush1.msra.mxu0 0.0
    %604 = vmatprep.subr.mxu0 0.0
    %605 = vmatpush1.msra.mxu0 0.0
    %606 = vmatprep.subr.mxu0 0.0
    %607 = vmatpush1.msra.mxu0 0.0
    %608 = vmatprep.subr.mxu0 0.0
    %609 = vmatpush1.msra.mxu0 0.0
    %610 = vmatprep.subr.mxu0 0.0
    %611 = vmatpush1.msra.mxu0 0.0
    %612 = vmatprep.subr.mxu0 0.0
    %613 = vmatpush1.msra.mxu0 0.0
    %614 = vmatprep.subr.mxu0 0.0
    %615 = vmatpush1.msra.mxu0 0.0
    %616 = vmatprep.subr.mxu0 0.0
    %617 = vmatpush1.msra.mxu0 0.0
    %618 = vmatprep.subr.mxu0 0.0
    %619 = vmatpush1.msra.mxu0 0.0
    %620 = vmatprep.subr.mxu0 0.0
    %621 = vmatpush1.msra.mxu0 %v67
    %622 = vmatprep.subr.mxu0 0.0
    %623 = vmatpush1.msra.mxu0 %v66
    %624 = vmatprep.subr.mxu0 0.0
    %625 = vmatpush1.msra.mxu0 %v65
    %626 = vmatprep.subr.mxu0 0.0
    %627 = vmatpush1.msra.mxu0 %v64
    %628 = vmatprep.subr.mxu0 0.0
    %629 = vmatpush2.msra.mxu0 0.0
    %630 = vmatprep.subr.mxu0 0.0
    %631 = vmatpush2.msra.mxu0 0.0
    %632 = vmatprep.subr.mxu0 0.0
    %633 = vmatpush2.msra.mxu0 0.0
    %634 = vmatprep.subr.mxu0 0.0
    %635 = vmatpush2.msra.mxu0 0.0
    %636 = vmatprep.subr.mxu0 0.0
    %637 = vmatpush2.msra.mxu0 0.0
    %638 = vmatprep.subr.mxu0 0.0
    %639 = vmatpush2.msra.mxu0 0.0
    %640 = vmatprep.subr.mxu0 0.0
    %641 = vmatpush2.msra.mxu0 0.0
    %642 = vmatprep.subr.mxu0 0.0
    %643 = vmatpush2.msra.mxu0 0.0
    %644 = vmatprep.subr.mxu0 0.0
    %645 = vmatpush2.msra.mxu0 0.0
    %646 = vmatprep.subr.mxu0 0.0
    %647 = vmatpush2.msra.mxu0 0.0
    %648 = vmatprep.subr.mxu0 0.0
    %649 = vmatpush2.msra.mxu0 0.0
    %650 = vmatprep.subr.mxu0 0.0
    %651 = vmatpush2.msra.mxu0 0.0
    %652 = vmatprep.subr.mxu0 0.0
    %653 = vmatpush2.msra.mxu0 0.0
    %654 = vmatprep.subr.mxu0 0.0
    %655 = vmatpush2.msra.mxu0 0.0
    %656 = vmatprep.subr.mxu0 0.0
    %657 = vmatpush2.msra.mxu0 0.0
    %658 = vmatprep.subr.mxu0 0.0
    %659 = vmatpush2.msra.mxu0 0.0
    %660 = vmatprep.mubr.f32.mxu0 0.0
    %661 = vmatmul.mubr.f32.gmra.mxu0 %v594
    %v662 = vpop.f32.mrf.mxu0
    %v663 = vadd.f32 0.0, %v662
    %v664 = vpop.f32.mrf.mxu0
    %665 = vdwg.mxu0
    %v666 = vadd.f32 %v155, %v663
    %v667 = vmul.f32 %v666, 0.5
    %v668 = vsel %vm59, %v666, %v667
    %v669 = vtanh.pop %v668
    %v670 = vmul.f32 %v669, 0.5
    %v671 = vadd.f32 %v670, 0.5
    %v672 = vsel %vm59, %v669, %v671
    %v674 = vrot.slane %v578, 6
    %v676 = vmul.f32 %v672, %v674
    %678 = vrot.lane.b32.xlu0 %v672, 64
    %v679 = vpop.permute.xlu0 %678
    %v681 = vmul.f32 %v672, %v679
    %683 = vrot.lane.b32.xlu0 %v681, 32
    %v684 = vpop.permute.xlu0 %683
    %v686 = vadd.f32 %v676, %v684
    %v687 = vtanh.pop %v686
    %689 = vrot.lane.b32.xlu0 %v687, 64
    %v690 = vpop.permute.xlu0 %689
    %v692 = vmul.f32 %v672, %v690
    %694 = vrot.lane.b32.xlu0 %v692, 32
    %v695 = vpop.permute.xlu0 %694
    %697 = vst.msk [vmem:[#allocation2 + $0x8] sm:$0x3] %vm259, %v695
    %v698 = vsel %vm52, %v695, 0
    %700 = vmatprep.subr.mxu0 0.0
    %701 = vmatpush1.msra.mxu0 0.0
    %702 = vmatprep.subr.mxu0 0.0
    %703 = vmatpush1.msra.mxu0 0.0
    %704 = vmatprep.subr.mxu0 0.0
    %705 = vmatpush1.msra.mxu0 0.0
    %706 = vmatprep.subr.mxu0 0.0
    %707 = vmatpush1.msra.mxu0 0.0
    %708 = vmatprep.subr.mxu0 0.0
    %709 = vmatpush1.msra.mxu0 0.0
    %710 = vmatprep.subr.mxu0 0.0
    %711 = vmatpush1.msra.mxu0 0.0
    %712 = vmatprep.subr.mxu0 0.0
    %713 = vmatpush1.msra.mxu0 0.0
    %714 = vmatprep.subr.mxu0 0.0
    %715 = vmatpush1.msra.mxu0 0.0
    %716 = vmatprep.subr.mxu0 0.0
    %717 = vmatpush1.msra.mxu0 0.0
    %718 = vmatprep.subr.mxu0 0.0
    %719 = vmatpush1.msra.mxu0 0.0
    %720 = vmatprep.subr.mxu0 0.0
    %721 = vmatpush1.msra.mxu0 0.0
    %722 = vmatprep.subr.mxu0 0.0
    %723 = vmatpush1.msra.mxu0 0.0
    %724 = vmatprep.subr.mxu0 0.0
    %725 = vmatpush1.msra.mxu0 %v67
    %726 = vmatprep.subr.mxu0 0.0
    %727 = vmatpush1.msra.mxu0 %v66
    %728 = vmatprep.subr.mxu0 0.0
    %729 = vmatpush1.msra.mxu0 %v65
    %730 = vmatprep.subr.mxu0 0.0
    %731 = vmatpush1.msra.mxu0 %v64
    %732 = vmatprep.subr.mxu0 0.0
    %733 = vmatpush2.msra.mxu0 0.0
    %734 = vmatprep.subr.mxu0 0.0
    %735 = vmatpush2.msra.mxu0 0.0
    %736 = vmatprep.subr.mxu0 0.0
    %737 = vmatpush2.msra.mxu0 0.0
    %738 = vmatprep.subr.mxu0 0.0
    %739 = vmatpush2.msra.mxu0 0.0
    %740 = vmatprep.subr.mxu0 0.0
    %741 = vmatpush2.msra.mxu0 0.0
    %742 = vmatprep.subr.mxu0 0.0
    %743 = vmatpush2.msra.mxu0 0.0
    %744 = vmatprep.subr.mxu0 0.0
    %745 = vmatpush2.msra.mxu0 0.0
    %746 = vmatprep.subr.mxu0 0.0
    %747 = vmatpush2.msra.mxu0 0.0
    %748 = vmatprep.subr.mxu0 0.0
    %749 = vmatpush2.msra.mxu0 0.0
    %750 = vmatprep.subr.mxu0 0.0
    %751 = vmatpush2.msra.mxu0 0.0
    %752 = vmatprep.subr.mxu0 0.0
    %753 = vmatpush2.msra.mxu0 0.0
    %754 = vmatprep.subr.mxu0 0.0
    %755 = vmatpush2.msra.mxu0 0.0
    %756 = vmatprep.subr.mxu0 0.0
    %757 = vmatpush2.msra.mxu0 0.0
    %758 = vmatprep.subr.mxu0 0.0
    %759 = vmatpush2.msra.mxu0 0.0
    %760 = vmatprep.subr.mxu0 0.0
    %761 = vmatpush2.msra.mxu0 0.0
    %762 = vmatprep.subr.mxu0 0.0
    %763 = vmatpush2.msra.mxu0 0.0
    %764 = vmatprep.mubr.f32.mxu0 0.0
    %765 = vmatmul.mubr.f32.gmra.mxu0 %v698
    %v766 = vpop.f32.mrf.mxu0
    %v767 = vadd.f32 0.0, %v766
    %v768 = vpop.f32.mrf.mxu0
    %769 = vdwg.mxu0
    %v771 = vrot.slane %v767, 6
    %v773 = vadd.f32 %v155, %v771
    %v774 = vmul.f32 %v773, 0.5
    %v775 = vsel %vm59, %v773, %v774
    %v776 = vtanh.pop %v775
    %v777 = vmul.f32 %v776, 0.5
    %v778 = vadd.f32 %v777, 0.5
    %v779 = vsel %vm59, %v776, %v778
    %v781 = vrot.slane %v686, 6
    %v783 = vmul.f32 %v779, %v781
    %785 = vrot.lane.b32.xlu0 %v779, 64
    %v786 = vpop.permute.xlu0 %785
    %v788 = vmul.f32 %v779, %v786
    %790 = vrot.lane.b32.xlu0 %v788, 32
    %v791 = vpop.permute.xlu0 %790
    %v793 = vadd.f32 %v783, %v791
    %v794 = vtanh.pop %v793
    %796 = vrot.lane.b32.xlu0 %v794, 64
    %v797 = vpop.permute.xlu0 %796
    %v799 = vmul.f32 %v779, %v797
    %801 = vrot.lane.b32.xlu0 %v799, 32
    %v802 = vpop.permute.xlu0 %801
    %804 = vst.msk [vmem:[#allocation2 + $0x8] sm:$0xc] %vm367, %v802
    %v805 = vrot.slane %v799, 2
    %806 = vrot.lane.b32.xlu0 %v805, 32
    %v807 = vpop.permute.xlu0 %806
    %v808 = vsel %vm52, %v807, 0
    %810 = vmatprep.subr.mxu0 0.0
    %811 = vmatpush1.msra.mxu0 0.0
    %812 = vmatprep.subr.mxu0 0.0
    %813 = vmatpush1.msra.mxu0 0.0
    %814 = vmatprep.subr.mxu0 0.0
    %815 = vmatpush1.msra.mxu0 0.0
    %816 = vmatprep.subr.mxu0 0.0
    %817 = vmatpush1.msra.mxu0 0.0
    %818 = vmatprep.subr.mxu0 0.0
    %819 = vmatpush1.msra.mxu0 0.0
    %820 = vmatprep.subr.mxu0 0.0
    %821 = vmatpush1.msra.mxu0 0.0
    %822 = vmatprep.subr.mxu0 0.0
    %823 = vmatpush1.msra.mxu0 0.0
    %824 = vmatprep.subr.mxu0 0.0
    %825 = vmatpush1.msra.mxu0 0.0
    %826 = vmatprep.subr.mxu0 0.0
    %827 = vmatpush1.msra.mxu0 0.0
    %828 = vmatprep.subr.mxu0 0.0
    %829 = vmatpush1.msra.mxu0 0.0
    %830 = vmatprep.subr.mxu0 0.0
    %831 = vmatpush1.msra.mxu0 0.0
    %832 = vmatprep.subr.mxu0 0.0
    %833 = vmatpush1.msra.mxu0 0.0
    %834 = vmatprep.subr.mxu0 0.0
    %835 = vmatpush1.msra.mxu0 %v67
    %836 = vmatprep.subr.mxu0 0.0
    %837 = vmatpush1.msra.mxu0 %v66
    %838 = vmatprep.subr.mxu0 0.0
    %839 = vmatpush1.msra.mxu0 %v65
    %840 = vmatprep.subr.mxu0 0.0
    %841 = vmatpush1.msra.mxu0 %v64
    %842 = vmatprep.subr.mxu0 0.0
    %843 = vmatpush2.msra.mxu0 0.0
    %844 = vmatprep.subr.mxu0 0.0
    %845 = vmatpush2.msra.mxu0 0.0
    %846 = vmatprep.subr.mxu0 0.0
    %847 = vmatpush2.msra.mxu0 0.0
    %848 = vmatprep.subr.mxu0 0.0
    %849 = vmatpush2.msra.mxu0 0.0
    %850 = vmatprep.subr.mxu0 0.0
    %851 = vmatpush2.msra.mxu0 0.0
    %852 = vmatprep.subr.mxu0 0.0
    %853 = vmatpush2.msra.mxu0 0.0
    %854 = vmatprep.subr.mxu0 0.0
    %855 = vmatpush2.msra.mxu0 0.0
    %856 = vmatprep.subr.mxu0 0.0
    %857 = vmatpush2.msra.mxu0 0.0
    %858 = vmatprep.subr.mxu0 0.0
    %859 = vmatpush2.msra.mxu0 0.0
    %860 = vmatprep.subr.mxu0 0.0
    %861 = vmatpush2.msra.mxu0 0.0
    %862 = vmatprep.subr.mxu0 0.0
    %863 = vmatpush2.msra.mxu0 0.0
    %864 = vmatprep.subr.mxu0 0.0
    %865 = vmatpush2.msra.mxu0 0.0
    %866 = vmatprep.subr.mxu0 0.0
    %867 = vmatpush2.msra.mxu0 0.0
    %868 = vmatprep.subr.mxu0 0.0
    %869 = vmatpush2.msra.mxu0 0.0
    %870 = vmatprep.subr.mxu0 0.0
    %871 = vmatpush2.msra.mxu0 0.0
    %872 = vmatprep.subr.mxu0 0.0
    %873 = vmatpush2.msra.mxu0 0.0
    %874 = vmatprep.mubr.f32.mxu0 0.0
    %875 = vmatmul.mubr.f32.gmra.mxu0 %v808
    %v876 = vpop.f32.mrf.mxu0
    %v877 = vadd.f32 0.0, %v876
    %v878 = vpop.f32.mrf.mxu0
    %879 = vdwg.mxu0
    %v881 = vrot.slane %v877, 4
    %v883 = vadd.f32 %v155, %v881
    %v884 = vmul.f32 %v883, 0.5
    %v885 = vsel %vm59, %v883, %v884
    %v886 = vtanh.pop %v885
    %v887 = vmul.f32 %v886, 0.5
    %v888 = vadd.f32 %v887, 0.5
    %v889 = vsel %vm59, %v886, %v888
    %v891 = vrot.slane %v793, 6
    %v893 = vmul.f32 %v889, %v891
    %895 = vrot.lane.b32.xlu0 %v889, 64
    %v896 = vpop.permute.xlu0 %895
    %v898 = vmul.f32 %v889, %v896
    %900 = vrot.lane.b32.xlu0 %v898, 32
    %v901 = vpop.permute.xlu0 %900
    %v903 = vadd.f32 %v893, %v901
    %v904 = vtanh.pop %v903
    %906 = vrot.lane.b32.xlu0 %v904, 64
    %v907 = vpop.permute.xlu0 %906
    %v909 = vmul.f32 %v889, %v907
    %911 = vrot.lane.b32.xlu0 %v909, 32
    %v912 = vpop.permute.xlu0 %911
    %914 = vst.msk [vmem:[#allocation2 + $0x8] sm:$0x30] %vm478, %v912
    %v915 = vrot.slane %v909, 4
    %916 = vrot.lane.b32.xlu0 %v915, 32
    %v917 = vpop.permute.xlu0 %916
    %v918 = vsel %vm52, %v917, 0
    %920 = vmatprep.subr.mxu0 0.0
    %921 = vmatpush1.msra.mxu0 0.0
    %922 = vmatprep.subr.mxu0 0.0
    %923 = vmatpush1.msra.mxu0 0.0
    %924 = vmatprep.subr.mxu0 0.0
    %925 = vmatpush1.msra.mxu0 0.0
    %926 = vmatprep.subr.mxu0 0.0
    %927 = vmatpush1.msra.mxu0 0.0
    %928 = vmatprep.subr.mxu0 0.0
    %929 = vmatpush1.msra.mxu0 0.0
    %930 = vmatprep.subr.mxu0 0.0
    %931 = vmatpush1.msra.mxu0 0.0
    %932 = vmatprep.subr.mxu0 0.0
    %933 = vmatpush1.msra.mxu0 0.0
    %934 = vmatprep.subr.mxu0 0.0
    %935 = vmatpush1.msra.mxu0 0.0
    %936 = vmatprep.subr.mxu0 0.0
    %937 = vmatpush1.msra.mxu0 0.0
    %938 = vmatprep.subr.mxu0 0.0
    %939 = vmatpush1.msra.mxu0 0.0
    %940 = vmatprep.subr.mxu0 0.0
    %941 = vmatpush1.msra.mxu0 0.0
    %942 = vmatprep.subr.mxu0 0.0
    %943 = vmatpush1.msra.mxu0 0.0
    %944 = vmatprep.subr.mxu0 0.0
    %945 = vmatpush1.msra.mxu0 %v67
    %946 = vmatprep.subr.mxu0 0.0
    %947 = vmatpush1.msra.mxu0 %v66
    %948 = vmatprep.subr.mxu0 0.0
    %949 = vmatpush1.msra.mxu0 %v65
    %950 = vmatprep.subr.mxu0 0.0
    %951 = vmatpush1.msra.mxu0 %v64
    %952 = vmatprep.subr.mxu0 0.0
    %953 = vmatpush2.msra.mxu0 0.0
    %954 = vmatprep.subr.mxu0 0.0
    %955 = vmatpush2.msra.mxu0 0.0
    %956 = vmatprep.subr.mxu0 0.0
    %957 = vmatpush2.msra.mxu0 0.0
    %958 = vmatprep.subr.mxu0 0.0
    %959 = vmatpush2.msra.mxu0 0.0
    %960 = vmatprep.subr.mxu0 0.0
    %961 = vmatpush2.msra.mxu0 0.0
    %962 = vmatprep.subr.mxu0 0.0
    %963 = vmatpush2.msra.mxu0 0.0
    %964 = vmatprep.subr.mxu0 0.0
    %965 = vmatpush2.msra.mxu0 0.0
    %966 = vmatprep.subr.mxu0 0.0
    %967 = vmatpush2.msra.mxu0 0.0
    %968 = vmatprep.subr.mxu0 0.0
    %969 = vmatpush2.msra.mxu0 0.0
    %970 = vmatprep.subr.mxu0 0.0
    %971 = vmatpush2.msra.mxu0 0.0
    %972 = vmatprep.subr.mxu0 0.0
    %973 = vmatpush2.msra.mxu0 0.0
    %974 = vmatprep.subr.mxu0 0.0
    %975 = vmatpush2.msra.mxu0 0.0
    %976 = vmatprep.subr.mxu0 0.0
    %977 = vmatpush2.msra.mxu0 0.0
    %978 = vmatprep.subr.mxu0 0.0
    %979 = vmatpush2.msra.mxu0 0.0
    %980 = vmatprep.subr.mxu0 0.0
    %981 = vmatpush2.msra.mxu0 0.0
    %982 = vmatprep.subr.mxu0 0.0
    %983 = vmatpush2.msra.mxu0 0.0
    %984 = vmatprep.mubr.f32.mxu0 0.0
    %985 = vmatmul.mubr.f32.gmra.mxu0 %v918
    %v986 = vpop.f32.mrf.mxu0
    %v987 = vadd.f32 0.0, %v986
    %v988 = vpop.f32.mrf.mxu0
    %989 = vdwg.mxu0
    %v991 = vrot.slane %v987, 2
    %v993 = vadd.f32 %v155, %v991
    %v994 = vmul.f32 %v993, 0.5
    %v995 = vsel %vm59, %v993, %v994
    %v996 = vtanh.pop %v995
    %v997 = vmul.f32 %v996, 0.5
    %v998 = vadd.f32 %v997, 0.5
    %v999 = vsel %vm59, %v996, %v998
    %v1001 = vrot.slane %v903, 6
    %v1003 = vmul.f32 %v999, %v1001
    %1005 = vrot.lane.b32.xlu0 %v999, 64
    %v1006 = vpop.permute.xlu0 %1005
    %v1008 = vmul.f32 %v999, %v1006
    %1010 = vrot.lane.b32.xlu0 %v1008, 32
    %v1011 = vpop.permute.xlu0 %1010
    %v1013 = vadd.f32 %v1003, %v1011
    %v1014 = vtanh.pop %v1013
    %1016 = vrot.lane.b32.xlu0 %v1014, 64
    %v1017 = vpop.permute.xlu0 %1016
    %v1019 = vmul.f32 %v999, %v1017
    %1021 = vrot.lane.b32.xlu0 %v1019, 32
    %v1022 = vpop.permute.xlu0 %1021
    %1024 = vst.msk [vmem:[#allocation2 + $0x8] sm:$0xc0] %vm589, %v1022
    %s1025 = scalar_lea.vmem [#allocation3], 32
    %v1026 = vld [vmem:[%s1025] sm:$0xff]
    %v1027 = vld [vmem:[%s1025 + $0x8] sm:$0xff]
    %v1028 = vld [vmem:[%s1025 + $0x10] sm:$0xff]
    %v1029 = vld [vmem:[%s1025 + $0x18] sm:$0xff]
    %s1030 = scalar_lea.vmem [#allocation6], 32
    %v1031 = vld [vmem:[%s1030] sm:$0xff]
    %v1032 = vld [vmem:[%s1030 + $0x8] sm:$0xff]
    %v1033 = vld [vmem:[%s1030 + $0x10] sm:$0xff]
    %v1034 = vld [vmem:[%s1030 + $0x18] sm:$0xff]
    %s1035 = scalar_lea.vmem %s3, 1
    %v1036 = vld [vmem:[%s1035] sm:$0x1]
    %v1037 = vld [vmem:[#allocation2] sm:$0xff]
    %v1038 = vld [vmem:[#allocation2 + $0x8] sm:$0xff]
    %v1040 = vlaneseq
    %v1041 = vshrl.u32 %v1040, 7
    %v1042 = vsub.s32 0, %v1041
    %v1043 = vrot.slane %v1036, %v1042
    %v1046 = vsel %vm52, %v1037, 0
    %v1049 = vsel %vm52, %v1038, 0
    %1051 = vmatprep.subr.mxu0 0.0
    %1052 = vmatpush1.msra.mxu0 0.0
    %1053 = vmatprep.subr.mxu0 0.0
    %1054 = vmatpush1.msra.mxu0 0.0
    %1055 = vmatprep.subr.mxu0 0.0
    %1056 = vmatpush1.msra.mxu0 0.0
    %1057 = vmatprep.subr.mxu0 0.0
    %1058 = vmatpush1.msra.mxu0 0.0
    %1059 = vmatprep.subr.mxu0 0.0
    %1060 = vmatpush1.msra.mxu0 0.0
    %1061 = vmatprep.subr.mxu0 0.0
    %1062 = vmatpush1.msra.mxu0 0.0
    %1063 = vmatprep.subr.mxu0 0.0
    %1064 = vmatpush1.msra.mxu0 0.0
    %1065 = vmatprep.subr.mxu0 0.0
    %1066 = vmatpush1.msra.mxu0 0.0
    %1067 = vmatprep.subr.mxu0 0.0
    %1068 = vmatpush1.msra.mxu0 0.0
    %1069 = vmatprep.subr.mxu0 0.0
    %1070 = vmatpush1.msra.mxu0 0.0
    %1071 = vmatprep.subr.mxu0 0.0
    %1072 = vmatpush1.msra.mxu0 0.0
    %1073 = vmatprep.subr.mxu0 0.0
    %1074 = vmatpush1.msra.mxu0 0.0
    %1075 = vmatprep.subr.mxu0 0.0
    %1076 = vmatpush1.msra.mxu0 %v1029
    %1077 = vmatprep.subr.mxu0 0.0
    %1078 = vmatpush1.msra.mxu0 %v1028
    %1079 = vmatprep.subr.mxu0 0.0
    %1080 = vmatpush1.msra.mxu0 %v1027
    %1081 = vmatprep.subr.mxu0 0.0
    %1082 = vmatpush1.msra.mxu0 %v1026
    %1083 = vmatprep.subr.mxu0 0.0
    %1084 = vmatpush2.msra.mxu0 0.0
    %1085 = vmatprep.subr.mxu0 0.0
    %1086 = vmatpush2.msra.mxu0 0.0
    %1087 = vmatprep.subr.mxu0 0.0
    %1088 = vmatpush2.msra.mxu0 0.0
    %1089 = vmatprep.subr.mxu0 0.0
    %1090 = vmatpush2.msra.mxu0 0.0
    %1091 = vmatprep.subr.mxu0 0.0
    %1092 = vmatpush2.msra.mxu0 0.0
    %1093 = vmatprep.subr.mxu0 0.0
    %1094 = vmatpush2.msra.mxu0 0.0
    %1095 = vmatprep.subr.mxu0 0.0
    %1096 = vmatpush2.msra.mxu0 0.0
    %1097 = vmatprep.subr.mxu0 0.0
    %1098 = vmatpush2.msra.mxu0 0.0
    %1099 = vmatprep.subr.mxu0 0.0
    %1100 = vmatpush2.msra.mxu0 0.0
    %1101 = vmatprep.subr.mxu0 0.0
    %1102 = vmatpush2.msra.mxu0 0.0
    %1103 = vmatprep.subr.mxu0 0.0
    %1104 = vmatpush2.msra.mxu0 0.0
    %1105 = vmatprep.subr.mxu0 0.0
    %1106 = vmatpush2.msra.mxu0 0.0
    %1107 = vmatprep.subr.mxu0 0.0
    %1108 = vmatpush2.msra.mxu0 0.0
    %1109 = vmatprep.subr.mxu0 0.0
    %1110 = vmatpush2.msra.mxu0 0.0
    %1111 = vmatprep.subr.mxu0 0.0
    %1112 = vmatpush2.msra.mxu0 0.0
    %1113 = vmatprep.subr.mxu0 0.0
    %1114 = vmatpush2.msra.mxu0 0.0
    %1115 = vmatprep.mubr.f32.mxu0 0.0
    %1116 = vmatmul.mubr.f32.gmra.mxu0 %v1046
    %v1117 = vpop.f32.mrf.mxu0
    %v1118 = vadd.f32 %v1043, %v1117
    %v1119 = vpop.f32.mrf.mxu0
    %1120 = vmatprep.mubr.f32.mxu0 0.0
    %1121 = vmatmul.mubr.f32.gmra.mxu0 %v1049
    %v1122 = vpop.f32.mrf.mxu0
    %v1123 = vadd.f32 %v1043, %v1122
    %v1124 = vpop.f32.mrf.mxu0
    %1125 = vdwg.mxu0
    %1126 = vmatprep.subr.mxu0 0.0
    %1127 = vmatpush1.msra.mxu0 0.0
    %1128 = vmatprep.subr.mxu0 0.0
    %1129 = vmatpush1.msra.mxu0 0.0
    %1130 = vmatprep.subr.mxu0 0.0
    %1131 = vmatpush1.msra.mxu0 0.0
    %1132 = vmatprep.subr.mxu0 0.0
    %1133 = vmatpush1.msra.mxu0 0.0
    %1134 = vmatprep.subr.mxu0 0.0
    %1135 = vmatpush1.msra.mxu0 0.0
    %1136 = vmatprep.subr.mxu0 0.0
    %1137 = vmatpush1.msra.mxu0 0.0
    %1138 = vmatprep.subr.mxu0 0.0
    %1139 = vmatpush1.msra.mxu0 0.0
    %1140 = vmatprep.subr.mxu0 0.0
    %1141 = vmatpush1.msra.mxu0 0.0
    %1142 = vmatprep.subr.mxu0 0.0
    %1143 = vmatpush1.msra.mxu0 0.0
    %1144 = vmatprep.subr.mxu0 0.0
    %1145 = vmatpush1.msra.mxu0 0.0
    %1146 = vmatprep.subr.mxu0 0.0
    %1147 = vmatpush1.msra.mxu0 0.0
    %1148 = vmatprep.subr.mxu0 0.0
    %1149 = vmatpush1.msra.mxu0 0.0
    %1150 = vmatprep.subr.mxu0 0.0
    %1151 = vmatpush1.msra.mxu0 %v1034
    %1152 = vmatprep.subr.mxu0 0.0
    %1153 = vmatpush1.msra.mxu0 %v1033
    %1154 = vmatprep.subr.mxu0 0.0
    %1155 = vmatpush1.msra.mxu0 %v1032
    %1156 = vmatprep.subr.mxu0 0.0
    %1157 = vmatpush1.msra.mxu0 %v1031
    %1158 = vmatprep.subr.mxu0 0.0
    %1159 = vmatpush2.msra.mxu0 0.0
    %1160 = vmatprep.subr.mxu0 0.0
    %1161 = vmatpush2.msra.mxu0 0.0
    %1162 = vmatprep.subr.mxu0 0.0
    %1163 = vmatpush2.msra.mxu0 0.0
    %1164 = vmatprep.subr.mxu0 0.0
    %1165 = vmatpush2.msra.mxu0 0.0
    %1166 = vmatprep.subr.mxu0 0.0
    %1167 = vmatpush2.msra.mxu0 0.0
    %1168 = vmatprep.subr.mxu0 0.0
    %1169 = vmatpush2.msra.mxu0 0.0
    %1170 = vmatprep.subr.mxu0 0.0
    %1171 = vmatpush2.msra.mxu0 0.0
    %1172 = vmatprep.subr.mxu0 0.0
    %1173 = vmatpush2.msra.mxu0 0.0
    %1174 = vmatprep.subr.mxu0 0.0
    %1175 = vmatpush2.msra.mxu0 0.0
    %1176 = vmatprep.subr.mxu0 0.0
    %1177 = vmatpush2.msra.mxu0 0.0
    %1178 = vmatprep.subr.mxu0 0.0
    %1179 = vmatpush2.msra.mxu0 0.0
    %1180 = vmatprep.subr.mxu0 0.0
    %1181 = vmatpush2.msra.mxu0 0.0
    %1182 = vmatprep.subr.mxu0 0.0
    %1183 = vmatpush2.msra.mxu0 0.0
    %1184 = vmatprep.subr.mxu0 0.0
    %1185 = vmatpush2.msra.mxu0 0.0
    %1186 = vmatprep.subr.mxu0 0.0
    %1187 = vmatpush2.msra.mxu0 0.0
    %1188 = vmatprep.subr.mxu0 0.0
    %1189 = vmatpush2.msra.mxu0 0.0
    %1190 = vmatprep.mubr.f32.mxu0 0.0
    %1191 = vmatmul.mubr.f32.gmra.mxu0 %v159
    %v1192 = vpop.f32.mrf.mxu0
    %v1193 = vadd.f32 0.0, %v1192
    %v1194 = vpop.f32.mrf.mxu0
    %1195 = vdwg.mxu0
    %v1196 = vadd.f32 %v1118, %v1193
    %v1197 = vmul.f32 %v1196, 0.5
    %v1198 = vsel %vm59, %v1196, %v1197
    %v1199 = vtanh.pop %v1198
    %v1200 = vmul.f32 %v1199, 0.5
    %v1201 = vadd.f32 %v1200, 0.5
    %v1202 = vsel %vm59, %v1199, %v1201
    %v1203 = vmul.f32 %v1202, 0.0
    %1205 = vrot.lane.b32.xlu0 %v1202, 64
    %v1206 = vpop.permute.xlu0 %1205
    %v1208 = vmul.f32 %v1202, %v1206
    %1210 = vrot.lane.b32.xlu0 %v1208, 32
    %v1211 = vpop.permute.xlu0 %1210
    %v1213 = vadd.f32 %v1203, %v1211
    %v1214 = vtanh.pop %v1213
    %1216 = vrot.lane.b32.xlu0 %v1214, 64
    %v1217 = vpop.permute.xlu0 %1216
    %v1219 = vmul.f32 %v1202, %v1217
    %1221 = vrot.lane.b32.xlu0 %v1219, 32
    %v1222 = vpop.permute.xlu0 %1221
    %1224 = vst.msk [vmem:[#allocation2] sm:$0x3] %vm259, %v1222
    %v1225 = vsel %vm52, %v1222, 0
    %1227 = vmatprep.subr.mxu0 0.0
    %1228 = vmatpush1.msra.mxu0 0.0
    %1229 = vmatprep.subr.mxu0 0.0
    %1230 = vmatpush1.msra.mxu0 0.0
    %1231 = vmatprep.subr.mxu0 0.0
    %1232 = vmatpush1.msra.mxu0 0.0
    %1233 = vmatprep.subr.mxu0 0.0
    %1234 = vmatpush1.msra.mxu0 0.0
    %1235 = vmatprep.subr.mxu0 0.0
    %1236 = vmatpush1.msra.mxu0 0.0
    %1237 = vmatprep.subr.mxu0 0.0
    %1238 = vmatpush1.msra.mxu0 0.0
    %1239 = vmatprep.subr.mxu0 0.0
    %1240 = vmatpush1.msra.mxu0 0.0
    %1241 = vmatprep.subr.mxu0 0.0
    %1242 = vmatpush1.msra.mxu0 0.0
    %1243 = vmatprep.subr.mxu0 0.0
    %1244 = vmatpush1.msra.mxu0 0.0
    %1245 = vmatprep.subr.mxu0 0.0
    %1246 = vmatpush1.msra.mxu0 0.0
    %1247 = vmatprep.subr.mxu0 0.0
    %1248 = vmatpush1.msra.mxu0 0.0
    %1249 = vmatprep.subr.mxu0 0.0
    %1250 = vmatpush1.msra.mxu0 0.0
    %1251 = vmatprep.subr.mxu0 0.0
    %1252 = vmatpush1.msra.mxu0 %v1034
    %1253 = vmatprep.subr.mxu0 0.0
    %1254 = vmatpush1.msra.mxu0 %v1033
    %1255 = vmatprep.subr.mxu0 0.0
    %1256 = vmatpush1.msra.mxu0 %v1032
    %1257 = vmatprep.subr.mxu0 0.0
    %1258 = vmatpush1.msra.mxu0 %v1031
    %1259 = vmatprep.subr.mxu0 0.0
    %1260 = vmatpush2.msra.mxu0 0.0
    %1261 = vmatprep.subr.mxu0 0.0
    %1262 = vmatpush2.msra.mxu0 0.0
    %1263 = vmatprep.subr.mxu0 0.0
    %1264 = vmatpush2.msra.mxu0 0.0
    %1265 = vmatprep.subr.mxu0 0.0
    %1266 = vmatpush2.msra.mxu0 0.0
    %1267 = vmatprep.subr.mxu0 0.0
    %1268 = vmatpush2.msra.mxu0 0.0
    %1269 = vmatprep.subr.mxu0 0.0
    %1270 = vmatpush2.msra.mxu0 0.0
    %1271 = vmatprep.subr.mxu0 0.0
    %1272 = vmatpush2.msra.mxu0 0.0
    %1273 = vmatprep.subr.mxu0 0.0
    %1274 = vmatpush2.msra.mxu0 0.0
    %1275 = vmatprep.subr.mxu0 0.0
    %1276 = vmatpush2.msra.mxu0 0.0
    %1277 = vmatprep.subr.mxu0 0.0
    %1278 = vmatpush2.msra.mxu0 0.0
    %1279 = vmatprep.subr.mxu0 0.0
    %1280 = vmatpush2.msra.mxu0 0.0
    %1281 = vmatprep.subr.mxu0 0.0
    %1282 = vmatpush2.msra.mxu0 0.0
    %1283 = vmatprep.subr.mxu0 0.0
    %1284 = vmatpush2.msra.mxu0 0.0
    %1285 = vmatprep.subr.mxu0 0.0
    %1286 = vmatpush2.msra.mxu0 0.0
    %1287 = vmatprep.subr.mxu0 0.0
    %1288 = vmatpush2.msra.mxu0 0.0
    %1289 = vmatprep.subr.mxu0 0.0
    %1290 = vmatpush2.msra.mxu0 0.0
    %1291 = vmatprep.mubr.f32.mxu0 0.0
    %1292 = vmatmul.mubr.f32.gmra.mxu0 %v1225
    %v1293 = vpop.f32.mrf.mxu0
    %v1294 = vadd.f32 0.0, %v1293
    %v1295 = vpop.f32.mrf.mxu0
    %1296 = vdwg.mxu0
    %v1298 = vrot.slane %v1294, 6
    %v1300 = vadd.f32 %v1118, %v1298
    %v1301 = vmul.f32 %v1300, 0.5
    %v1302 = vsel %vm59, %v1300, %v1301
    %v1303 = vtanh.pop %v1302
    %v1304 = vmul.f32 %v1303, 0.5
    %v1305 = vadd.f32 %v1304, 0.5
    %v1306 = vsel %vm59, %v1303, %v1305
    %v1308 = vrot.slane %v1213, 6
    %v1310 = vmul.f32 %v1306, %v1308
    %1312 = vrot.lane.b32.xlu0 %v1306, 64
    %v1313 = vpop.permute.xlu0 %1312
    %v1315 = vmul.f32 %v1306, %v1313
    %1317 = vrot.lane.b32.xlu0 %v1315, 32
    %v1318 = vpop.permute.xlu0 %1317
    %v1320 = vadd.f32 %v1310, %v1318
    %v1321 = vtanh.pop %v1320
    %1323 = vrot.lane.b32.xlu0 %v1321, 64
    %v1324 = vpop.permute.xlu0 %1323
    %v1326 = vmul.f32 %v1306, %v1324
    %1328 = vrot.lane.b32.xlu0 %v1326, 32
    %v1329 = vpop.permute.xlu0 %1328
    %1331 = vst.msk [vmem:[#allocation2] sm:$0xc] %vm367, %v1329
    %v1332 = vrot.slane %v1326, 2
    %1333 = vrot.lane.b32.xlu0 %v1332, 32
    %v1334 = vpop.permute.xlu0 %1333
    %v1335 = vsel %vm52, %v1334, 0
    %1337 = vmatprep.subr.mxu0 0.0
    %1338 = vmatpush1.msra.mxu0 0.0
    %1339 = vmatprep.subr.mxu0 0.0
    %1340 = vmatpush1.msra.mxu0 0.0
    %1341 = vmatprep.subr.mxu0 0.0
    %1342 = vmatpush1.msra.mxu0 0.0
    %1343 = vmatprep.subr.mxu0 0.0
    %1344 = vmatpush1.msra.mxu0 0.0
    %1345 = vmatprep.subr.mxu0 0.0
    %1346 = vmatpush1.msra.mxu0 0.0
    %1347 = vmatprep.subr.mxu0 0.0
    %1348 = vmatpush1.msra.mxu0 0.0
    %1349 = vmatprep.subr.mxu0 0.0
    %1350 = vmatpush1.msra.mxu0 0.0
    %1351 = vmatprep.subr.mxu0 0.0
    %1352 = vmatpush1.msra.mxu0 0.0
    %1353 = vmatprep.subr.mxu0 0.0
    %1354 = vmatpush1.msra.mxu0 0.0
    %1355 = vmatprep.subr.mxu0 0.0
    %1356 = vmatpush1.msra.mxu0 0.0
    %1357 = vmatprep.subr.mxu0 0.0
    %1358 = vmatpush1.msra.mxu0 0.0
    %1359 = vmatprep.subr.mxu0 0.0
    %1360 = vmatpush1.msra.mxu0 0.0
    %1361 = vmatprep.subr.mxu0 0.0
    %1362 = vmatpush1.msra.mxu0 %v1034
    %1363 = vmatprep.subr.mxu0 0.0
    %1364 = vmatpush1.msra.mxu0 %v1033
    %1365 = vmatprep.subr.mxu0 0.0
    %1366 = vmatpush1.msra.mxu0 %v1032
    %1367 = vmatprep.subr.mxu0 0.0
    %1368 = vmatpush1.msra.mxu0 %v1031
    %1369 = vmatprep.subr.mxu0 0.0
    %1370 = vmatpush2.msra.mxu0 0.0
    %1371 = vmatprep.subr.mxu0 0.0
    %1372 = vmatpush2.msra.mxu0 0.0
    %1373 = vmatprep.subr.mxu0 0.0
    %1374 = vmatpush2.msra.mxu0 0.0
    %1375 = vmatprep.subr.mxu0 0.0
    %1376 = vmatpush2.msra.mxu0 0.0
    %1377 = vmatprep.subr.mxu0 0.0
    %1378 = vmatpush2.msra.mxu0 0.0
    %1379 = vmatprep.subr.mxu0 0.0
    %1380 = vmatpush2.msra.mxu0 0.0
    %1381 = vmatprep.subr.mxu0 0.0
    %1382 = vmatpush2.msra.mxu0 0.0
    %1383 = vmatprep.subr.mxu0 0.0
    %1384 = vmatpush2.msra.mxu0 0.0
    %1385 = vmatprep.subr.mxu0 0.0
    %1386 = vmatpush2.msra.mxu0 0.0
    %1387 = vmatprep.subr.mxu0 0.0
    %1388 = vmatpush2.msra.mxu0 0.0
    %1389 = vmatprep.subr.mxu0 0.0
    %1390 = vmatpush2.msra.mxu0 0.0
    %1391 = vmatprep.subr.mxu0 0.0
    %1392 = vmatpush2.msra.mxu0 0.0
    %1393 = vmatprep.subr.mxu0 0.0
    %1394 = vmatpush2.msra.mxu0 0.0
    %1395 = vmatprep.subr.mxu0 0.0
    %1396 = vmatpush2.msra.mxu0 0.0
    %1397 = vmatprep.subr.mxu0 0.0
    %1398 = vmatpush2.msra.mxu0 0.0
    %1399 = vmatprep.subr.mxu0 0.0
    %1400 = vmatpush2.msra.mxu0 0.0
    %1401 = vmatprep.mubr.f32.mxu0 0.0
    %1402 = vmatmul.mubr.f32.gmra.mxu0 %v1335
    %v1403 = vpop.f32.mrf.mxu0
    %v1404 = vadd.f32 0.0, %v1403
    %v1405 = vpop.f32.mrf.mxu0
    %1406 = vdwg.mxu0
    %v1408 = vrot.slane %v1404, 4
    %v1410 = vadd.f32 %v1118, %v1408
    %v1411 = vmul.f32 %v1410, 0.5
    %v1412 = vsel %vm59, %v1410, %v1411
    %v1413 = vtanh.pop %v1412
    %v1414 = vmul.f32 %v1413, 0.5
    %v1415 = vadd.f32 %v1414, 0.5
    %v1416 = vsel %vm59, %v1413, %v1415
    %v1418 = vrot.slane %v1320, 6
    %v1420 = vmul.f32 %v1416, %v1418
    %1422 = vrot.lane.b32.xlu0 %v1416, 64
    %v1423 = vpop.permute.xlu0 %1422
    %v1425 = vmul.f32 %v1416, %v1423
    %1427 = vrot.lane.b32.xlu0 %v1425, 32
    %v1428 = vpop.permute.xlu0 %1427
    %v1430 = vadd.f32 %v1420, %v1428
    %v1431 = vtanh.pop %v1430
    %1433 = vrot.lane.b32.xlu0 %v1431, 64
    %v1434 = vpop.permute.xlu0 %1433
    %v1436 = vmul.f32 %v1416, %v1434
    %1438 = vrot.lane.b32.xlu0 %v1436, 32
    %v1439 = vpop.permute.xlu0 %1438
    %1441 = vst.msk [vmem:[#allocation2] sm:$0x30] %vm478, %v1439
    %v1442 = vrot.slane %v1436, 4
    %1443 = vrot.lane.b32.xlu0 %v1442, 32
    %v1444 = vpop.permute.xlu0 %1443
    %v1445 = vsel %vm52, %v1444, 0
    %1447 = vmatprep.subr.mxu0 0.0
    %1448 = vmatpush1.msra.mxu0 0.0
    %1449 = vmatprep.subr.mxu0 0.0
    %1450 = vmatpush1.msra.mxu0 0.0
    %1451 = vmatprep.subr.mxu0 0.0
    %1452 = vmatpush1.msra.mxu0 0.0
    %1453 = vmatprep.subr.mxu0 0.0
    %1454 = vmatpush1.msra.mxu0 0.0
    %1455 = vmatprep.subr.mxu0 0.0
    %1456 = vmatpush1.msra.mxu0 0.0
    %1457 = vmatprep.subr.mxu0 0.0
    %1458 = vmatpush1.msra.mxu0 0.0
    %1459 = vmatprep.subr.mxu0 0.0
    %1460 = vmatpush1.msra.mxu0 0.0
    %1461 = vmatprep.subr.mxu0 0.0
    %1462 = vmatpush1.msra.mxu0 0.0
    %1463 = vmatprep.subr.mxu0 0.0
    %1464 = vmatpush1.msra.mxu0 0.0
    %1465 = vmatprep.subr.mxu0 0.0
    %1466 = vmatpush1.msra.mxu0 0.0
    %1467 = vmatprep.subr.mxu0 0.0
    %1468 = vmatpush1.msra.mxu0 0.0
    %1469 = vmatprep.subr.mxu0 0.0
    %1470 = vmatpush1.msra.mxu0 0.0
    %1471 = vmatprep.subr.mxu0 0.0
    %1472 = vmatpush1.msra.mxu0 %v1034
    %1473 = vmatprep.subr.mxu0 0.0
    %1474 = vmatpush1.msra.mxu0 %v1033
    %1475 = vmatprep.subr.mxu0 0.0
    %1476 = vmatpush1.msra.mxu0 %v1032
    %1477 = vmatprep.subr.mxu0 0.0
    %1478 = vmatpush1.msra.mxu0 %v1031
    %1479 = vmatprep.subr.mxu0 0.0
    %1480 = vmatpush2.msra.mxu0 0.0
    %1481 = vmatprep.subr.mxu0 0.0
    %1482 = vmatpush2.msra.mxu0 0.0
    %1483 = vmatprep.subr.mxu0 0.0
    %1484 = vmatpush2.msra.mxu0 0.0
    %1485 = vmatprep.subr.mxu0 0.0
    %1486 = vmatpush2.msra.mxu0 0.0
    %1487 = vmatprep.subr.mxu0 0.0
    %1488 = vmatpush2.msra.mxu0 0.0
    %1489 = vmatprep.subr.mxu0 0.0
    %1490 = vmatpush2.msra.mxu0 0.0
    %1491 = vmatprep.subr.mxu0 0.0
    %1492 = vmatpush2.msra.mxu0 0.0
    %1493 = vmatprep.subr.mxu0 0.0
    %1494 = vmatpush2.msra.mxu0 0.0
    %1495 = vmatprep.subr.mxu0 0.0
    %1496 = vmatpush2.msra.mxu0 0.0
    %1497 = vmatprep.subr.mxu0 0.0
    %1498 = vmatpush2.msra.mxu0 0.0
    %1499 = vmatprep.subr.mxu0 0.0
    %1500 = vmatpush2.msra.mxu0 0.0
    %1501 = vmatprep.subr.mxu0 0.0
    %1502 = vmatpush2.msra.mxu0 0.0
    %1503 = vmatprep.subr.mxu0 0.0
    %1504 = vmatpush2.msra.mxu0 0.0
    %1505 = vmatprep.subr.mxu0 0.0
    %1506 = vmatpush2.msra.mxu0 0.0
    %1507 = vmatprep.subr.mxu0 0.0
    %1508 = vmatpush2.msra.mxu0 0.0
    %1509 = vmatprep.subr.mxu0 0.0
    %1510 = vmatpush2.msra.mxu0 0.0
    %1511 = vmatprep.mubr.f32.mxu0 0.0
    %1512 = vmatmul.mubr.f32.gmra.mxu0 %v1445
    %v1513 = vpop.f32.mrf.mxu0
    %v1514 = vadd.f32 0.0, %v1513
    %v1515 = vpop.f32.mrf.mxu0
    %1516 = vdwg.mxu0
    %v1518 = vrot.slane %v1514, 2
    %v1520 = vadd.f32 %v1118, %v1518
    %v1521 = vmul.f32 %v1520, 0.5
    %v1522 = vsel %vm59, %v1520, %v1521
    %v1523 = vtanh.pop %v1522
    %v1524 = vmul.f32 %v1523, 0.5
    %v1525 = vadd.f32 %v1524, 0.5
    %v1526 = vsel %vm59, %v1523, %v1525
    %v1528 = vrot.slane %v1430, 6
    %v1530 = vmul.f32 %v1526, %v1528
    %1532 = vrot.lane.b32.xlu0 %v1526, 64
    %v1533 = vpop.permute.xlu0 %1532
    %v1535 = vmul.f32 %v1526, %v1533
    %1537 = vrot.lane.b32.xlu0 %v1535, 32
    %v1538 = vpop.permute.xlu0 %1537
    %v1540 = vadd.f32 %v1530, %v1538
    %v1541 = vtanh.pop %v1540
    %1543 = vrot.lane.b32.xlu0 %v1541, 64
    %v1544 = vpop.permute.xlu0 %1543
    %v1546 = vmul.f32 %v1526, %v1544
    %1548 = vrot.lane.b32.xlu0 %v1546, 32
    %v1549 = vpop.permute.xlu0 %1548
    %1551 = vst.msk [vmem:[#allocation2] sm:$0xc0] %vm589, %v1549
    %v1552 = vrot.slane %v1546, 6
    %1553 = vrot.lane.b32.xlu0 %v1552, 32
    %v1554 = vpop.permute.xlu0 %1553
    %v1555 = vsel %vm52, %v1554, 0
    %1557 = vmatprep.subr.mxu0 0.0
    %1558 = vmatpush1.msra.mxu0 0.0
    %1559 = vmatprep.subr.mxu0 0.0
    %1560 = vmatpush1.msra.mxu0 0.0
    %1561 = vmatprep.subr.mxu0 0.0
    %1562 = vmatpush1.msra.mxu0 0.0
    %1563 = vmatprep.subr.mxu0 0.0
    %1564 = vmatpush1.msra.mxu0 0.0
    %1565 = vmatprep.subr.mxu0 0.0
    %1566 = vmatpush1.msra.mxu0 0.0
    %1567 = vmatprep.subr.mxu0 0.0
    %1568 = vmatpush1.msra.mxu0 0.0
    %1569 = vmatprep.subr.mxu0 0.0
    %1570 = vmatpush1.msra.mxu0 0.0
    %1571 = vmatprep.subr.mxu0 0.0
    %1572 = vmatpush1.msra.mxu0 0.0
    %1573 = vmatprep.subr.mxu0 0.0
    %1574 = vmatpush1.msra.mxu0 0.0
    %1575 = vmatprep.subr.mxu0 0.0
    %1576 = vmatpush1.msra.mxu0 0.0
    %1577 = vmatprep.subr.mxu0 0.0
    %1578 = vmatpush1.msra.mxu0 0.0
    %1579 = vmatprep.subr.mxu0 0.0
    %1580 = vmatpush1.msra.mxu0 0.0
    %1581 = vmatprep.subr.mxu0 0.0
    %1582 = vmatpush1.msra.mxu0 %v1034
    %1583 = vmatprep.subr.mxu0 0.0
    %1584 = vmatpush1.msra.mxu0 %v1033
    %1585 = vmatprep.subr.mxu0 0.0
    %1586 = vmatpush1.msra.mxu0 %v1032
    %1587 = vmatprep.subr.mxu0 0.0
    %1588 = vmatpush1.msra.mxu0 %v1031
    %1589 = vmatprep.subr.mxu0 0.0
    %1590 = vmatpush2.msra.mxu0 0.0
    %1591 = vmatprep.subr.mxu0 0.0
    %1592 = vmatpush2.msra.mxu0 0.0
    %1593 = vmatprep.subr.mxu0 0.0
    %1594 = vmatpush2.msra.mxu0 0.0
    %1595 = vmatprep.subr.mxu0 0.0
    %1596 = vmatpush2.msra.mxu0 0.0
    %1597 = vmatprep.subr.mxu0 0.0
    %1598 = vmatpush2.msra.mxu0 0.0
    %1599 = vmatprep.subr.mxu0 0.0
    %1600 = vmatpush2.msra.mxu0 0.0
    %1601 = vmatprep.subr.mxu0 0.0
    %1602 = vmatpush2.msra.mxu0 0.0
    %1603 = vmatprep.subr.mxu0 0.0
    %1604 = vmatpush2.msra.mxu0 0.0
    %1605 = vmatprep.subr.mxu0 0.0
    %1606 = vmatpush2.msra.mxu0 0.0
    %1607 = vmatprep.subr.mxu0 0.0
    %1608 = vmatpush2.msra.mxu0 0.0
    %1609 = vmatprep.subr.mxu0 0.0
    %1610 = vmatpush2.msra.mxu0 0.0
    %1611 = vmatprep.subr.mxu0 0.0
    %1612 = vmatpush2.msra.mxu0 0.0
    %1613 = vmatprep.subr.mxu0 0.0
    %1614 = vmatpush2.msra.mxu0 0.0
    %1615 = vmatprep.subr.mxu0 0.0
    %1616 = vmatpush2.msra.mxu0 0.0
    %1617 = vmatprep.subr.mxu0 0.0
    %1618 = vmatpush2.msra.mxu0 0.0
    %1619 = vmatprep.subr.mxu0 0.0
    %1620 = vmatpush2.msra.mxu0 0.0
    %1621 = vmatprep.mubr.f32.mxu0 0.0
    %1622 = vmatmul.mubr.f32.gmra.mxu0 %v1555
    %v1623 = vpop.f32.mrf.mxu0
    %v1624 = vadd.f32 0.0, %v1623
    %v1625 = vpop.f32.mrf.mxu0
    %1626 = vdwg.mxu0
    %v1627 = vadd.f32 %v1123, %v1624
    %v1628 = vmul.f32 %v1627, 0.5
    %v1629 = vsel %vm59, %v1627, %v1628
    %v1630 = vtanh.pop %v1629
    %v1631 = vmul.f32 %v1630, 0.5
    %v1632 = vadd.f32 %v1631, 0.5
    %v1633 = vsel %vm59, %v1630, %v1632
    %v1635 = vrot.slane %v1540, 6
    %v1637 = vmul.f32 %v1633, %v1635
    %1639 = vrot.lane.b32.xlu0 %v1633, 64
    %v1640 = vpop.permute.xlu0 %1639
    %v1642 = vmul.f32 %v1633, %v1640
    %1644 = vrot.lane.b32.xlu0 %v1642, 32
    %v1645 = vpop.permute.xlu0 %1644
    %v1647 = vadd.f32 %v1637, %v1645
    %v1648 = vtanh.pop %v1647
    %1650 = vrot.lane.b32.xlu0 %v1648, 64
    %v1651 = vpop.permute.xlu0 %1650
    %v1653 = vmul.f32 %v1633, %v1651
    %1655 = vrot.lane.b32.xlu0 %v1653, 32
    %v1656 = vpop.permute.xlu0 %1655
    %1658 = vst.msk [vmem:[#allocation2 + $0x8] sm:$0x3] %vm259, %v1656
    %v1659 = vsel %vm52, %v1656, 0
    %1661 = vmatprep.subr.mxu0 0.0
    %1662 = vmatpush1.msra.mxu0 0.0
    %1663 = vmatprep.subr.mxu0 0.0
    %1664 = vmatpush1.msra.mxu0 0.0
    %1665 = vmatprep.subr.mxu0 0.0
    %1666 = vmatpush1.msra.mxu0 0.0
    %1667 = vmatprep.subr.mxu0 0.0
    %1668 = vmatpush1.msra.mxu0 0.0
    %1669 = vmatprep.subr.mxu0 0.0
    %1670 = vmatpush1.msra.mxu0 0.0
    %1671 = vmatprep.subr.mxu0 0.0
    %1672 = vmatpush1.msra.mxu0 0.0
    %1673 = vmatprep.subr.mxu0 0.0
    %1674 = vmatpush1.msra.mxu0 0.0
    %1675 = vmatprep.subr.mxu0 0.0
    %1676 = vmatpush1.msra.mxu0 0.0
    %1677 = vmatprep.subr.mxu0 0.0
    %1678 = vmatpush1.msra.mxu0 0.0
    %1679 = vmatprep.subr.mxu0 0.0
    %1680 = vmatpush1.msra.mxu0 0.0
    %1681 = vmatprep.subr.mxu0 0.0
    %1682 = vmatpush1.msra.mxu0 0.0
    %1683 = vmatprep.subr.mxu0 0.0
    %1684 = vmatpush1.msra.mxu0 0.0
    %1685 = vmatprep.subr.mxu0 0.0
    %1686 = vmatpush1.msra.mxu0 %v1034
    %1687 = vmatprep.subr.mxu0 0.0
    %1688 = vmatpush1.msra.mxu0 %v1033
    %1689 = vmatprep.subr.mxu0 0.0
    %1690 = vmatpush1.msra.mxu0 %v1032
    %1691 = vmatprep.subr.mxu0 0.0
    %1692 = vmatpush1.msra.mxu0 %v1031
    %1693 = vmatprep.subr.mxu0 0.0
    %1694 = vmatpush2.msra.mxu0 0.0
    %1695 = vmatprep.subr.mxu0 0.0
    %1696 = vmatpush2.msra.mxu0 0.0
    %1697 = vmatprep.subr.mxu0 0.0
    %1698 = vmatpush2.msra.mxu0 0.0
    %1699 = vmatprep.subr.mxu0 0.0
    %1700 = vmatpush2.msra.mxu0 0.0
    %1701 = vmatprep.subr.mxu0 0.0
    %1702 = vmatpush2.msra.mxu0 0.0
    %1703 = vmatprep.subr.mxu0 0.0
    %1704 = vmatpush2.msra.mxu0 0.0
    %1705 = vmatprep.subr.mxu0 0.0
    %1706 = vmatpush2.msra.mxu0 0.0
    %1707 = vmatprep.subr.mxu0 0.0
    %1708 = vmatpush2.msra.mxu0 0.0
    %1709 = vmatprep.subr.mxu0 0.0
    %1710 = vmatpush2.msra.mxu0 0.0
    %1711 = vmatprep.subr.mxu0 0.0
    %1712 = vmatpush2.msra.mxu0 0.0
    %1713 = vmatprep.subr.mxu0 0.0
    %1714 = vmatpush2.msra.mxu0 0.0
    %1715 = vmatprep.subr.mxu0 0.0
    %1716 = vmatpush2.msra.mxu0 0.0
    %1717 = vmatprep.subr.mxu0 0.0
    %1718 = vmatpush2.msra.mxu0 0.0
    %1719 = vmatprep.subr.mxu0 0.0
    %1720 = vmatpush2.msra.mxu0 0.0
    %1721 = vmatprep.subr.mxu0 0.0
    %1722 = vmatpush2.msra.mxu0 0.0
    %1723 = vmatprep.subr.mxu0 0.0
    %1724 = vmatpush2.msra.mxu0 0.0
    %1725 = vmatprep.mubr.f32.mxu0 0.0
    %1726 = vmatmul.mubr.f32.gmra.mxu0 %v1659
    %v1727 = vpop.f32.mrf.mxu0
    %v1728 = vadd.f32 0.0, %v1727
    %v1729 = vpop.f32.mrf.mxu0
    %1730 = vdwg.mxu0
    %v1732 = vrot.slane %v1728, 6
    %v1734 = vadd.f32 %v1123, %v1732
    %v1735 = vmul.f32 %v1734, 0.5
    %v1736 = vsel %vm59, %v1734, %v1735
    %v1737 = vtanh.pop %v1736
    %v1738 = vmul.f32 %v1737, 0.5
    %v1739 = vadd.f32 %v1738, 0.5
    %v1740 = vsel %vm59, %v1737, %v1739
    %v1742 = vrot.slane %v1647, 6
    %v1744 = vmul.f32 %v1740, %v1742
    %1746 = vrot.lane.b32.xlu0 %v1740, 64
    %v1747 = vpop.permute.xlu0 %1746
    %v1749 = vmul.f32 %v1740, %v1747
    %1751 = vrot.lane.b32.xlu0 %v1749, 32
    %v1752 = vpop.permute.xlu0 %1751
    %v1754 = vadd.f32 %v1744, %v1752
    %v1755 = vtanh.pop %v1754
    %1757 = vrot.lane.b32.xlu0 %v1755, 64
    %v1758 = vpop.permute.xlu0 %1757
    %v1760 = vmul.f32 %v1740, %v1758
    %1762 = vrot.lane.b32.xlu0 %v1760, 32
    %v1763 = vpop.permute.xlu0 %1762
    %1765 = vst.msk [vmem:[#allocation2 + $0x8] sm:$0xc] %vm367, %v1763
    %v1766 = vrot.slane %v1760, 2
    %1767 = vrot.lane.b32.xlu0 %v1766, 32
    %v1768 = vpop.permute.xlu0 %1767
    %v1769 = vsel %vm52, %v1768, 0
    %1771 = vmatprep.subr.mxu0 0.0
    %1772 = vmatpush1.msra.mxu0 0.0
    %1773 = vmatprep.subr.mxu0 0.0
    %1774 = vmatpush1.msra.mxu0 0.0
    %1775 = vmatprep.subr.mxu0 0.0
    %1776 = vmatpush1.msra.mxu0 0.0
    %1777 = vmatprep.subr.mxu0 0.0
    %1778 = vmatpush1.msra.mxu0 0.0
    %1779 = vmatprep.subr.mxu0 0.0
    %1780 = vmatpush1.msra.mxu0 0.0
    %1781 = vmatprep.subr.mxu0 0.0
    %1782 = vmatpush1.msra.mxu0 0.0
    %1783 = vmatprep.subr.mxu0 0.0
    %1784 = vmatpush1.msra.mxu0 0.0
    %1785 = vmatprep.subr.mxu0 0.0
    %1786 = vmatpush1.msra.mxu0 0.0
    %1787 = vmatprep.subr.mxu0 0.0
    %1788 = vmatpush1.msra.mxu0 0.0
    %1789 = vmatprep.subr.mxu0 0.0
    %1790 = vmatpush1.msra.mxu0 0.0
    %1791 = vmatprep.subr.mxu0 0.0
    %1792 = vmatpush1.msra.mxu0 0.0
    %1793 = vmatprep.subr.mxu0 0.0
    %1794 = vmatpush1.msra.mxu0 0.0
    %1795 = vmatprep.subr.mxu0 0.0
    %1796 = vmatpush1.msra.mxu0 %v1034
    %1797 = vmatprep.subr.mxu0 0.0
    %1798 = vmatpush1.msra.mxu0 %v1033
    %1799 = vmatprep.subr.mxu0 0.0
    %1800 = vmatpush1.msra.mxu0 %v1032
    %1801 = vmatprep.subr.mxu0 0.0
    %1802 = vmatpush1.msra.mxu0 %v1031
    %1803 = vmatprep.subr.mxu0 0.0
    %1804 = vmatpush2.msra.mxu0 0.0
    %1805 = vmatprep.subr.mxu0 0.0
    %1806 = vmatpush2.msra.mxu0 0.0
    %1807 = vmatprep.subr.mxu0 0.0
    %1808 = vmatpush2.msra.mxu0 0.0
    %1809 = vmatprep.subr.mxu0 0.0
    %1810 = vmatpush2.msra.mxu0 0.0
    %1811 = vmatprep.subr.mxu0 0.0
    %1812 = vmatpush2.msra.mxu0 0.0
    %1813 = vmatprep.subr.mxu0 0.0
    %1814 = vmatpush2.msra.mxu0 0.0
    %1815 = vmatprep.subr.mxu0 0.0
    %1816 = vmatpush2.msra.mxu0 0.0
    %1817 = vmatprep.subr.mxu0 0.0
    %1818 = vmatpush2.msra.mxu0 0.0
    %1819 = vmatprep.subr.mxu0 0.0
    %1820 = vmatpush2.msra.mxu0 0.0
    %1821 = vmatprep.subr.mxu0 0.0
    %1822 = vmatpush2.msra.mxu0 0.0
    %1823 = vmatprep.subr.mxu0 0.0
    %1824 = vmatpush2.msra.mxu0 0.0
    %1825 = vmatprep.subr.mxu0 0.0
    %1826 = vmatpush2.msra.mxu0 0.0
    %1827 = vmatprep.subr.mxu0 0.0
    %1828 = vmatpush2.msra.mxu0 0.0
    %1829 = vmatprep.subr.mxu0 0.0
    %1830 = vmatpush2.msra.mxu0 0.0
    %1831 = vmatprep.subr.mxu0 0.0
    %1832 = vmatpush2.msra.mxu0 0.0
    %1833 = vmatprep.subr.mxu0 0.0
    %1834 = vmatpush2.msra.mxu0 0.0
    %1835 = vmatprep.mubr.f32.mxu0 0.0
    %1836 = vmatmul.mubr.f32.gmra.mxu0 %v1769
    %v1837 = vpop.f32.mrf.mxu0
    %v1838 = vadd.f32 0.0, %v1837
    %v1839 = vpop.f32.mrf.mxu0
    %1840 = vdwg.mxu0
    %v1842 = vrot.slane %v1838, 4
    %v1844 = vadd.f32 %v1123, %v1842
    %v1845 = vmul.f32 %v1844, 0.5
    %v1846 = vsel %vm59, %v1844, %v1845
    %v1847 = vtanh.pop %v1846
    %v1848 = vmul.f32 %v1847, 0.5
    %v1849 = vadd.f32 %v1848, 0.5
    %v1850 = vsel %vm59, %v1847, %v1849
    %v1852 = vrot.slane %v1754, 6
    %v1854 = vmul.f32 %v1850, %v1852
    %1856 = vrot.lane.b32.xlu0 %v1850, 64
    %v1857 = vpop.permute.xlu0 %1856
    %v1859 = vmul.f32 %v1850, %v1857
    %1861 = vrot.lane.b32.xlu0 %v1859, 32
    %v1862 = vpop.permute.xlu0 %1861
    %v1864 = vadd.f32 %v1854, %v1862
    %v1865 = vtanh.pop %v1864
    %1867 = vrot.lane.b32.xlu0 %v1865, 64
    %v1868 = vpop.permute.xlu0 %1867
    %v1870 = vmul.f32 %v1850, %v1868
    %1872 = vrot.lane.b32.xlu0 %v1870, 32
    %v1873 = vpop.permute.xlu0 %1872
    %1875 = vst.msk [vmem:[#allocation2 + $0x8] sm:$0x30] %vm478, %v1873
    %v1876 = vrot.slane %v1870, 4
    %1877 = vrot.lane.b32.xlu0 %v1876, 32
    %v1878 = vpop.permute.xlu0 %1877
    %v1879 = vsel %vm52, %v1878, 0
    %1881 = vmatprep.subr.mxu0 0.0
    %1882 = vmatpush1.msra.mxu0 0.0
    %1883 = vmatprep.subr.mxu0 0.0
    %1884 = vmatpush1.msra.mxu0 0.0
    %1885 = vmatprep.subr.mxu0 0.0
    %1886 = vmatpush1.msra.mxu0 0.0
    %1887 = vmatprep.subr.mxu0 0.0
    %1888 = vmatpush1.msra.mxu0 0.0
    %1889 = vmatprep.subr.mxu0 0.0
    %1890 = vmatpush1.msra.mxu0 0.0
    %1891 = vmatprep.subr.mxu0 0.0
    %1892 = vmatpush1.msra.mxu0 0.0
    %1893 = vmatprep.subr.mxu0 0.0
    %1894 = vmatpush1.msra.mxu0 0.0
    %1895 = vmatprep.subr.mxu0 0.0
    %1896 = vmatpush1.msra.mxu0 0.0
    %1897 = vmatprep.subr.mxu0 0.0
    %1898 = vmatpush1.msra.mxu0 0.0
    %1899 = vmatprep.subr.mxu0 0.0
    %1900 = vmatpush1.msra.mxu0 0.0
    %1901 = vmatprep.subr.mxu0 0.0
    %1902 = vmatpush1.msra.mxu0 0.0
    %1903 = vmatprep.subr.mxu0 0.0
    %1904 = vmatpush1.msra.mxu0 0.0
    %1905 = vmatprep.subr.mxu0 0.0
    %1906 = vmatpush1.msra.mxu0 %v1034
    %1907 = vmatprep.subr.mxu0 0.0
    %1908 = vmatpush1.msra.mxu0 %v1033
    %1909 = vmatprep.subr.mxu0 0.0
    %1910 = vmatpush1.msra.mxu0 %v1032
    %1911 = vmatprep.subr.mxu0 0.0
    %1912 = vmatpush1.msra.mxu0 %v1031
    %1913 = vmatprep.subr.mxu0 0.0
    %1914 = vmatpush2.msra.mxu0 0.0
    %1915 = vmatprep.subr.mxu0 0.0
    %1916 = vmatpush2.msra.mxu0 0.0
    %1917 = vmatprep.subr.mxu0 0.0
    %1918 = vmatpush2.msra.mxu0 0.0
    %1919 = vmatprep.subr.mxu0 0.0
    %1920 = vmatpush2.msra.mxu0 0.0
    %1921 = vmatprep.subr.mxu0 0.0
    %1922 = vmatpush2.msra.mxu0 0.0
    %1923 = vmatprep.subr.mxu0 0.0
    %1924 = vmatpush2.msra.mxu0 0.0
    %1925 = vmatprep.subr.mxu0 0.0
    %1926 = vmatpush2.msra.mxu0 0.0
    %1927 = vmatprep.subr.mxu0 0.0
    %1928 = vmatpush2.msra.mxu0 0.0
    %1929 = vmatprep.subr.mxu0 0.0
    %1930 = vmatpush2.msra.mxu0 0.0
    %1931 = vmatprep.subr.mxu0 0.0
    %1932 = vmatpush2.msra.mxu0 0.0
    %1933 = vmatprep.subr.mxu0 0.0
    %1934 = vmatpush2.msra.mxu0 0.0
    %1935 = vmatprep.subr.mxu0 0.0
    %1936 = vmatpush2.msra.mxu0 0.0
    %1937 = vmatprep.subr.mxu0 0.0
    %1938 = vmatpush2.msra.mxu0 0.0
    %1939 = vmatprep.subr.mxu0 0.0
    %1940 = vmatpush2.msra.mxu0 0.0
    %1941 = vmatprep.subr.mxu0 0.0
    %1942 = vmatpush2.msra.mxu0 0.0
    %1943 = vmatprep.subr.mxu0 0.0
    %1944 = vmatpush2.msra.mxu0 0.0
    %1945 = vmatprep.mubr.f32.mxu0 0.0
    %1946 = vmatmul.mubr.f32.gmra.mxu0 %v1879
    %v1947 = vpop.f32.mrf.mxu0
    %v1948 = vadd.f32 0.0, %v1947
    %v1949 = vpop.f32.mrf.mxu0
    %1950 = vdwg.mxu0
    %v1952 = vrot.slane %v1948, 2
    %v1954 = vadd.f32 %v1123, %v1952
    %v1955 = vmul.f32 %v1954, 0.5
    %v1956 = vsel %vm59, %v1954, %v1955
    %v1957 = vtanh.pop %v1956
    %v1958 = vmul.f32 %v1957, 0.5
    %v1959 = vadd.f32 %v1958, 0.5
    %v1960 = vsel %vm59, %v1957, %v1959
    %v1962 = vrot.slane %v1864, 6
    %v1964 = vmul.f32 %v1960, %v1962
    %1966 = vrot.lane.b32.xlu0 %v1960, 64
    %v1967 = vpop.permute.xlu0 %1966
    %v1969 = vmul.f32 %v1960, %v1967
    %1971 = vrot.lane.b32.xlu0 %v1969, 32
    %v1972 = vpop.permute.xlu0 %1971
    %v1974 = vadd.f32 %v1964, %v1972
    %v1975 = vtanh.pop %v1974
    %1977 = vrot.lane.b32.xlu0 %v1975, 64
    %v1978 = vpop.permute.xlu0 %1977
    %v1980 = vmul.f32 %v1960, %v1978
    %1982 = vrot.lane.b32.xlu0 %v1980, 32
    %v1983 = vpop.permute.xlu0 %1982
    %1985 = vst.msk [vmem:[#allocation2 + $0x8] sm:$0xc0] %vm589, %v1983
    %s1986 = scalar_lea.vmem [#allocation3], 64
    %v1987 = vld [vmem:[%s1986] sm:$0xff]
    %v1988 = vld [vmem:[%s1986 + $0x8] sm:$0xff]
    %v1989 = vld [vmem:[%s1986 + $0x10] sm:$0xff]
    %v1990 = vld [vmem:[%s1986 + $0x18] sm:$0xff]
    %s1991 = scalar_lea.vmem [#allocation6], 64
    %v1992 = vld [vmem:[%s1991] sm:$0xff]
    %v1993 = vld [vmem:[%s1991 + $0x8] sm:$0xff]
    %v1994 = vld [vmem:[%s1991 + $0x10] sm:$0xff]
    %v1995 = vld [vmem:[%s1991 + $0x18] sm:$0xff]
    %s1996 = scalar_lea.vmem %s3, 2
    %v1997 = vld [vmem:[%s1996] sm:$0x1]
    %v1998 = vld [vmem:[#allocation2] sm:$0xff]
    %v1999 = vld [vmem:[#allocation2 + $0x8] sm:$0xff]
    %v2001 = vlaneseq
    %v2002 = vshrl.u32 %v2001, 7
    %v2003 = vsub.s32 0, %v2002
    %v2004 = vrot.slane %v1997, %v2003
    %v2007 = vsel %vm52, %v1998, 0
    %v2010 = vsel %vm52, %v1999, 0
    %2012 = vmatprep.subr.mxu0 0.0
    %2013 = vmatpush1.msra.mxu0 0.0
    %2014 = vmatprep.subr.mxu0 0.0
    %2015 = vmatpush1.msra.mxu0 0.0
    %2016 = vmatprep.subr.mxu0 0.0
    %2017 = vmatpush1.msra.mxu0 0.0
    %2018 = vmatprep.subr.mxu0 0.0
    %2019 = vmatpush1.msra.mxu0 0.0
    %2020 = vmatprep.subr.mxu0 0.0
    %2021 = vmatpush1.msra.mxu0 0.0
    %2022 = vmatprep.subr.mxu0 0.0
    %2023 = vmatpush1.msra.mxu0 0.0
    %2024 = vmatprep.subr.mxu0 0.0
    %2025 = vmatpush1.msra.mxu0 0.0
    %2026 = vmatprep.subr.mxu0 0.0
    %2027 = vmatpush1.msra.mxu0 0.0
    %2028 = vmatprep.subr.mxu0 0.0
    %2029 = vmatpush1.msra.mxu0 0.0
    %2030 = vmatprep.subr.mxu0 0.0
    %2031 = vmatpush1.msra.mxu0 0.0
    %2032 = vmatprep.subr.mxu0 0.0
    %2033 = vmatpush1.msra.mxu0 0.0
    %2034 = vmatprep.subr.mxu0 0.0
    %2035 = vmatpush1.msra.mxu0 0.0
    %2036 = vmatprep.subr.mxu0 0.0
    %2037 = vmatpush1.msra.mxu0 %v1990
    %2038 = vmatprep.subr.mxu0 0.0
    %2039 = vmatpush1.msra.mxu0 %v1989
    %2040 = vmatprep.subr.mxu0 0.0
    %2041 = vmatpush1.msra.mxu0 %v1988
    %2042 = vmatprep.subr.mxu0 0.0
    %2043 = vmatpush1.msra.mxu0 %v1987
    %2044 = vmatprep.subr.mxu0 0.0
    %2045 = vmatpush2.msra.mxu0 0.0
    %2046 = vmatprep.subr.mxu0 0.0
    %2047 = vmatpush2.msra.mxu0 0.0
    %2048 = vmatprep.subr.mxu0 0.0
    %2049 = vmatpush2.msra.mxu0 0.0
    %2050 = vmatprep.subr.mxu0 0.0
    %2051 = vmatpush2.msra.mxu0 0.0
    %2052 = vmatprep.subr.mxu0 0.0
    %2053 = vmatpush2.msra.mxu0 0.0
    %2054 = vmatprep.subr.mxu0 0.0
    %2055 = vmatpush2.msra.mxu0 0.0
    %2056 = vmatprep.subr.mxu0 0.0
    %2057 = vmatpush2.msra.mxu0 0.0
    %2058 = vmatprep.subr.mxu0 0.0
    %2059 = vmatpush2.msra.mxu0 0.0
    %2060 = vmatprep.subr.mxu0 0.0
    %2061 = vmatpush2.msra.mxu0 0.0
    %2062 = vmatprep.subr.mxu0 0.0
    %2063 = vmatpush2.msra.mxu0 0.0
    %2064 = vmatprep.subr.mxu0 0.0
    %2065 = vmatpush2.msra.mxu0 0.0
    %2066 = vmatprep.subr.mxu0 0.0
    %2067 = vmatpush2.msra.mxu0 0.0
    %2068 = vmatprep.subr.mxu0 0.0
    %2069 = vmatpush2.msra.mxu0 0.0
    %2070 = vmatprep.subr.mxu0 0.0
    %2071 = vmatpush2.msra.mxu0 0.0
    %2072 = vmatprep.subr.mxu0 0.0
    %2073 = vmatpush2.msra.mxu0 0.0
    %2074 = vmatprep.subr.mxu0 0.0
    %2075 = vmatpush2.msra.mxu0 0.0
    %2076 = vmatprep.mubr.f32.mxu0 0.0
    %2077 = vmatmul.mubr.f32.gmra.mxu0 %v2007
    %v2078 = vpop.f32.mrf.mxu0
    %v2079 = vadd.f32 %v2004, %v2078
    %v2080 = vpop.f32.mrf.mxu0
    %2081 = vmatprep.mubr.f32.mxu0 0.0
    %2082 = vmatmul.mubr.f32.gmra.mxu0 %v2010
    %v2083 = vpop.f32.mrf.mxu0
    %v2084 = vadd.f32 %v2004, %v2083
    %v2085 = vpop.f32.mrf.mxu0
    %2086 = vdwg.mxu0
    %2087 = vmatprep.subr.mxu0 0.0
    %2088 = vmatpush1.msra.mxu0 0.0
    %2089 = vmatprep.subr.mxu0 0.0
    %2090 = vmatpush1.msra.mxu0 0.0
    %2091 = vmatprep.subr.mxu0 0.0
    %2092 = vmatpush1.msra.mxu0 0.0
    %2093 = vmatprep.subr.mxu0 0.0
    %2094 = vmatpush1.msra.mxu0 0.0
    %2095 = vmatprep.subr.mxu0 0.0
    %2096 = vmatpush1.msra.mxu0 0.0
    %2097 = vmatprep.subr.mxu0 0.0
    %2098 = vmatpush1.msra.mxu0 0.0
    %2099 = vmatprep.subr.mxu0 0.0
    %2100 = vmatpush1.msra.mxu0 0.0
    %2101 = vmatprep.subr.mxu0 0.0
    %2102 = vmatpush1.msra.mxu0 0.0
    %2103 = vmatprep.subr.mxu0 0.0
    %2104 = vmatpush1.msra.mxu0 0.0
    %2105 = vmatprep.subr.mxu0 0.0
    %2106 = vmatpush1.msra.mxu0 0.0
    %2107 = vmatprep.subr.mxu0 0.0
    %2108 = vmatpush1.msra.mxu0 0.0
    %2109 = vmatprep.subr.mxu0 0.0
    %2110 = vmatpush1.msra.mxu0 0.0
    %2111 = vmatprep.subr.mxu0 0.0
    %2112 = vmatpush1.msra.mxu0 %v1995
    %2113 = vmatprep.subr.mxu0 0.0
    %2114 = vmatpush1.msra.mxu0 %v1994
    %2115 = vmatprep.subr.mxu0 0.0
    %2116 = vmatpush1.msra.mxu0 %v1993
    %2117 = vmatprep.subr.mxu0 0.0
    %2118 = vmatpush1.msra.mxu0 %v1992
    %2119 = vmatprep.subr.mxu0 0.0
    %2120 = vmatpush2.msra.mxu0 0.0
    %2121 = vmatprep.subr.mxu0 0.0
    %2122 = vmatpush2.msra.mxu0 0.0
    %2123 = vmatprep.subr.mxu0 0.0
    %2124 = vmatpush2.msra.mxu0 0.0
    %2125 = vmatprep.subr.mxu0 0.0
    %2126 = vmatpush2.msra.mxu0 0.0
    %2127 = vmatprep.subr.mxu0 0.0
    %2128 = vmatpush2.msra.mxu0 0.0
    %2129 = vmatprep.subr.mxu0 0.0
    %2130 = vmatpush2.msra.mxu0 0.0
    %2131 = vmatprep.subr.mxu0 0.0
    %2132 = vmatpush2.msra.mxu0 0.0
    %2133 = vmatprep.subr.mxu0 0.0
    %2134 = vmatpush2.msra.mxu0 0.0
    %2135 = vmatprep.subr.mxu0 0.0
    %2136 = vmatpush2.msra.mxu0 0.0
    %2137 = vmatprep.subr.mxu0 0.0
    %2138 = vmatpush2.msra.mxu0 0.0
    %2139 = vmatprep.subr.mxu0 0.0
    %2140 = vmatpush2.msra.mxu0 0.0
    %2141 = vmatprep.subr.mxu0 0.0
    %2142 = vmatpush2.msra.mxu0 0.0
    %2143 = vmatprep.subr.mxu0 0.0
    %2144 = vmatpush2.msra.mxu0 0.0
    %2145 = vmatprep.subr.mxu0 0.0
    %2146 = vmatpush2.msra.mxu0 0.0
    %2147 = vmatprep.subr.mxu0 0.0
    %2148 = vmatpush2.msra.mxu0 0.0
    %2149 = vmatprep.subr.mxu0 0.0
    %2150 = vmatpush2.msra.mxu0 0.0
    %2151 = vmatprep.mubr.f32.mxu0 0.0
    %2152 = vmatmul.mubr.f32.gmra.mxu0 %v159
    %v2153 = vpop.f32.mrf.mxu0
    %v2154 = vadd.f32 0.0, %v2153
    %v2155 = vpop.f32.mrf.mxu0
    %2156 = vdwg.mxu0
    %v2157 = vadd.f32 %v2079, %v2154
    %v2158 = vmul.f32 %v2157, 0.5
    %v2159 = vsel %vm59, %v2157, %v2158
    %v2160 = vtanh.pop %v2159
    %v2161 = vmul.f32 %v2160, 0.5
    %v2162 = vadd.f32 %v2161, 0.5
    %v2163 = vsel %vm59, %v2160, %v2162
    %v2164 = vmul.f32 %v2163, 0.0
    %2166 = vrot.lane.b32.xlu0 %v2163, 64
    %v2167 = vpop.permute.xlu0 %2166
    %v2169 = vmul.f32 %v2163, %v2167
    %2171 = vrot.lane.b32.xlu0 %v2169, 32
    %v2172 = vpop.permute.xlu0 %2171
    %v2174 = vadd.f32 %v2164, %v2172
    %v2175 = vtanh.pop %v2174
    %2177 = vrot.lane.b32.xlu0 %v2175, 64
    %v2178 = vpop.permute.xlu0 %2177
    %v2180 = vmul.f32 %v2163, %v2178
    %2182 = vrot.lane.b32.xlu0 %v2180, 32
    %v2183 = vpop.permute.xlu0 %2182
    %2185 = vst.msk [vmem:[#allocation2] sm:$0x3] %vm259, %v2183
    %v2186 = vsel %vm52, %v2183, 0
    %2188 = vmatprep.subr.mxu0 0.0
    %2189 = vmatpush1.msra.mxu0 0.0
    %2190 = vmatprep.subr.mxu0 0.0
    %2191 = vmatpush1.msra.mxu0 0.0
    %2192 = vmatprep.subr.mxu0 0.0
    %2193 = vmatpush1.msra.mxu0 0.0
    %2194 = vmatprep.subr.mxu0 0.0
    %2195 = vmatpush1.msra.mxu0 0.0
    %2196 = vmatprep.subr.mxu0 0.0
    %2197 = vmatpush1.msra.mxu0 0.0
    %2198 = vmatprep.subr.mxu0 0.0
    %2199 = vmatpush1.msra.mxu0 0.0
    %2200 = vmatprep.subr.mxu0 0.0
    %2201 = vmatpush1.msra.mxu0 0.0
    %2202 = vmatprep.subr.mxu0 0.0
    %2203 = vmatpush1.msra.mxu0 0.0
    %2204 = vmatprep.subr.mxu0 0.0
    %2205 = vmatpush1.msra.mxu0 0.0
    %2206 = vmatprep.subr.mxu0 0.0
    %2207 = vmatpush1.msra.mxu0 0.0
    %2208 = vmatprep.subr.mxu0 0.0
    %2209 = vmatpush1.msra.mxu0 0.0
    %2210 = vmatprep.subr.mxu0 0.0
    %2211 = vmatpush1.msra.mxu0 0.0
    %2212 = vmatprep.subr.mxu0 0.0
    %2213 = vmatpush1.msra.mxu0 %v1995
    %2214 = vmatprep.subr.mxu0 0.0
    %2215 = vmatpush1.msra.mxu0 %v1994
    %2216 = vmatprep.subr.mxu0 0.0
    %2217 = vmatpush1.msra.mxu0 %v1993
    %2218 = vmatprep.subr.mxu0 0.0
    %2219 = vmatpush1.msra.mxu0 %v1992
    %2220 = vmatprep.subr.mxu0 0.0
    %2221 = vmatpush2.msra.mxu0 0.0
    %2222 = vmatprep.subr.mxu0 0.0
    %2223 = vmatpush2.msra.mxu0 0.0
    %2224 = vmatprep.subr.mxu0 0.0
    %2225 = vmatpush2.msra.mxu0 0.0
    %2226 = vmatprep.subr.mxu0 0.0
    %2227 = vmatpush2.msra.mxu0 0.0
    %2228 = vmatprep.subr.mxu0 0.0
    %2229 = vmatpush2.msra.mxu0 0.0
    %2230 = vmatprep.subr.mxu0 0.0
    %2231 = vmatpush2.msra.mxu0 0.0
    %2232 = vmatprep.subr.mxu0 0.0
    %2233 = vmatpush2.msra.mxu0 0.0
    %2234 = vmatprep.subr.mxu0 0.0
    %2235 = vmatpush2.msra.mxu0 0.0
    %2236 = vmatprep.subr.mxu0 0.0
    %2237 = vmatpush2.msra.mxu0 0.0
    %2238 = vmatprep.subr.mxu0 0.0
    %2239 = vmatpush2.msra.mxu0 0.0
    %2240 = vmatprep.subr.mxu0 0.0
    %2241 = vmatpush2.msra.mxu0 0.0
    %2242 = vmatprep.subr.mxu0 0.0
    %2243 = vmatpush2.msra.mxu0 0.0
    %2244 = vmatprep.subr.mxu0 0.0
    %2245 = vmatpush2.msra.mxu0 0.0
    %2246 = vmatprep.subr.mxu0 0.0
    %2247 = vmatpush2.msra.mxu0 0.0
    %2248 = vmatprep.subr.mxu0 0.0
    %2249 = vmatpush2.msra.mxu0 0.0
    %2250 = vmatprep.subr.mxu0 0.0
    %2251 = vmatpush2.msra.mxu0 0.0
    %2252 = vmatprep.mubr.f32.mxu0 0.0
    %2253 = vmatmul.mubr.f32.gmra.mxu0 %v2186
    %v2254 = vpop.f32.mrf.mxu0
    %v2255 = vadd.f32 0.0, %v2254
    %v2256 = vpop.f32.mrf.mxu0
    %2257 = vdwg.mxu0
    %v2259 = vrot.slane %v2255, 6
    %v2261 = vadd.f32 %v2079, %v2259
    %v2262 = vmul.f32 %v2261, 0.5
    %v2263 = vsel %vm59, %v2261, %v2262
    %v2264 = vtanh.pop %v2263
    %v2265 = vmul.f32 %v2264, 0.5
    %v2266 = vadd.f32 %v2265, 0.5
    %v2267 = vsel %vm59, %v2264, %v2266
    %v2269 = vrot.slane %v2174, 6
    %v2271 = vmul.f32 %v2267, %v2269
    %2273 = vrot.lane.b32.xlu0 %v2267, 64
    %v2274 = vpop.permute.xlu0 %2273
    %v2276 = vmul.f32 %v2267, %v2274
    %2278 = vrot.lane.b32.xlu0 %v2276, 32
    %v2279 = vpop.permute.xlu0 %2278
    %v2281 = vadd.f32 %v2271, %v2279
    %v2282 = vtanh.pop %v2281
    %2284 = vrot.lane.b32.xlu0 %v2282, 64
    %v2285 = vpop.permute.xlu0 %2284
    %v2287 = vmul.f32 %v2267, %v2285
    %2289 = vrot.lane.b32.xlu0 %v2287, 32
    %v2290 = vpop.permute.xlu0 %2289
    %2292 = vst.msk [vmem:[#allocation2] sm:$0xc] %vm367, %v2290
    %v2293 = vrot.slane %v2287, 2
    %2294 = vrot.lane.b32.xlu0 %v2293, 32
    %v2295 = vpop.permute.xlu0 %2294
    %v2296 = vsel %vm52, %v2295, 0
    %2298 = vmatprep.subr.mxu0 0.0
    %2299 = vmatpush1.msra.mxu0 0.0
    %2300 = vmatprep.subr.mxu0 0.0
    %2301 = vmatpush1.msra.mxu0 0.0
    %2302 = vmatprep.subr.mxu0 0.0
    %2303 = vmatpush1.msra.mxu0 0.0
    %2304 = vmatprep.subr.mxu0 0.0
    %2305 = vmatpush1.msra.mxu0 0.0
    %2306 = vmatprep.subr.mxu0 0.0
    %2307 = vmatpush1.msra.mxu0 0.0
    %2308 = vmatprep.subr.mxu0 0.0
    %2309 = vmatpush1.msra.mxu0 0.0
    %2310 = vmatprep.subr.mxu0 0.0
    %2311 = vmatpush1.msra.mxu0 0.0
    %2312 = vmatprep.subr.mxu0 0.0
    %2313 = vmatpush1.msra.mxu0 0.0
    %2314 = vmatprep.subr.mxu0 0.0
    %2315 = vmatpush1.msra.mxu0 0.0
    %2316 = vmatprep.subr.mxu0 0.0
    %2317 = vmatpush1.msra.mxu0 0.0
    %2318 = vmatprep.subr.mxu0 0.0
    %2319 = vmatpush1.msra.mxu0 0.0
    %2320 = vmatprep.subr.mxu0 0.0
    %2321 = vmatpush1.msra.mxu0 0.0
    %2322 = vmatprep.subr.mxu0 0.0
    %2323 = vmatpush1.msra.mxu0 %v1995
    %2324 = vmatprep.subr.mxu0 0.0
    %2325 = vmatpush1.msra.mxu0 %v1994
    %2326 = vmatprep.subr.mxu0 0.0
    %2327 = vmatpush1.msra.mxu0 %v1993
    %2328 = vmatprep.subr.mxu0 0.0
    %2329 = vmatpush1.msra.mxu0 %v1992
    %2330 = vmatprep.subr.mxu0 0.0
    %2331 = vmatpush2.msra.mxu0 0.0
    %2332 = vmatprep.subr.mxu0 0.0
    %2333 = vmatpush2.msra.mxu0 0.0
    %2334 = vmatprep.subr.mxu0 0.0
    %2335 = vmatpush2.msra.mxu0 0.0
    %2336 = vmatprep.subr.mxu0 0.0
    %2337 = vmatpush2.msra.mxu0 0.0
    %2338 = vmatprep.subr.mxu0 0.0
    %2339 = vmatpush2.msra.mxu0 0.0
    %2340 = vmatprep.subr.mxu0 0.0
    %2341 = vmatpush2.msra.mxu0 0.0
    %2342 = vmatprep.subr.mxu0 0.0
    %2343 = vmatpush2.msra.mxu0 0.0
    %2344 = vmatprep.subr.mxu0 0.0
    %2345 = vmatpush2.msra.mxu0 0.0
    %2346 = vmatprep.subr.mxu0 0.0
    %2347 = vmatpush2.msra.mxu0 0.0
    %2348 = vmatprep.subr.mxu0 0.0
    %2349 = vmatpush2.msra.mxu0 0.0
    %2350 = vmatprep.subr.mxu0 0.0
    %2351 = vmatpush2.msra.mxu0 0.0
    %2352 = vmatprep.subr.mxu0 0.0
    %2353 = vmatpush2.msra.mxu0 0.0
    %2354 = vmatprep.subr.mxu0 0.0
    %2355 = vmatpush2.msra.mxu0 0.0
    %2356 = vmatprep.subr.mxu0 0.0
    %2357 = vmatpush2.msra.mxu0 0.0
    %2358 = vmatprep.subr.mxu0 0.0
    %2359 = vmatpush2.msra.mxu0 0.0
    %2360 = vmatprep.subr.mxu0 0.0
    %2361 = vmatpush2.msra.mxu0 0.0
    %2362 = vmatprep.mubr.f32.mxu0 0.0
    %2363 = vmatmul.mubr.f32.gmra.mxu0 %v2296
    %v2364 = vpop.f32.mrf.mxu0
    %v2365 = vadd.f32 0.0, %v2364
    %v2366 = vpop.f32.mrf.mxu0
    %2367 = vdwg.mxu0
    %v2369 = vrot.slane %v2365, 4
    %v2371 = vadd.f32 %v2079, %v2369
    %v2372 = vmul.f32 %v2371, 0.5
    %v2373 = vsel %vm59, %v2371, %v2372
    %v2374 = vtanh.pop %v2373
    %v2375 = vmul.f32 %v2374, 0.5
    %v2376 = vadd.f32 %v2375, 0.5
    %v2377 = vsel %vm59, %v2374, %v2376
    %v2379 = vrot.slane %v2281, 6
    %v2381 = vmul.f32 %v2377, %v2379
    %2383 = vrot.lane.b32.xlu0 %v2377, 64
    %v2384 = vpop.permute.xlu0 %2383
    %v2386 = vmul.f32 %v2377, %v2384
    %2388 = vrot.lane.b32.xlu0 %v2386, 32
    %v2389 = vpop.permute.xlu0 %2388
    %v2391 = vadd.f32 %v2381, %v2389
    %v2392 = vtanh.pop %v2391
    %2394 = vrot.lane.b32.xlu0 %v2392, 64
    %v2395 = vpop.permute.xlu0 %2394
    %v2397 = vmul.f32 %v2377, %v2395
    %2399 = vrot.lane.b32.xlu0 %v2397, 32
    %v2400 = vpop.permute.xlu0 %2399
    %2402 = vst.msk [vmem:[#allocation2] sm:$0x30] %vm478, %v2400
    %v2403 = vrot.slane %v2397, 4
    %2404 = vrot.lane.b32.xlu0 %v2403, 32
    %v2405 = vpop.permute.xlu0 %2404
    %v2406 = vsel %vm52, %v2405, 0
    %2408 = vmatprep.subr.mxu0 0.0
    %2409 = vmatpush1.msra.mxu0 0.0
    %2410 = vmatprep.subr.mxu0 0.0
    %2411 = vmatpush1.msra.mxu0 0.0
    %2412 = vmatprep.subr.mxu0 0.0
    %2413 = vmatpush1.msra.mxu0 0.0
    %2414 = vmatprep.subr.mxu0 0.0
    %2415 = vmatpush1.msra.mxu0 0.0
    %2416 = vmatprep.subr.mxu0 0.0
    %2417 = vmatpush1.msra.mxu0 0.0
    %2418 = vmatprep.subr.mxu0 0.0
    %2419 = vmatpush1.msra.mxu0 0.0
    %2420 = vmatprep.subr.mxu0 0.0
    %2421 = vmatpush1.msra.mxu0 0.0
    %2422 = vmatprep.subr.mxu0 0.0
    %2423 = vmatpush1.msra.mxu0 0.0
    %2424 = vmatprep.subr.mxu0 0.0
    %2425 = vmatpush1.msra.mxu0 0.0
    %2426 = vmatprep.subr.mxu0 0.0
    %2427 = vmatpush1.msra.mxu0 0.0
    %2428 = vmatprep.subr.mxu0 0.0
    %2429 = vmatpush1.msra.mxu0 0.0
    %2430 = vmatprep.subr.mxu0 0.0
    %2431 = vmatpush1.msra.mxu0 0.0
    %2432 = vmatprep.subr.mxu0 0.0
    %2433 = vmatpush1.msra.mxu0 %v1995
    %2434 = vmatprep.subr.mxu0 0.0
    %2435 = vmatpush1.msra.mxu0 %v1994
    %2436 = vmatprep.subr.mxu0 0.0
    %2437 = vmatpush1.msra.mxu0 %v1993
    %2438 = vmatprep.subr.mxu0 0.0
    %2439 = vmatpush1.msra.mxu0 %v1992
    %2440 = vmatprep.subr.mxu0 0.0
    %2441 = vmatpush2.msra.mxu0 0.0
    %2442 = vmatprep.subr.mxu0 0.0
    %2443 = vmatpush2.msra.mxu0 0.0
    %2444 = vmatprep.subr.mxu0 0.0
    %2445 = vmatpush2.msra.mxu0 0.0
    %2446 = vmatprep.subr.mxu0 0.0
    %2447 = vmatpush2.msra.mxu0 0.0
    %2448 = vmatprep.subr.mxu0 0.0
    %2449 = vmatpush2.msra.mxu0 0.0
    %2450 = vmatprep.subr.mxu0 0.0
    %2451 = vmatpush2.msra.mxu0 0.0
    %2452 = vmatprep.subr.mxu0 0.0
    %2453 = vmatpush2.msra.mxu0 0.0
    %2454 = vmatprep.subr.mxu0 0.0
    %2455 = vmatpush2.msra.mxu0 0.0
    %2456 = vmatprep.subr.mxu0 0.0
    %2457 = vmatpush2.msra.mxu0 0.0
    %2458 = vmatprep.subr.mxu0 0.0
    %2459 = vmatpush2.msra.mxu0 0.0
    %2460 = vmatprep.subr.mxu0 0.0
    %2461 = vmatpush2.msra.mxu0 0.0
    %2462 = vmatprep.subr.mxu0 0.0
    %2463 = vmatpush2.msra.mxu0 0.0
    %2464 = vmatprep.subr.mxu0 0.0
    %2465 = vmatpush2.msra.mxu0 0.0
    %2466 = vmatprep.subr.mxu0 0.0
    %2467 = vmatpush2.msra.mxu0 0.0
    %2468 = vmatprep.subr.mxu0 0.0
    %2469 = vmatpush2.msra.mxu0 0.0
    %2470 = vmatprep.subr.mxu0 0.0
    %2471 = vmatpush2.msra.mxu0 0.0
    %2472 = vmatprep.mubr.f32.mxu0 0.0
    %2473 = vmatmul.mubr.f32.gmra.mxu0 %v2406
    %v2474 = vpop.f32.mrf.mxu0
    %v2475 = vadd.f32 0.0, %v2474
    %v2476 = vpop.f32.mrf.mxu0
    %2477 = vdwg.mxu0
    %v2479 = vrot.slane %v2475, 2
    %v2481 = vadd.f32 %v2079, %v2479
    %v2482 = vmul.f32 %v2481, 0.5
    %v2483 = vsel %vm59, %v2481, %v2482
    %v2484 = vtanh.pop %v2483
    %v2485 = vmul.f32 %v2484, 0.5
    %v2486 = vadd.f32 %v2485, 0.5
    %v2487 = vsel %vm59, %v2484, %v2486
    %v2489 = vrot.slane %v2391, 6
    %v2491 = vmul.f32 %v2487, %v2489
    %2493 = vrot.lane.b32.xlu0 %v2487, 64
    %v2494 = vpop.permute.xlu0 %2493
    %v2496 = vmul.f32 %v2487, %v2494
    %2498 = vrot.lane.b32.xlu0 %v2496, 32
    %v2499 = vpop.permute.xlu0 %2498
    %v2501 = vadd.f32 %v2491, %v2499
    %v2502 = vtanh.pop %v2501
    %2504 = vrot.lane.b32.xlu0 %v2502, 64
    %v2505 = vpop.permute.xlu0 %2504
    %v2507 = vmul.f32 %v2487, %v2505
    %2509 = vrot.lane.b32.xlu0 %v2507, 32
    %v2510 = vpop.permute.xlu0 %2509
    %2512 = vst.msk [vmem:[#allocation2] sm:$0xc0] %vm589, %v2510
    %v2513 = vrot.slane %v2507, 6
    %2514 = vrot.lane.b32.xlu0 %v2513, 32
    %v2515 = vpop.permute.xlu0 %2514
    %v2516 = vsel %vm52, %v2515, 0
    %2518 = vmatprep.subr.mxu0 0.0
    %2519 = vmatpush1.msra.mxu0 0.0
    %2520 = vmatprep.subr.mxu0 0.0
    %2521 = vmatpush1.msra.mxu0 0.0
    %2522 = vmatprep.subr.mxu0 0.0
    %2523 = vmatpush1.msra.mxu0 0.0
    %2524 = vmatprep.subr.mxu0 0.0
    %2525 = vmatpush1.msra.mxu0 0.0
    %2526 = vmatprep.subr.mxu0 0.0
    %2527 = vmatpush1.msra.mxu0 0.0
    %2528 = vmatprep.subr.mxu0 0.0
    %2529 = vmatpush1.msra.mxu0 0.0
    %2530 = vmatprep.subr.mxu0 0.0
    %2531 = vmatpush1.msra.mxu0 0.0
    %2532 = vmatprep.subr.mxu0 0.0
    %2533 = vmatpush1.msra.mxu0 0.0
    %2534 = vmatprep.subr.mxu0 0.0
    %2535 = vmatpush1.msra.mxu0 0.0
    %2536 = vmatprep.subr.mxu0 0.0
    %2537 = vmatpush1.msra.mxu0 0.0
    %2538 = vmatprep.subr.mxu0 0.0
    %2539 = vmatpush1.msra.mxu0 0.0
    %2540 = vmatprep.subr.mxu0 0.0
    %2541 = vmatpush1.msra.mxu0 0.0
    %2542 = vmatprep.subr.mxu0 0.0
    %2543 = vmatpush1.msra.mxu0 %v1995
    %2544 = vmatprep.subr.mxu0 0.0
    %2545 = vmatpush1.msra.mxu0 %v1994
    %2546 = vmatprep.subr.mxu0 0.0
    %2547 = vmatpush1.msra.mxu0 %v1993
    %2548 = vmatprep.subr.mxu0 0.0
    %2549 = vmatpush1.msra.mxu0 %v1992
    %2550 = vmatprep.subr.mxu0 0.0
    %2551 = vmatpush2.msra.mxu0 0.0
    %2552 = vmatprep.subr.mxu0 0.0
    %2553 = vmatpush2.msra.mxu0 0.0
    %2554 = vmatprep.subr.mxu0 0.0
    %2555 = vmatpush2.msra.mxu0 0.0
    %2556 = vmatprep.subr.mxu0 0.0
    %2557 = vmatpush2.msra.mxu0 0.0
    %2558 = vmatprep.subr.mxu0 0.0
    %2559 = vmatpush2.msra.mxu0 0.0
    %2560 = vmatprep.subr.mxu0 0.0
    %2561 = vmatpush2.msra.mxu0 0.0
    %2562 = vmatprep.subr.mxu0 0.0
    %2563 = vmatpush2.msra.mxu0 0.0
    %2564 = vmatprep.subr.mxu0 0.0
    %2565 = vmatpush2.msra.mxu0 0.0
    %2566 = vmatprep.subr.mxu0 0.0
    %2567 = vmatpush2.msra.mxu0 0.0
    %2568 = vmatprep.subr.mxu0 0.0
    %2569 = vmatpush2.msra.mxu0 0.0
    %2570 = vmatprep.subr.mxu0 0.0
    %2571 = vmatpush2.msra.mxu0 0.0
    %2572 = vmatprep.subr.mxu0 0.0
    %2573 = vmatpush2.msra.mxu0 0.0
    %2574 = vmatprep.subr.mxu0 0.0
    %2575 = vmatpush2.msra.mxu0 0.0
    %2576 = vmatprep.subr.mxu0 0.0
    %2577 = vmatpush2.msra.mxu0 0.0
    %2578 = vmatprep.subr.mxu0 0.0
    %2579 = vmatpush2.msra.mxu0 0.0
    %2580 = vmatprep.subr.mxu0 0.0
    %2581 = vmatpush2.msra.mxu0 0.0
    %2582 = vmatprep.mubr.f32.mxu0 0.0
    %2583 = vmatmul.mubr.f32.gmra.mxu0 %v2516
    %v2584 = vpop.f32.mrf.mxu0
    %v2585 = vadd.f32 0.0, %v2584
    %v2586 = vpop.f32.mrf.mxu0
    %2587 = vdwg.mxu0
    %v2588 = vadd.f32 %v2084, %v2585
    %v2589 = vmul.f32 %v2588, 0.5
    %v2590 = vsel %vm59, %v2588, %v2589
    %v2591 = vtanh.pop %v2590
    %v2592 = vmul.f32 %v2591, 0.5
    %v2593 = vadd.f32 %v2592, 0.5
    %v2594 = vsel %vm59, %v2591, %v2593
    %v2596 = vrot.slane %v2501, 6
    %v2598 = vmul.f32 %v2594, %v2596
    %2600 = vrot.lane.b32.xlu0 %v2594, 64
    %v2601 = vpop.permute.xlu0 %2600
    %v2603 = vmul.f32 %v2594, %v2601
    %2605 = vrot.lane.b32.xlu0 %v2603, 32
    %v2606 = vpop.permute.xlu0 %2605
    %v2608 = vadd.f32 %v2598, %v2606
    %v2609 = vtanh.pop %v2608
    %2611 = vrot.lane.b32.xlu0 %v2609, 64
    %v2612 = vpop.permute.xlu0 %2611
    %v2614 = vmul.f32 %v2594, %v2612
    %2616 = vrot.lane.b32.xlu0 %v2614, 32
    %v2617 = vpop.permute.xlu0 %2616
    %2619 = vst.msk [vmem:[#allocation2 + $0x8] sm:$0x3] %vm259, %v2617
    %v2620 = vsel %vm52, %v2617, 0
    %2622 = vmatprep.subr.mxu0 0.0
    %2623 = vmatpush1.msra.mxu0 0.0
    %2624 = vmatprep.subr.mxu0 0.0
    %2625 = vmatpush1.msra.mxu0 0.0
    %2626 = vmatprep.subr.mxu0 0.0
    %2627 = vmatpush1.msra.mxu0 0.0
    %2628 = vmatprep.subr.mxu0 0.0
    %2629 = vmatpush1.msra.mxu0 0.0
    %2630 = vmatprep.subr.mxu0 0.0
    %2631 = vmatpush1.msra.mxu0 0.0
    %2632 = vmatprep.subr.mxu0 0.0
    %2633 = vmatpush1.msra.mxu0 0.0
    %2634 = vmatprep.subr.mxu0 0.0
    %2635 = vmatpush1.msra.mxu0 0.0
    %2636 = vmatprep.subr.mxu0 0.0
    %2637 = vmatpush1.msra.mxu0 0.0
    %2638 = vmatprep.subr.mxu0 0.0
    %2639 = vmatpush1.msra.mxu0 0.0
    %2640 = vmatprep.subr.mxu0 0.0
    %2641 = vmatpush1.msra.mxu0 0.0
    %2642 = vmatprep.subr.mxu0 0.0
    %2643 = vmatpush1.msra.mxu0 0.0
    %2644 = vmatprep.subr.mxu0 0.0
    %2645 = vmatpush1.msra.mxu0 0.0
    %2646 = vmatprep.subr.mxu0 0.0
    %2647 = vmatpush1.msra.mxu0 %v1995
    %2648 = vmatprep.subr.mxu0 0.0
    %2649 = vmatpush1.msra.mxu0 %v1994
    %2650 = vmatprep.subr.mxu0 0.0
    %2651 = vmatpush1.msra.mxu0 %v1993
    %2652 = vmatprep.subr.mxu0 0.0
    %2653 = vmatpush1.msra.mxu0 %v1992
    %2654 = vmatprep.subr.mxu0 0.0
    %2655 = vmatpush2.msra.mxu0 0.0
    %2656 = vmatprep.subr.mxu0 0.0
    %2657 = vmatpush2.msra.mxu0 0.0
    %2658 = vmatprep.subr.mxu0 0.0
    %2659 = vmatpush2.msra.mxu0 0.0
    %2660 = vmatprep.subr.mxu0 0.0
    %2661 = vmatpush2.msra.mxu0 0.0
    %2662 = vmatprep.subr.mxu0 0.0
    %2663 = vmatpush2.msra.mxu0 0.0
    %2664 = vmatprep.subr.mxu0 0.0
    %2665 = vmatpush2.msra.mxu0 0.0
    %2666 = vmatprep.subr.mxu0 0.0
    %2667 = vmatpush2.msra.mxu0 0.0
    %2668 = vmatprep.subr.mxu0 0.0
    %2669 = vmatpush2.msra.mxu0 0.0
    %2670 = vmatprep.subr.mxu0 0.0
    %2671 = vmatpush2.msra.mxu0 0.0
    %2672 = vmatprep.subr.mxu0 0.0
    %2673 = vmatpush2.msra.mxu0 0.0
    %2674 = vmatprep.subr.mxu0 0.0
    %2675 = vmatpush2.msra.mxu0 0.0
    %2676 = vmatprep.subr.mxu0 0.0
    %2677 = vmatpush2.msra.mxu0 0.0
    %2678 = vmatprep.subr.mxu0 0.0
    %2679 = vmatpush2.msra.mxu0 0.0
    %2680 = vmatprep.subr.mxu0 0.0
    %2681 = vmatpush2.msra.mxu0 0.0
    %2682 = vmatprep.subr.mxu0 0.0
    %2683 = vmatpush2.msra.mxu0 0.0
    %2684 = vmatprep.subr.mxu0 0.0
    %2685 = vmatpush2.msra.mxu0 0.0
    %2686 = vmatprep.mubr.f32.mxu0 0.0
    %2687 = vmatmul.mubr.f32.gmra.mxu0 %v2620
    %v2688 = vpop.f32.mrf.mxu0
    %v2689 = vadd.f32 0.0, %v2688
    %v2690 = vpop.f32.mrf.mxu0
    %2691 = vdwg.mxu0
    %v2693 = vrot.slane %v2689, 6
    %v2695 = vadd.f32 %v2084, %v2693
    %v2696 = vmul.f32 %v2695, 0.5
    %v2697 = vsel %vm59, %v2695, %v2696
    %v2698 = vtanh.pop %v2697
    %v2699 = vmul.f32 %v2698, 0.5
    %v2700 = vadd.f32 %v2699, 0.5
    %v2701 = vsel %vm59, %v2698, %v2700
    %v2703 = vrot.slane %v2608, 6
    %v2705 = vmul.f32 %v2701, %v2703
    %2707 = vrot.lane.b32.xlu0 %v2701, 64
    %v2708 = vpop.permute.xlu0 %2707
    %v2710 = vmul.f32 %v2701, %v2708
    %2712 = vrot.lane.b32.xlu0 %v2710, 32
    %v2713 = vpop.permute.xlu0 %2712
    %v2715 = vadd.f32 %v2705, %v2713
    %v2716 = vtanh.pop %v2715
    %2718 = vrot.lane.b32.xlu0 %v2716, 64
    %v2719 = vpop.permute.xlu0 %2718
    %v2721 = vmul.f32 %v2701, %v2719
    %2723 = vrot.lane.b32.xlu0 %v2721, 32
    %v2724 = vpop.permute.xlu0 %2723
    %2726 = vst.msk [vmem:[#allocation2 + $0x8] sm:$0xc] %vm367, %v2724
    %v2727 = vrot.slane %v2721, 2
    %2728 = vrot.lane.b32.xlu0 %v2727, 32
    %v2729 = vpop.permute.xlu0 %2728
    %v2730 = vsel %vm52, %v2729, 0
    %2732 = vmatprep.subr.mxu0 0.0
    %2733 = vmatpush1.msra.mxu0 0.0
    %2734 = vmatprep.subr.mxu0 0.0
    %2735 = vmatpush1.msra.mxu0 0.0
    %2736 = vmatprep.subr.mxu0 0.0
    %2737 = vmatpush1.msra.mxu0 0.0
    %2738 = vmatprep.subr.mxu0 0.0
    %2739 = vmatpush1.msra.mxu0 0.0
    %2740 = vmatprep.subr.mxu0 0.0
    %2741 = vmatpush1.msra.mxu0 0.0
    %2742 = vmatprep.subr.mxu0 0.0
    %2743 = vmatpush1.msra.mxu0 0.0
    %2744 = vmatprep.subr.mxu0 0.0
    %2745 = vmatpush1.msra.mxu0 0.0
    %2746 = vmatprep.subr.mxu0 0.0
    %2747 = vmatpush1.msra.mxu0 0.0
    %2748 = vmatprep.subr.mxu0 0.0
    %2749 = vmatpush1.msra.mxu0 0.0
    %2750 = vmatprep.subr.mxu0 0.0
    %2751 = vmatpush1.msra.mxu0 0.0
    %2752 = vmatprep.subr.mxu0 0.0
    %2753 = vmatpush1.msra.mxu0 0.0
    %2754 = vmatprep.subr.mxu0 0.0
    %2755 = vmatpush1.msra.mxu0 0.0
    %2756 = vmatprep.subr.mxu0 0.0
    %2757 = vmatpush1.msra.mxu0 %v1995
    %2758 = vmatprep.subr.mxu0 0.0
    %2759 = vmatpush1.msra.mxu0 %v1994
    %2760 = vmatprep.subr.mxu0 0.0
    %2761 = vmatpush1.msra.mxu0 %v1993
    %2762 = vmatprep.subr.mxu0 0.0
    %2763 = vmatpush1.msra.mxu0 %v1992
    %2764 = vmatprep.subr.mxu0 0.0
    %2765 = vmatpush2.msra.mxu0 0.0
    %2766 = vmatprep.subr.mxu0 0.0
    %2767 = vmatpush2.msra.mxu0 0.0
    %2768 = vmatprep.subr.mxu0 0.0
    %2769 = vmatpush2.msra.mxu0 0.0
    %2770 = vmatprep.subr.mxu0 0.0
    %2771 = vmatpush2.msra.mxu0 0.0
    %2772 = vmatprep.subr.mxu0 0.0
    %2773 = vmatpush2.msra.mxu0 0.0
    %2774 = vmatprep.subr.mxu0 0.0
    %2775 = vmatpush2.msra.mxu0 0.0
    %2776 = vmatprep.subr.mxu0 0.0
    %2777 = vmatpush2.msra.mxu0 0.0
    %2778 = vmatprep.subr.mxu0 0.0
    %2779 = vmatpush2.msra.mxu0 0.0
    %2780 = vmatprep.subr.mxu0 0.0
    %2781 = vmatpush2.msra.mxu0 0.0
    %2782 = vmatprep.subr.mxu0 0.0
    %2783 = vmatpush2.msra.mxu0 0.0
    %2784 = vmatprep.subr.mxu0 0.0
    %2785 = vmatpush2.msra.mxu0 0.0
    %2786 = vmatprep.subr.mxu0 0.0
    %2787 = vmatpush2.msra.mxu0 0.0
    %2788 = vmatprep.subr.mxu0 0.0
    %2789 = vmatpush2.msra.mxu0 0.0
    %2790 = vmatprep.subr.mxu0 0.0
    %2791 = vmatpush2.msra.mxu0 0.0
    %2792 = vmatprep.subr.mxu0 0.0
    %2793 = vmatpush2.msra.mxu0 0.0
    %2794 = vmatprep.subr.mxu0 0.0
    %2795 = vmatpush2.msra.mxu0 0.0
    %2796 = vmatprep.mubr.f32.mxu0 0.0
    %2797 = vmatmul.mubr.f32.gmra.mxu0 %v2730
    %v2798 = vpop.f32.mrf.mxu0
    %v2799 = vadd.f32 0.0, %v2798
    %v2800 = vpop.f32.mrf.mxu0
    %2801 = vdwg.mxu0
    %v2803 = vrot.slane %v2799, 4
    %v2805 = vadd.f32 %v2084, %v2803
    %v2806 = vmul.f32 %v2805, 0.5
    %v2807 = vsel %vm59, %v2805, %v2806
    %v2808 = vtanh.pop %v2807
    %v2809 = vmul.f32 %v2808, 0.5
    %v2810 = vadd.f32 %v2809, 0.5
    %v2811 = vsel %vm59, %v2808, %v2810
    %v2813 = vrot.slane %v2715, 6
    %v2815 = vmul.f32 %v2811, %v2813
    %2817 = vrot.lane.b32.xlu0 %v2811, 64
    %v2818 = vpop.permute.xlu0 %2817
    %v2820 = vmul.f32 %v2811, %v2818
    %2822 = vrot.lane.b32.xlu0 %v2820, 32
    %v2823 = vpop.permute.xlu0 %2822
    %v2825 = vadd.f32 %v2815, %v2823
    %v2826 = vtanh.pop %v2825
    %2828 = vrot.lane.b32.xlu0 %v2826, 64
    %v2829 = vpop.permute.xlu0 %2828
    %v2831 = vmul.f32 %v2811, %v2829
    %2833 = vrot.lane.b32.xlu0 %v2831, 32
    %v2834 = vpop.permute.xlu0 %2833
    %2836 = vst.msk [vmem:[#allocation2 + $0x8] sm:$0x30] %vm478, %v2834
    %v2837 = vrot.slane %v2831, 4
    %2838 = vrot.lane.b32.xlu0 %v2837, 32
    %v2839 = vpop.permute.xlu0 %2838
    %v2840 = vsel %vm52, %v2839, 0
    %2842 = vmatprep.subr.mxu0 0.0
    %2843 = vmatpush1.msra.mxu0 0.0
    %2844 = vmatprep.subr.mxu0 0.0
    %2845 = vmatpush1.msra.mxu0 0.0
    %2846 = vmatprep.subr.mxu0 0.0
    %2847 = vmatpush1.msra.mxu0 0.0
    %2848 = vmatprep.subr.mxu0 0.0
    %2849 = vmatpush1.msra.mxu0 0.0
    %2850 = vmatprep.subr.mxu0 0.0
    %2851 = vmatpush1.msra.mxu0 0.0
    %2852 = vmatprep.subr.mxu0 0.0
    %2853 = vmatpush1.msra.mxu0 0.0
    %2854 = vmatprep.subr.mxu0 0.0
    %2855 = vmatpush1.msra.mxu0 0.0
    %2856 = vmatprep.subr.mxu0 0.0
    %2857 = vmatpush1.msra.mxu0 0.0
    %2858 = vmatprep.subr.mxu0 0.0
    %2859 = vmatpush1.msra.mxu0 0.0
    %2860 = vmatprep.subr.mxu0 0.0
    %2861 = vmatpush1.msra.mxu0 0.0
    %2862 = vmatprep.subr.mxu0 0.0
    %2863 = vmatpush1.msra.mxu0 0.0
    %2864 = vmatprep.subr.mxu0 0.0
    %2865 = vmatpush1.msra.mxu0 0.0
    %2866 = vmatprep.subr.mxu0 0.0
    %2867 = vmatpush1.msra.mxu0 %v1995
    %2868 = vmatprep.subr.mxu0 0.0
    %2869 = vmatpush1.msra.mxu0 %v1994
    %2870 = vmatprep.subr.mxu0 0.0
    %2871 = vmatpush1.msra.mxu0 %v1993
    %2872 = vmatprep.subr.mxu0 0.0
    %2873 = vmatpush1.msra.mxu0 %v1992
    %2874 = vmatprep.subr.mxu0 0.0
    %2875 = vmatpush2.msra.mxu0 0.0
    %2876 = vmatprep.subr.mxu0 0.0
    %2877 = vmatpush2.msra.mxu0 0.0
    %2878 = vmatprep.subr.mxu0 0.0
    %2879 = vmatpush2.msra.mxu0 0.0
    %2880 = vmatprep.subr.mxu0 0.0
    %2881 = vmatpush2.msra.mxu0 0.0
    %2882 = vmatprep.subr.mxu0 0.0
    %2883 = vmatpush2.msra.mxu0 0.0
    %2884 = vmatprep.subr.mxu0 0.0
    %2885 = vmatpush2.msra.mxu0 0.0
    %2886 = vmatprep.subr.mxu0 0.0
    %2887 = vmatpush2.msra.mxu0 0.0
    %2888 = vmatprep.subr.mxu0 0.0
    %2889 = vmatpush2.msra.mxu0 0.0
    %2890 = vmatprep.subr.mxu0 0.0
    %2891 = vmatpush2.msra.mxu0 0.0
    %2892 = vmatprep.subr.mxu0 0.0
    %2893 = vmatpush2.msra.mxu0 0.0
    %2894 = vmatprep.subr.mxu0 0.0
    %2895 = vmatpush2.msra.mxu0 0.0
    %2896 = vmatprep.subr.mxu0 0.0
    %2897 = vmatpush2.msra.mxu0 0.0
    %2898 = vmatprep.subr.mxu0 0.0
    %2899 = vmatpush2.msra.mxu0 0.0
    %2900 = vmatprep.subr.mxu0 0.0
    %2901 = vmatpush2.msra.mxu0 0.0
    %2902 = vmatprep.subr.mxu0 0.0
    %2903 = vmatpush2.msra.mxu0 0.0
    %2904 = vmatprep.subr.mxu0 0.0
    %2905 = vmatpush2.msra.mxu0 0.0
    %2906 = vmatprep.mubr.f32.mxu0 0.0
    %2907 = vmatmul.mubr.f32.gmra.mxu0 %v2840
    %v2908 = vpop.f32.mrf.mxu0
    %v2909 = vadd.f32 0.0, %v2908
    %v2910 = vpop.f32.mrf.mxu0
    %2911 = vdwg.mxu0
    %v2913 = vrot.slane %v2909, 2
    %v2915 = vadd.f32 %v2084, %v2913
    %v2916 = vmul.f32 %v2915, 0.5
    %v2917 = vsel %vm59, %v2915, %v2916
    %v2918 = vtanh.pop %v2917
    %v2919 = vmul.f32 %v2918, 0.5
    %v2920 = vadd.f32 %v2919, 0.5
    %v2921 = vsel %vm59, %v2918, %v2920
    %v2923 = vrot.slane %v2825, 6
    %v2925 = vmul.f32 %v2921, %v2923
    %2927 = vrot.lane.b32.xlu0 %v2921, 64
    %v2928 = vpop.permute.xlu0 %2927
    %v2930 = vmul.f32 %v2921, %v2928
    %2932 = vrot.lane.b32.xlu0 %v2930, 32
    %v2933 = vpop.permute.xlu0 %2932
    %v2935 = vadd.f32 %v2925, %v2933
    %v2936 = vtanh.pop %v2935
    %2938 = vrot.lane.b32.xlu0 %v2936, 64
    %v2939 = vpop.permute.xlu0 %2938
    %v2941 = vmul.f32 %v2921, %v2939
    %2943 = vrot.lane.b32.xlu0 %v2941, 32
    %v2944 = vpop.permute.xlu0 %2943
    %2946 = vst.msk [vmem:[#allocation2 + $0x8] sm:$0xc0] %vm589, %v2944
    %s2947 = scalar_lea.vmem [#allocation3], 96
    %v2948 = vld [vmem:[%s2947] sm:$0xff]
    %v2949 = vld [vmem:[%s2947 + $0x8] sm:$0xff]
    %v2950 = vld [vmem:[%s2947 + $0x10] sm:$0xff]
    %v2951 = vld [vmem:[%s2947 + $0x18] sm:$0xff]
    %s2952 = scalar_lea.vmem [#allocation6], 96
    %v2953 = vld [vmem:[%s2952] sm:$0xff]
    %v2954 = vld [vmem:[%s2952 + $0x8] sm:$0xff]
    %v2955 = vld [vmem:[%s2952 + $0x10] sm:$0xff]
    %v2956 = vld [vmem:[%s2952 + $0x18] sm:$0xff]
    %s2957 = scalar_lea.vmem %s3, 3
    %v2958 = vld [vmem:[%s2957] sm:$0x1]
    %v2959 = vld [vmem:[#allocation2] sm:$0xff]
    %v2960 = vld [vmem:[#allocation2 + $0x8] sm:$0xff]
    %v2962 = vlaneseq
    %v2963 = vshrl.u32 %v2962, 7
    %v2964 = vsub.s32 0, %v2963
    %v2965 = vrot.slane %v2958, %v2964
    %v2968 = vsel %vm52, %v2959, 0
    %v2971 = vsel %vm52, %v2960, 0
    %2973 = vmatprep.subr.mxu0 0.0
    %2974 = vmatpush1.msra.mxu0 0.0
    %2975 = vmatprep.subr.mxu0 0.0
    %2976 = vmatpush1.msra.mxu0 0.0
    %2977 = vmatprep.subr.mxu0 0.0
    %2978 = vmatpush1.msra.mxu0 0.0
    %2979 = vmatprep.subr.mxu0 0.0
    %2980 = vmatpush1.msra.mxu0 0.0
    %2981 = vmatprep.subr.mxu0 0.0
    %2982 = vmatpush1.msra.mxu0 0.0
    %2983 = vmatprep.subr.mxu0 0.0
    %2984 = vmatpush1.msra.mxu0 0.0
    %2985 = vmatprep.subr.mxu0 0.0
    %2986 = vmatpush1.msra.mxu0 0.0
    %2987 = vmatprep.subr.mxu0 0.0
    %2988 = vmatpush1.msra.mxu0 0.0
    %2989 = vmatprep.subr.mxu0 0.0
    %2990 = vmatpush1.msra.mxu0 0.0
    %2991 = vmatprep.subr.mxu0 0.0
    %2992 = vmatpush1.msra.mxu0 0.0
    %2993 = vmatprep.subr.mxu0 0.0
    %2994 = vmatpush1.msra.mxu0 0.0
    %2995 = vmatprep.subr.mxu0 0.0
    %2996 = vmatpush1.msra.mxu0 0.0
    %2997 = vmatprep.subr.mxu0 0.0
    %2998 = vmatpush1.msra.mxu0 %v2951
    %2999 = vmatprep.subr.mxu0 0.0
    %3000 = vmatpush1.msra.mxu0 %v2950
    %3001 = vmatprep.subr.mxu0 0.0
    %3002 = vmatpush1.msra.mxu0 %v2949
    %3003 = vmatprep.subr.mxu0 0.0
    %3004 = vmatpush1.msra.mxu0 %v2948
    %3005 = vmatprep.subr.mxu0 0.0
    %3006 = vmatpush2.msra.mxu0 0.0
    %3007 = vmatprep.subr.mxu0 0.0
    %3008 = vmatpush2.msra.mxu0 0.0
    %3009 = vmatprep.subr.mxu0 0.0
    %3010 = vmatpush2.msra.mxu0 0.0
    %3011 = vmatprep.subr.mxu0 0.0
    %3012 = vmatpush2.msra.mxu0 0.0
    %3013 = vmatprep.subr.mxu0 0.0
    %3014 = vmatpush2.msra.mxu0 0.0
    %3015 = vmatprep.subr.mxu0 0.0
    %3016 = vmatpush2.msra.mxu0 0.0
    %3017 = vmatprep.subr.mxu0 0.0
    %3018 = vmatpush2.msra.mxu0 0.0
    %3019 = vmatprep.subr.mxu0 0.0
    %3020 = vmatpush2.msra.mxu0 0.0
    %3021 = vmatprep.subr.mxu0 0.0
    %3022 = vmatpush2.msra.mxu0 0.0
    %3023 = vmatprep.subr.mxu0 0.0
    %3024 = vmatpush2.msra.mxu0 0.0
    %3025 = vmatprep.subr.mxu0 0.0
    %3026 = vmatpush2.msra.mxu0 0.0
    %3027 = vmatprep.subr.mxu0 0.0
    %3028 = vmatpush2.msra.mxu0 0.0
    %3029 = vmatprep.subr.mxu0 0.0
    %3030 = vmatpush2.msra.mxu0 0.0
    %3031 = vmatprep.subr.mxu0 0.0
    %3032 = vmatpush2.msra.mxu0 0.0
    %3033 = vmatprep.subr.mxu0 0.0
    %3034 = vmatpush2.msra.mxu0 0.0
    %3035 = vmatprep.subr.mxu0 0.0
    %3036 = vmatpush2.msra.mxu0 0.0
    %3037 = vmatprep.mubr.f32.mxu0 0.0
    %3038 = vmatmul.mubr.f32.gmra.mxu0 %v2968
    %v3039 = vpop.f32.mrf.mxu0
    %v3040 = vadd.f32 %v2965, %v3039
    %v3041 = vpop.f32.mrf.mxu0
    %3042 = vmatprep.mubr.f32.mxu0 0.0
    %3043 = vmatmul.mubr.f32.gmra.mxu0 %v2971
    %v3044 = vpop.f32.mrf.mxu0
    %v3045 = vadd.f32 %v2965, %v3044
    %v3046 = vpop.f32.mrf.mxu0
    %3047 = vdwg.mxu0
    %3048 = vmatprep.subr.mxu0 0.0
    %3049 = vmatpush1.msra.mxu0 0.0
    %3050 = vmatprep.subr.mxu0 0.0
    %3051 = vmatpush1.msra.mxu0 0.0
    %3052 = vmatprep.subr.mxu0 0.0
    %3053 = vmatpush1.msra.mxu0 0.0
    %3054 = vmatprep.subr.mxu0 0.0
    %3055 = vmatpush1.msra.mxu0 0.0
    %3056 = vmatprep.subr.mxu0 0.0
    %3057 = vmatpush1.msra.mxu0 0.0
    %3058 = vmatprep.subr.mxu0 0.0
    %3059 = vmatpush1.msra.mxu0 0.0
    %3060 = vmatprep.subr.mxu0 0.0
    %3061 = vmatpush1.msra.mxu0 0.0
    %3062 = vmatprep.subr.mxu0 0.0
    %3063 = vmatpush1.msra.mxu0 0.0
    %3064 = vmatprep.subr.mxu0 0.0
    %3065 = vmatpush1.msra.mxu0 0.0
    %3066 = vmatprep.subr.mxu0 0.0
    %3067 = vmatpush1.msra.mxu0 0.0
    %3068 = vmatprep.subr.mxu0 0.0
    %3069 = vmatpush1.msra.mxu0 0.0
    %3070 = vmatprep.subr.mxu0 0.0
    %3071 = vmatpush1.msra.mxu0 0.0
    %3072 = vmatprep.subr.mxu0 0.0
    %3073 = vmatpush1.msra.mxu0 %v2956
    %3074 = vmatprep.subr.mxu0 0.0
    %3075 = vmatpush1.msra.mxu0 %v2955
    %3076 = vmatprep.subr.mxu0 0.0
    %3077 = vmatpush1.msra.mxu0 %v2954
    %3078 = vmatprep.subr.mxu0 0.0
    %3079 = vmatpush1.msra.mxu0 %v2953
    %3080 = vmatprep.subr.mxu0 0.0
    %3081 = vmatpush2.msra.mxu0 0.0
    %3082 = vmatprep.subr.mxu0 0.0
    %3083 = vmatpush2.msra.mxu0 0.0
    %3084 = vmatprep.subr.mxu0 0.0
    %3085 = vmatpush2.msra.mxu0 0.0
    %3086 = vmatprep.subr.mxu0 0.0
    %3087 = vmatpush2.msra.mxu0 0.0
    %3088 = vmatprep.subr.mxu0 0.0
    %3089 = vmatpush2.msra.mxu0 0.0
    %3090 = vmatprep.subr.mxu0 0.0
    %3091 = vmatpush2.msra.mxu0 0.0
    %3092 = vmatprep.subr.mxu0 0.0
    %3093 = vmatpush2.msra.mxu0 0.0
    %3094 = vmatprep.subr.mxu0 0.0
    %3095 = vmatpush2.msra.mxu0 0.0
    %3096 = vmatprep.subr.mxu0 0.0
    %3097 = vmatpush2.msra.mxu0 0.0
    %3098 = vmatprep.subr.mxu0 0.0
    %3099 = vmatpush2.msra.mxu0 0.0
    %3100 = vmatprep.subr.mxu0 0.0
    %3101 = vmatpush2.msra.mxu0 0.0
    %3102 = vmatprep.subr.mxu0 0.0
    %3103 = vmatpush2.msra.mxu0 0.0
    %3104 = vmatprep.subr.mxu0 0.0
    %3105 = vmatpush2.msra.mxu0 0.0
    %3106 = vmatprep.subr.mxu0 0.0
    %3107 = vmatpush2.msra.mxu0 0.0
    %3108 = vmatprep.subr.mxu0 0.0
    %3109 = vmatpush2.msra.mxu0 0.0
    %3110 = vmatprep.subr.mxu0 0.0
    %3111 = vmatpush2.msra.mxu0 0.0
    %3112 = vmatprep.mubr.f32.mxu0 0.0
    %3113 = vmatmul.mubr.f32.gmra.mxu0 %v159
    %v3114 = vpop.f32.mrf.mxu0
    %v3115 = vadd.f32 0.0, %v3114
    %v3116 = vpop.f32.mrf.mxu0
    %3117 = vdwg.mxu0
    %v3118 = vadd.f32 %v3040, %v3115
    %v3119 = vmul.f32 %v3118, 0.5
    %v3120 = vsel %vm59, %v3118, %v3119
    %v3121 = vtanh.pop %v3120
    %v3122 = vmul.f32 %v3121, 0.5
    %v3123 = vadd.f32 %v3122, 0.5
    %v3124 = vsel %vm59, %v3121, %v3123
    %v3125 = vmul.f32 %v3124, 0.0
    %3127 = vrot.lane.b32.xlu0 %v3124, 64
    %v3128 = vpop.permute.xlu0 %3127
    %v3130 = vmul.f32 %v3124, %v3128
    %3132 = vrot.lane.b32.xlu0 %v3130, 32
    %v3133 = vpop.permute.xlu0 %3132
    %v3135 = vadd.f32 %v3125, %v3133
    %v3136 = vtanh.pop %v3135
    %3138 = vrot.lane.b32.xlu0 %v3136, 64
    %v3139 = vpop.permute.xlu0 %3138
    %v3141 = vmul.f32 %v3124, %v3139
    %3143 = vrot.lane.b32.xlu0 %v3141, 32
    %v3144 = vpop.permute.xlu0 %3143
    %3146 = vst.msk [vmem:[#allocation2] sm:$0x3] %vm259, %v3144
    %v3147 = vsel %vm52, %v3144, 0
    %3149 = vmatprep.subr.mxu0 0.0
    %3150 = vmatpush1.msra.mxu0 0.0
    %3151 = vmatprep.subr.mxu0 0.0
    %3152 = vmatpush1.msra.mxu0 0.0
    %3153 = vmatprep.subr.mxu0 0.0
    %3154 = vmatpush1.msra.mxu0 0.0
    %3155 = vmatprep.subr.mxu0 0.0
    %3156 = vmatpush1.msra.mxu0 0.0
    %3157 = vmatprep.subr.mxu0 0.0
    %3158 = vmatpush1.msra.mxu0 0.0
    %3159 = vmatprep.subr.mxu0 0.0
    %3160 = vmatpush1.msra.mxu0 0.0
    %3161 = vmatprep.subr.mxu0 0.0
    %3162 = vmatpush1.msra.mxu0 0.0
    %3163 = vmatprep.subr.mxu0 0.0
    %3164 = vmatpush1.msra.mxu0 0.0
    %3165 = vmatprep.subr.mxu0 0.0
    %3166 = vmatpush1.msra.mxu0 0.0
    %3167 = vmatprep.subr.mxu0 0.0
    %3168 = vmatpush1.msra.mxu0 0.0
    %3169 = vmatprep.subr.mxu0 0.0
    %3170 = vmatpush1.msra.mxu0 0.0
    %3171 = vmatprep.subr.mxu0 0.0
    %3172 = vmatpush1.msra.mxu0 0.0
    %3173 = vmatprep.subr.mxu0 0.0
    %3174 = vmatpush1.msra.mxu0 %v2956
    %3175 = vmatprep.subr.mxu0 0.0
    %3176 = vmatpush1.msra.mxu0 %v2955
    %3177 = vmatprep.subr.mxu0 0.0
    %3178 = vmatpush1.msra.mxu0 %v2954
    %3179 = vmatprep.subr.mxu0 0.0
    %3180 = vmatpush1.msra.mxu0 %v2953
    %3181 = vmatprep.subr.mxu0 0.0
    %3182 = vmatpush2.msra.mxu0 0.0
    %3183 = vmatprep.subr.mxu0 0.0
    %3184 = vmatpush2.msra.mxu0 0.0
    %3185 = vmatprep.subr.mxu0 0.0
    %3186 = vmatpush2.msra.mxu0 0.0
    %3187 = vmatprep.subr.mxu0 0.0
    %3188 = vmatpush2.msra.mxu0 0.0
    %3189 = vmatprep.subr.mxu0 0.0
    %3190 = vmatpush2.msra.mxu0 0.0
    %3191 = vmatprep.subr.mxu0 0.0
    %3192 = vmatpush2.msra.mxu0 0.0
    %3193 = vmatprep.subr.mxu0 0.0
    %3194 = vmatpush2.msra.mxu0 0.0
    %3195 = vmatprep.subr.mxu0 0.0
    %3196 = vmatpush2.msra.mxu0 0.0
    %3197 = vmatprep.subr.mxu0 0.0
    %3198 = vmatpush2.msra.mxu0 0.0
    %3199 = vmatprep.subr.mxu0 0.0
    %3200 = vmatpush2.msra.mxu0 0.0
    %3201 = vmatprep.subr.mxu0 0.0
    %3202 = vmatpush2.msra.mxu0 0.0
    %3203 = vmatprep.subr.mxu0 0.0
    %3204 = vmatpush2.msra.mxu0 0.0
    %3205 = vmatprep.subr.mxu0 0.0
    %3206 = vmatpush2.msra.mxu0 0.0
    %3207 = vmatprep.subr.mxu0 0.0
    %3208 = vmatpush2.msra.mxu0 0.0
    %3209 = vmatprep.subr.mxu0 0.0
    %3210 = vmatpush2.msra.mxu0 0.0
    %3211 = vmatprep.subr.mxu0 0.0
    %3212 = vmatpush2.msra.mxu0 0.0
    %3213 = vmatprep.mubr.f32.mxu0 0.0
    %3214 = vmatmul.mubr.f32.gmra.mxu0 %v3147
    %v3215 = vpop.f32.mrf.mxu0
    %v3216 = vadd.f32 0.0, %v3215
    %v3217 = vpop.f32.mrf.mxu0
    %3218 = vdwg.mxu0
    %v3220 = vrot.slane %v3216, 6
    %v3222 = vadd.f32 %v3040, %v3220
    %v3223 = vmul.f32 %v3222, 0.5
    %v3224 = vsel %vm59, %v3222, %v3223
    %v3225 = vtanh.pop %v3224
    %v3226 = vmul.f32 %v3225, 0.5
    %v3227 = vadd.f32 %v3226, 0.5
    %v3228 = vsel %vm59, %v3225, %v3227
    %v3230 = vrot.slane %v3135, 6
    %v3232 = vmul.f32 %v3228, %v3230
    %3234 = vrot.lane.b32.xlu0 %v3228, 64
    %v3235 = vpop.permute.xlu0 %3234
    %v3237 = vmul.f32 %v3228, %v3235
    %3239 = vrot.lane.b32.xlu0 %v3237, 32
    %v3240 = vpop.permute.xlu0 %3239
    %v3242 = vadd.f32 %v3232, %v3240
    %v3243 = vtanh.pop %v3242
    %3245 = vrot.lane.b32.xlu0 %v3243, 64
    %v3246 = vpop.permute.xlu0 %3245
    %v3248 = vmul.f32 %v3228, %v3246
    %3250 = vrot.lane.b32.xlu0 %v3248, 32
    %v3251 = vpop.permute.xlu0 %3250
    %3253 = vst.msk [vmem:[#allocation2] sm:$0xc] %vm367, %v3251
    %v3254 = vrot.slane %v3248, 2
    %3255 = vrot.lane.b32.xlu0 %v3254, 32
    %v3256 = vpop.permute.xlu0 %3255
    %v3257 = vsel %vm52, %v3256, 0
    %3259 = vmatprep.subr.mxu0 0.0
    %3260 = vmatpush1.msra.mxu0 0.0
    %3261 = vmatprep.subr.mxu0 0.0
    %3262 = vmatpush1.msra.mxu0 0.0
    %3263 = vmatprep.subr.mxu0 0.0
    %3264 = vmatpush1.msra.mxu0 0.0
    %3265 = vmatprep.subr.mxu0 0.0
    %3266 = vmatpush1.msra.mxu0 0.0
    %3267 = vmatprep.subr.mxu0 0.0
    %3268 = vmatpush1.msra.mxu0 0.0
    %3269 = vmatprep.subr.mxu0 0.0
    %3270 = vmatpush1.msra.mxu0 0.0
    %3271 = vmatprep.subr.mxu0 0.0
    %3272 = vmatpush1.msra.mxu0 0.0
    %3273 = vmatprep.subr.mxu0 0.0
    %3274 = vmatpush1.msra.mxu0 0.0
    %3275 = vmatprep.subr.mxu0 0.0
    %3276 = vmatpush1.msra.mxu0 0.0
    %3277 = vmatprep.subr.mxu0 0.0
    %3278 = vmatpush1.msra.mxu0 0.0
    %3279 = vmatprep.subr.mxu0 0.0
    %3280 = vmatpush1.msra.mxu0 0.0
    %3281 = vmatprep.subr.mxu0 0.0
    %3282 = vmatpush1.msra.mxu0 0.0
    %3283 = vmatprep.subr.mxu0 0.0
    %3284 = vmatpush1.msra.mxu0 %v2956
    %3285 = vmatprep.subr.mxu0 0.0
    %3286 = vmatpush1.msra.mxu0 %v2955
    %3287 = vmatprep.subr.mxu0 0.0
    %3288 = vmatpush1.msra.mxu0 %v2954
    %3289 = vmatprep.subr.mxu0 0.0
    %3290 = vmatpush1.msra.mxu0 %v2953
    %3291 = vmatprep.subr.mxu0 0.0
    %3292 = vmatpush2.msra.mxu0 0.0
    %3293 = vmatprep.subr.mxu0 0.0
    %3294 = vmatpush2.msra.mxu0 0.0
    %3295 = vmatprep.subr.mxu0 0.0
    %3296 = vmatpush2.msra.mxu0 0.0
    %3297 = vmatprep.subr.mxu0 0.0
    %3298 = vmatpush2.msra.mxu0 0.0
    %3299 = vmatprep.subr.mxu0 0.0
    %3300 = vmatpush2.msra.mxu0 0.0
    %3301 = vmatprep.subr.mxu0 0.0
    %3302 = vmatpush2.msra.mxu0 0.0
    %3303 = vmatprep.subr.mxu0 0.0
    %3304 = vmatpush2.msra.mxu0 0.0
    %3305 = vmatprep.subr.mxu0 0.0
    %3306 = vmatpush2.msra.mxu0 0.0
    %3307 = vmatprep.subr.mxu0 0.0
    %3308 = vmatpush2.msra.mxu0 0.0
    %3309 = vmatprep.subr.mxu0 0.0
    %3310 = vmatpush2.msra.mxu0 0.0
    %3311 = vmatprep.subr.mxu0 0.0
    %3312 = vmatpush2.msra.mxu0 0.0
    %3313 = vmatprep.subr.mxu0 0.0
    %3314 = vmatpush2.msra.mxu0 0.0
    %3315 = vmatprep.subr.mxu0 0.0
    %3316 = vmatpush2.msra.mxu0 0.0
    %3317 = vmatprep.subr.mxu0 0.0
    %3318 = vmatpush2.msra.mxu0 0.0
    %3319 = vmatprep.subr.mxu0 0.0
    %3320 = vmatpush2.msra.mxu0 0.0
    %3321 = vmatprep.subr.mxu0 0.0
    %3322 = vmatpush2.msra.mxu0 0.0
    %3323 = vmatprep.mubr.f32.mxu0 0.0
    %3324 = vmatmul.mubr.f32.gmra.mxu0 %v3257
    %v3325 = vpop.f32.mrf.mxu0
    %v3326 = vadd.f32 0.0, %v3325
    %v3327 = vpop.f32.mrf.mxu0
    %3328 = vdwg.mxu0
    %v3330 = vrot.slane %v3326, 4
    %v3332 = vadd.f32 %v3040, %v3330
    %v3333 = vmul.f32 %v3332, 0.5
    %v3334 = vsel %vm59, %v3332, %v3333
    %v3335 = vtanh.pop %v3334
    %v3336 = vmul.f32 %v3335, 0.5
    %v3337 = vadd.f32 %v3336, 0.5
    %v3338 = vsel %vm59, %v3335, %v3337
    %v3340 = vrot.slane %v3242, 6
    %v3342 = vmul.f32 %v3338, %v3340
    %3344 = vrot.lane.b32.xlu0 %v3338, 64
    %v3345 = vpop.permute.xlu0 %3344
    %v3347 = vmul.f32 %v3338, %v3345
    %3349 = vrot.lane.b32.xlu0 %v3347, 32
    %v3350 = vpop.permute.xlu0 %3349
    %v3352 = vadd.f32 %v3342, %v3350
    %v3353 = vtanh.pop %v3352
    %3355 = vrot.lane.b32.xlu0 %v3353, 64
    %v3356 = vpop.permute.xlu0 %3355
    %v3358 = vmul.f32 %v3338, %v3356
    %3360 = vrot.lane.b32.xlu0 %v3358, 32
    %v3361 = vpop.permute.xlu0 %3360
    %3363 = vst.msk [vmem:[#allocation2] sm:$0x30] %vm478, %v3361
    %v3364 = vrot.slane %v3358, 4
    %3365 = vrot.lane.b32.xlu0 %v3364, 32
    %v3366 = vpop.permute.xlu0 %3365
    %v3367 = vsel %vm52, %v3366, 0
    %3369 = vmatprep.subr.mxu0 0.0
    %3370 = vmatpush1.msra.mxu0 0.0
    %3371 = vmatprep.subr.mxu0 0.0
    %3372 = vmatpush1.msra.mxu0 0.0
    %3373 = vmatprep.subr.mxu0 0.0
    %3374 = vmatpush1.msra.mxu0 0.0
    %3375 = vmatprep.subr.mxu0 0.0
    %3376 = vmatpush1.msra.mxu0 0.0
    %3377 = vmatprep.subr.mxu0 0.0
    %3378 = vmatpush1.msra.mxu0 0.0
    %3379 = vmatprep.subr.mxu0 0.0
    %3380 = vmatpush1.msra.mxu0 0.0
    %3381 = vmatprep.subr.mxu0 0.0
    %3382 = vmatpush1.msra.mxu0 0.0
    %3383 = vmatprep.subr.mxu0 0.0
    %3384 = vmatpush1.msra.mxu0 0.0
    %3385 = vmatprep.subr.mxu0 0.0
    %3386 = vmatpush1.msra.mxu0 0.0
    %3387 = vmatprep.subr.mxu0 0.0
    %3388 = vmatpush1.msra.mxu0 0.0
    %3389 = vmatprep.subr.mxu0 0.0
    %3390 = vmatpush1.msra.mxu0 0.0
    %3391 = vmatprep.subr.mxu0 0.0
    %3392 = vmatpush1.msra.mxu0 0.0
    %3393 = vmatprep.subr.mxu0 0.0
    %3394 = vmatpush1.msra.mxu0 %v2956
    %3395 = vmatprep.subr.mxu0 0.0
    %3396 = vmatpush1.msra.mxu0 %v2955
    %3397 = vmatprep.subr.mxu0 0.0
    %3398 = vmatpush1.msra.mxu0 %v2954
    %3399 = vmatprep.subr.mxu0 0.0
    %3400 = vmatpush1.msra.mxu0 %v2953
    %3401 = vmatprep.subr.mxu0 0.0
    %3402 = vmatpush2.msra.mxu0 0.0
    %3403 = vmatprep.subr.mxu0 0.0
    %3404 = vmatpush2.msra.mxu0 0.0
    %3405 = vmatprep.subr.mxu0 0.0
    %3406 = vmatpush2.msra.mxu0 0.0
    %3407 = vmatprep.subr.mxu0 0.0
    %3408 = vmatpush2.msra.mxu0 0.0
    %3409 = vmatprep.subr.mxu0 0.0
    %3410 = vmatpush2.msra.mxu0 0.0
    %3411 = vmatprep.subr.mxu0 0.0
    %3412 = vmatpush2.msra.mxu0 0.0
    %3413 = vmatprep.subr.mxu0 0.0
    %3414 = vmatpush2.msra.mxu0 0.0
    %3415 = vmatprep.subr.mxu0 0.0
    %3416 = vmatpush2.msra.mxu0 0.0
    %3417 = vmatprep.subr.mxu0 0.0
    %3418 = vmatpush2.msra.mxu0 0.0
    %3419 = vmatprep.subr.mxu0 0.0
    %3420 = vmatpush2.msra.mxu0 0.0
    %3421 = vmatprep.subr.mxu0 0.0
    %3422 = vmatpush2.msra.mxu0 0.0
    %3423 = vmatprep.subr.mxu0 0.0
    %3424 = vmatpush2.msra.mxu0 0.0
    %3425 = vmatprep.subr.mxu0 0.0
    %3426 = vmatpush2.msra.mxu0 0.0
    %3427 = vmatprep.subr.mxu0 0.0
    %3428 = vmatpush2.msra.mxu0 0.0
    %3429 = vmatprep.subr.mxu0 0.0
    %3430 = vmatpush2.msra.mxu0 0.0
    %3431 = vmatprep.subr.mxu0 0.0
    %3432 = vmatpush2.msra.mxu0 0.0
    %3433 = vmatprep.mubr.f32.mxu0 0.0
    %3434 = vmatmul.mubr.f32.gmra.mxu0 %v3367
    %v3435 = vpop.f32.mrf.mxu0
    %v3436 = vadd.f32 0.0, %v3435
    %v3437 = vpop.f32.mrf.mxu0
    %3438 = vdwg.mxu0
    %v3440 = vrot.slane %v3436, 2
    %v3442 = vadd.f32 %v3040, %v3440
    %v3443 = vmul.f32 %v3442, 0.5
    %v3444 = vsel %vm59, %v3442, %v3443
    %v3445 = vtanh.pop %v3444
    %v3446 = vmul.f32 %v3445, 0.5
    %v3447 = vadd.f32 %v3446, 0.5
    %v3448 = vsel %vm59, %v3445, %v3447
    %v3450 = vrot.slane %v3352, 6
    %v3452 = vmul.f32 %v3448, %v3450
    %3454 = vrot.lane.b32.xlu0 %v3448, 64
    %v3455 = vpop.permute.xlu0 %3454
    %v3457 = vmul.f32 %v3448, %v3455
    %3459 = vrot.lane.b32.xlu0 %v3457, 32
    %v3460 = vpop.permute.xlu0 %3459
    %v3462 = vadd.f32 %v3452, %v3460
    %v3463 = vtanh.pop %v3462
    %3465 = vrot.lane.b32.xlu0 %v3463, 64
    %v3466 = vpop.permute.xlu0 %3465
    %v3468 = vmul.f32 %v3448, %v3466
    %3470 = vrot.lane.b32.xlu0 %v3468, 32
    %v3471 = vpop.permute.xlu0 %3470
    %3473 = vst.msk [vmem:[#allocation2] sm:$0xc0] %vm589, %v3471
    %v3474 = vrot.slane %v3468, 6
    %3475 = vrot.lane.b32.xlu0 %v3474, 32
    %v3476 = vpop.permute.xlu0 %3475
    %v3477 = vsel %vm52, %v3476, 0
    %3479 = vmatprep.subr.mxu0 0.0
    %3480 = vmatpush1.msra.mxu0 0.0
    %3481 = vmatprep.subr.mxu0 0.0
    %3482 = vmatpush1.msra.mxu0 0.0
    %3483 = vmatprep.subr.mxu0 0.0
    %3484 = vmatpush1.msra.mxu0 0.0
    %3485 = vmatprep.subr.mxu0 0.0
    %3486 = vmatpush1.msra.mxu0 0.0
    %3487 = vmatprep.subr.mxu0 0.0
    %3488 = vmatpush1.msra.mxu0 0.0
    %3489 = vmatprep.subr.mxu0 0.0
    %3490 = vmatpush1.msra.mxu0 0.0
    %3491 = vmatprep.subr.mxu0 0.0
    %3492 = vmatpush1.msra.mxu0 0.0
    %3493 = vmatprep.subr.mxu0 0.0
    %3494 = vmatpush1.msra.mxu0 0.0
    %3495 = vmatprep.subr.mxu0 0.0
    %3496 = vmatpush1.msra.mxu0 0.0
    %3497 = vmatprep.subr.mxu0 0.0
    %3498 = vmatpush1.msra.mxu0 0.0
    %3499 = vmatprep.subr.mxu0 0.0
    %3500 = vmatpush1.msra.mxu0 0.0
    %3501 = vmatprep.subr.mxu0 0.0
    %3502 = vmatpush1.msra.mxu0 0.0
    %3503 = vmatprep.subr.mxu0 0.0
    %3504 = vmatpush1.msra.mxu0 %v2956
    %3505 = vmatprep.subr.mxu0 0.0
    %3506 = vmatpush1.msra.mxu0 %v2955
    %3507 = vmatprep.subr.mxu0 0.0
    %3508 = vmatpush1.msra.mxu0 %v2954
    %3509 = vmatprep.subr.mxu0 0.0
    %3510 = vmatpush1.msra.mxu0 %v2953
    %3511 = vmatprep.subr.mxu0 0.0
    %3512 = vmatpush2.msra.mxu0 0.0
    %3513 = vmatprep.subr.mxu0 0.0
    %3514 = vmatpush2.msra.mxu0 0.0
    %3515 = vmatprep.subr.mxu0 0.0
    %3516 = vmatpush2.msra.mxu0 0.0
    %3517 = vmatprep.subr.mxu0 0.0
    %3518 = vmatpush2.msra.mxu0 0.0
    %3519 = vmatprep.subr.mxu0 0.0
    %3520 = vmatpush2.msra.mxu0 0.0
    %3521 = vmatprep.subr.mxu0 0.0
    %3522 = vmatpush2.msra.mxu0 0.0
    %3523 = vmatprep.subr.mxu0 0.0
    %3524 = vmatpush2.msra.mxu0 0.0
    %3525 = vmatprep.subr.mxu0 0.0
    %3526 = vmatpush2.msra.mxu0 0.0
    %3527 = vmatprep.subr.mxu0 0.0
    %3528 = vmatpush2.msra.mxu0 0.0
    %3529 = vmatprep.subr.mxu0 0.0
    %3530 = vmatpush2.msra.mxu0 0.0
    %3531 = vmatprep.subr.mxu0 0.0
    %3532 = vmatpush2.msra.mxu0 0.0
    %3533 = vmatprep.subr.mxu0 0.0
    %3534 = vmatpush2.msra.mxu0 0.0
    %3535 = vmatprep.subr.mxu0 0.0
    %3536 = vmatpush2.msra.mxu0 0.0
    %3537 = vmatprep.subr.mxu0 0.0
    %3538 = vmatpush2.msra.mxu0 0.0
    %3539 = vmatprep.subr.mxu0 0.0
    %3540 = vmatpush2.msra.mxu0 0.0
    %3541 = vmatprep.subr.mxu0 0.0
    %3542 = vmatpush2.msra.mxu0 0.0
    %3543 = vmatprep.mubr.f32.mxu0 0.0
    %3544 = vmatmul.mubr.f32.gmra.mxu0 %v3477
    %v3545 = vpop.f32.mrf.mxu0
    %v3546 = vadd.f32 0.0, %v3545
    %v3547 = vpop.f32.mrf.mxu0
    %3548 = vdwg.mxu0
    %v3549 = vadd.f32 %v3045, %v3546
    %v3550 = vmul.f32 %v3549, 0.5
    %v3551 = vsel %vm59, %v3549, %v3550
    %v3552 = vtanh.pop %v3551
    %v3553 = vmul.f32 %v3552, 0.5
    %v3554 = vadd.f32 %v3553, 0.5
    %v3555 = vsel %vm59, %v3552, %v3554
    %v3557 = vrot.slane %v3462, 6
    %v3559 = vmul.f32 %v3555, %v3557
    %3561 = vrot.lane.b32.xlu0 %v3555, 64
    %v3562 = vpop.permute.xlu0 %3561
    %v3564 = vmul.f32 %v3555, %v3562
    %3566 = vrot.lane.b32.xlu0 %v3564, 32
    %v3567 = vpop.permute.xlu0 %3566
    %v3569 = vadd.f32 %v3559, %v3567
    %v3570 = vtanh.pop %v3569
    %3572 = vrot.lane.b32.xlu0 %v3570, 64
    %v3573 = vpop.permute.xlu0 %3572
    %v3575 = vmul.f32 %v3555, %v3573
    %3577 = vrot.lane.b32.xlu0 %v3575, 32
    %v3578 = vpop.permute.xlu0 %3577
    %3580 = vst.msk [vmem:[#allocation2 + $0x8] sm:$0x3] %vm259, %v3578
    %v3581 = vsel %vm52, %v3578, 0
    %3583 = vmatprep.subr.mxu0 0.0
    %3584 = vmatpush1.msra.mxu0 0.0
    %3585 = vmatprep.subr.mxu0 0.0
    %3586 = vmatpush1.msra.mxu0 0.0
    %3587 = vmatprep.subr.mxu0 0.0
    %3588 = vmatpush1.msra.mxu0 0.0
    %3589 = vmatprep.subr.mxu0 0.0
    %3590 = vmatpush1.msra.mxu0 0.0
    %3591 = vmatprep.subr.mxu0 0.0
    %3592 = vmatpush1.msra.mxu0 0.0
    %3593 = vmatprep.subr.mxu0 0.0
    %3594 = vmatpush1.msra.mxu0 0.0
    %3595 = vmatprep.subr.mxu0 0.0
    %3596 = vmatpush1.msra.mxu0 0.0
    %3597 = vmatprep.subr.mxu0 0.0
    %3598 = vmatpush1.msra.mxu0 0.0
    %3599 = vmatprep.subr.mxu0 0.0
    %3600 = vmatpush1.msra.mxu0 0.0
    %3601 = vmatprep.subr.mxu0 0.0
    %3602 = vmatpush1.msra.mxu0 0.0
    %3603 = vmatprep.subr.mxu0 0.0
    %3604 = vmatpush1.msra.mxu0 0.0
    %3605 = vmatprep.subr.mxu0 0.0
    %3606 = vmatpush1.msra.mxu0 0.0
    %3607 = vmatprep.subr.mxu0 0.0
    %3608 = vmatpush1.msra.mxu0 %v2956
    %3609 = vmatprep.subr.mxu0 0.0
    %3610 = vmatpush1.msra.mxu0 %v2955
    %3611 = vmatprep.subr.mxu0 0.0
    %3612 = vmatpush1.msra.mxu0 %v2954
    %3613 = vmatprep.subr.mxu0 0.0
    %3614 = vmatpush1.msra.mxu0 %v2953
    %3615 = vmatprep.subr.mxu0 0.0
    %3616 = vmatpush2.msra.mxu0 0.0
    %3617 = vmatprep.subr.mxu0 0.0
    %3618 = vmatpush2.msra.mxu0 0.0
    %3619 = vmatprep.subr.mxu0 0.0
    %3620 = vmatpush2.msra.mxu0 0.0
    %3621 = vmatprep.subr.mxu0 0.0
    %3622 = vmatpush2.msra.mxu0 0.0
    %3623 = vmatprep.subr.mxu0 0.0
    %3624 = vmatpush2.msra.mxu0 0.0
    %3625 = vmatprep.subr.mxu0 0.0
    %3626 = vmatpush2.msra.mxu0 0.0
    %3627 = vmatprep.subr.mxu0 0.0
    %3628 = vmatpush2.msra.mxu0 0.0
    %3629 = vmatprep.subr.mxu0 0.0
    %3630 = vmatpush2.msra.mxu0 0.0
    %3631 = vmatprep.subr.mxu0 0.0
    %3632 = vmatpush2.msra.mxu0 0.0
    %3633 = vmatprep.subr.mxu0 0.0
    %3634 = vmatpush2.msra.mxu0 0.0
    %3635 = vmatprep.subr.mxu0 0.0
    %3636 = vmatpush2.msra.mxu0 0.0
    %3637 = vmatprep.subr.mxu0 0.0
    %3638 = vmatpush2.msra.mxu0 0.0
    %3639 = vmatprep.subr.mxu0 0.0
    %3640 = vmatpush2.msra.mxu0 0.0
    %3641 = vmatprep.subr.mxu0 0.0
    %3642 = vmatpush2.msra.mxu0 0.0
    %3643 = vmatprep.subr.mxu0 0.0
    %3644 = vmatpush2.msra.mxu0 0.0
    %3645 = vmatprep.subr.mxu0 0.0
    %3646 = vmatpush2.msra.mxu0 0.0
    %3647 = vmatprep.mubr.f32.mxu0 0.0
    %3648 = vmatmul.mubr.f32.gmra.mxu0 %v3581
    %v3649 = vpop.f32.mrf.mxu0
    %v3650 = vadd.f32 0.0, %v3649
    %v3651 = vpop.f32.mrf.mxu0
    %3652 = vdwg.mxu0
    %v3654 = vrot.slane %v3650, 6
    %v3656 = vadd.f32 %v3045, %v3654
    %v3657 = vmul.f32 %v3656, 0.5
    %v3658 = vsel %vm59, %v3656, %v3657
    %v3659 = vtanh.pop %v3658
    %v3660 = vmul.f32 %v3659, 0.5
    %v3661 = vadd.f32 %v3660, 0.5
    %v3662 = vsel %vm59, %v3659, %v3661
    %v3664 = vrot.slane %v3569, 6
    %v3666 = vmul.f32 %v3662, %v3664
    %3668 = vrot.lane.b32.xlu0 %v3662, 64
    %v3669 = vpop.permute.xlu0 %3668
    %v3671 = vmul.f32 %v3662, %v3669
    %3673 = vrot.lane.b32.xlu0 %v3671, 32
    %v3674 = vpop.permute.xlu0 %3673
    %v3676 = vadd.f32 %v3666, %v3674
    %v3677 = vtanh.pop %v3676
    %3679 = vrot.lane.b32.xlu0 %v3677, 64
    %v3680 = vpop.permute.xlu0 %3679
    %v3682 = vmul.f32 %v3662, %v3680
    %3684 = vrot.lane.b32.xlu0 %v3682, 32
    %v3685 = vpop.permute.xlu0 %3684
    %3687 = vst.msk [vmem:[#allocation2 + $0x8] sm:$0xc] %vm367, %v3685
    %v3688 = vrot.slane %v3682, 2
    %3689 = vrot.lane.b32.xlu0 %v3688, 32
    %v3690 = vpop.permute.xlu0 %3689
    %v3691 = vsel %vm52, %v3690, 0
    %3693 = vmatprep.subr.mxu0 0.0
    %3694 = vmatpush1.msra.mxu0 0.0
    %3695 = vmatprep.subr.mxu0 0.0
    %3696 = vmatpush1.msra.mxu0 0.0
    %3697 = vmatprep.subr.mxu0 0.0
    %3698 = vmatpush1.msra.mxu0 0.0
    %3699 = vmatprep.subr.mxu0 0.0
    %3700 = vmatpush1.msra.mxu0 0.0
    %3701 = vmatprep.subr.mxu0 0.0
    %3702 = vmatpush1.msra.mxu0 0.0
    %3703 = vmatprep.subr.mxu0 0.0
    %3704 = vmatpush1.msra.mxu0 0.0
    %3705 = vmatprep.subr.mxu0 0.0
    %3706 = vmatpush1.msra.mxu0 0.0
    %3707 = vmatprep.subr.mxu0 0.0
    %3708 = vmatpush1.msra.mxu0 0.0
    %3709 = vmatprep.subr.mxu0 0.0
    %3710 = vmatpush1.msra.mxu0 0.0
    %3711 = vmatprep.subr.mxu0 0.0
    %3712 = vmatpush1.msra.mxu0 0.0
    %3713 = vmatprep.subr.mxu0 0.0
    %3714 = vmatpush1.msra.mxu0 0.0
    %3715 = vmatprep.subr.mxu0 0.0
    %3716 = vmatpush1.msra.mxu0 0.0
    %3717 = vmatprep.subr.mxu0 0.0
    %3718 = vmatpush1.msra.mxu0 %v2956
    %3719 = vmatprep.subr.mxu0 0.0
    %3720 = vmatpush1.msra.mxu0 %v2955
    %3721 = vmatprep.subr.mxu0 0.0
    %3722 = vmatpush1.msra.mxu0 %v2954
    %3723 = vmatprep.subr.mxu0 0.0
    %3724 = vmatpush1.msra.mxu0 %v2953
    %3725 = vmatprep.subr.mxu0 0.0
    %3726 = vmatpush2.msra.mxu0 0.0
    %3727 = vmatprep.subr.mxu0 0.0
    %3728 = vmatpush2.msra.mxu0 0.0
    %3729 = vmatprep.subr.mxu0 0.0
    %3730 = vmatpush2.msra.mxu0 0.0
    %3731 = vmatprep.subr.mxu0 0.0
    %3732 = vmatpush2.msra.mxu0 0.0
    %3733 = vmatprep.subr.mxu0 0.0
    %3734 = vmatpush2.msra.mxu0 0.0
    %3735 = vmatprep.subr.mxu0 0.0
    %3736 = vmatpush2.msra.mxu0 0.0
    %3737 = vmatprep.subr.mxu0 0.0
    %3738 = vmatpush2.msra.mxu0 0.0
    %3739 = vmatprep.subr.mxu0 0.0
    %3740 = vmatpush2.msra.mxu0 0.0
    %3741 = vmatprep.subr.mxu0 0.0
    %3742 = vmatpush2.msra.mxu0 0.0
    %3743 = vmatprep.subr.mxu0 0.0
    %3744 = vmatpush2.msra.mxu0 0.0
    %3745 = vmatprep.subr.mxu0 0.0
    %3746 = vmatpush2.msra.mxu0 0.0
    %3747 = vmatprep.subr.mxu0 0.0
    %3748 = vmatpush2.msra.mxu0 0.0
    %3749 = vmatprep.subr.mxu0 0.0
    %3750 = vmatpush2.msra.mxu0 0.0
    %3751 = vmatprep.subr.mxu0 0.0
    %3752 = vmatpush2.msra.mxu0 0.0
    %3753 = vmatprep.subr.mxu0 0.0
    %3754 = vmatpush2.msra.mxu0 0.0
    %3755 = vmatprep.subr.mxu0 0.0
    %3756 = vmatpush2.msra.mxu0 0.0
    %3757 = vmatprep.mubr.f32.mxu0 0.0
    %3758 = vmatmul.mubr.f32.gmra.mxu0 %v3691
    %v3759 = vpop.f32.mrf.mxu0
    %v3760 = vadd.f32 0.0, %v3759
    %v3761 = vpop.f32.mrf.mxu0
    %3762 = vdwg.mxu0
    %v3764 = vrot.slane %v3760, 4
    %v3766 = vadd.f32 %v3045, %v3764
    %v3767 = vmul.f32 %v3766, 0.5
    %v3768 = vsel %vm59, %v3766, %v3767
    %v3769 = vtanh.pop %v3768
    %v3770 = vmul.f32 %v3769, 0.5
    %v3771 = vadd.f32 %v3770, 0.5
    %v3772 = vsel %vm59, %v3769, %v3771
    %v3774 = vrot.slane %v3676, 6
    %v3776 = vmul.f32 %v3772, %v3774
    %3778 = vrot.lane.b32.xlu0 %v3772, 64
    %v3779 = vpop.permute.xlu0 %3778
    %v3781 = vmul.f32 %v3772, %v3779
    %3783 = vrot.lane.b32.xlu0 %v3781, 32
    %v3784 = vpop.permute.xlu0 %3783
    %v3786 = vadd.f32 %v3776, %v3784
    %v3787 = vtanh.pop %v3786
    %3789 = vrot.lane.b32.xlu0 %v3787, 64
    %v3790 = vpop.permute.xlu0 %3789
    %v3792 = vmul.f32 %v3772, %v3790
    %3794 = vrot.lane.b32.xlu0 %v3792, 32
    %v3795 = vpop.permute.xlu0 %3794
    %3797 = vst.msk [vmem:[#allocation2 + $0x8] sm:$0x30] %vm478, %v3795
    %v3798 = vrot.slane %v3792, 4
    %3799 = vrot.lane.b32.xlu0 %v3798, 32
    %v3800 = vpop.permute.xlu0 %3799
    %v3801 = vsel %vm52, %v3800, 0
    %3803 = vmatprep.subr.mxu0 0.0
    %3804 = vmatpush1.msra.mxu0 0.0
    %3805 = vmatprep.subr.mxu0 0.0
    %3806 = vmatpush1.msra.mxu0 0.0
    %3807 = vmatprep.subr.mxu0 0.0
    %3808 = vmatpush1.msra.mxu0 0.0
    %3809 = vmatprep.subr.mxu0 0.0
    %3810 = vmatpush1.msra.mxu0 0.0
    %3811 = vmatprep.subr.mxu0 0.0
    %3812 = vmatpush1.msra.mxu0 0.0
    %3813 = vmatprep.subr.mxu0 0.0
    %3814 = vmatpush1.msra.mxu0 0.0
    %3815 = vmatprep.subr.mxu0 0.0
    %3816 = vmatpush1.msra.mxu0 0.0
    %3817 = vmatprep.subr.mxu0 0.0
    %3818 = vmatpush1.msra.mxu0 0.0
    %3819 = vmatprep.subr.mxu0 0.0
    %3820 = vmatpush1.msra.mxu0 0.0
    %3821 = vmatprep.subr.mxu0 0.0
    %3822 = vmatpush1.msra.mxu0 0.0
    %3823 = vmatprep.subr.mxu0 0.0
    %3824 = vmatpush1.msra.mxu0 0.0
    %3825 = vmatprep.subr.mxu0 0.0
    %3826 = vmatpush1.msra.mxu0 0.0
    %3827 = vmatprep.subr.mxu0 0.0
    %3828 = vmatpush1.msra.mxu0 %v2956
    %3829 = vmatprep.subr.mxu0 0.0
    %3830 = vmatpush1.msra.mxu0 %v2955
    %3831 = vmatprep.subr.mxu0 0.0
    %3832 = vmatpush1.msra.mxu0 %v2954
    %3833 = vmatprep.subr.mxu0 0.0
    %3834 = vmatpush1.msra.mxu0 %v2953
    %3835 = vmatprep.subr.mxu0 0.0
    %3836 = vmatpush2.msra.mxu0 0.0
    %3837 = vmatprep.subr.mxu0 0.0
    %3838 = vmatpush2.msra.mxu0 0.0
    %3839 = vmatprep.subr.mxu0 0.0
    %3840 = vmatpush2.msra.mxu0 0.0
    %3841 = vmatprep.subr.mxu0 0.0
    %3842 = vmatpush2.msra.mxu0 0.0
    %3843 = vmatprep.subr.mxu0 0.0
    %3844 = vmatpush2.msra.mxu0 0.0
    %3845 = vmatprep.subr.mxu0 0.0
    %3846 = vmatpush2.msra.mxu0 0.0
    %3847 = vmatprep.subr.mxu0 0.0
    %3848 = vmatpush2.msra.mxu0 0.0
    %3849 = vmatprep.subr.mxu0 0.0
    %3850 = vmatpush2.msra.mxu0 0.0
    %3851 = vmatprep.subr.mxu0 0.0
    %3852 = vmatpush2.msra.mxu0 0.0
    %3853 = vmatprep.subr.mxu0 0.0
    %3854 = vmatpush2.msra.mxu0 0.0
    %3855 = vmatprep.subr.mxu0 0.0
    %3856 = vmatpush2.msra.mxu0 0.0
    %3857 = vmatprep.subr.mxu0 0.0
    %3858 = vmatpush2.msra.mxu0 0.0
    %3859 = vmatprep.subr.mxu0 0.0
    %3860 = vmatpush2.msra.mxu0 0.0
    %3861 = vmatprep.subr.mxu0 0.0
    %3862 = vmatpush2.msra.mxu0 0.0
    %3863 = vmatprep.subr.mxu0 0.0
    %3864 = vmatpush2.msra.mxu0 0.0
    %3865 = vmatprep.subr.mxu0 0.0
    %3866 = vmatpush2.msra.mxu0 0.0
    %3867 = vmatprep.mubr.f32.mxu0 0.0
    %3868 = vmatmul.mubr.f32.gmra.mxu0 %v3801
    %v3869 = vpop.f32.mrf.mxu0
    %v3870 = vadd.f32 0.0, %v3869
    %v3871 = vpop.f32.mrf.mxu0
    %3872 = vdwg.mxu0
    %v3874 = vrot.slane %v3870, 2
    %v3876 = vadd.f32 %v3045, %v3874
    %v3877 = vmul.f32 %v3876, 0.5
    %v3878 = vsel %vm59, %v3876, %v3877
    %v3879 = vtanh.pop %v3878
    %v3880 = vmul.f32 %v3879, 0.5
    %v3881 = vadd.f32 %v3880, 0.5
    %v3882 = vsel %vm59, %v3879, %v3881
    %v3884 = vrot.slane %v3786, 6
    %v3886 = vmul.f32 %v3882, %v3884
    %3888 = vrot.lane.b32.xlu0 %v3882, 64
    %v3889 = vpop.permute.xlu0 %3888
    %v3891 = vmul.f32 %v3882, %v3889
    %3893 = vrot.lane.b32.xlu0 %v3891, 32
    %v3894 = vpop.permute.xlu0 %3893
    %v3896 = vadd.f32 %v3886, %v3894
    %v3897 = vtanh.pop %v3896
    %3899 = vrot.lane.b32.xlu0 %v3897, 64
    %v3900 = vpop.permute.xlu0 %3899
    %v3902 = vmul.f32 %v3882, %v3900
    %3904 = vrot.lane.b32.xlu0 %v3902, 32
    %v3905 = vpop.permute.xlu0 %3904
    %3907 = vst.msk [vmem:[#allocation2 + $0x8] sm:$0xc0] %vm589, %v3905
    %s3908 = scalar_lea.vmem [#allocation3], 128
    %v3909 = vld [vmem:[%s3908] sm:$0xff]
    %v3910 = vld [vmem:[%s3908 + $0x8] sm:$0xff]
    %v3911 = vld [vmem:[%s3908 + $0x10] sm:$0xff]
    %v3912 = vld [vmem:[%s3908 + $0x18] sm:$0xff]
    %s3913 = scalar_lea.vmem [#allocation6], 128
    %v3914 = vld [vmem:[%s3913] sm:$0xff]
    %v3915 = vld [vmem:[%s3913 + $0x8] sm:$0xff]
    %v3916 = vld [vmem:[%s3913 + $0x10] sm:$0xff]
    %v3917 = vld [vmem:[%s3913 + $0x18] sm:$0xff]
    %s3918 = scalar_lea.vmem %s3, 4
    %v3919 = vld [vmem:[%s3918] sm:$0x1]
    %v3920 = vld [vmem:[#allocation2] sm:$0xff]
    %v3921 = vld [vmem:[#allocation2 + $0x8] sm:$0xff]
    %v3923 = vlaneseq
    %v3924 = vshrl.u32 %v3923, 7
    %v3925 = vsub.s32 0, %v3924
    %v3926 = vrot.slane %v3919, %v3925
    %v3929 = vsel %vm52, %v3920, 0
    %v3932 = vsel %vm52, %v3921, 0
    %3934 = vmatprep.subr.mxu0 0.0
    %3935 = vmatpush1.msra.mxu0 0.0
    %3936 = vmatprep.subr.mxu0 0.0
    %3937 = vmatpush1.msra.mxu0 0.0
    %3938 = vmatprep.subr.mxu0 0.0
    %3939 = vmatpush1.msra.mxu0 0.0
    %3940 = vmatprep.subr.mxu0 0.0
    %3941 = vmatpush1.msra.mxu0 0.0
    %3942 = vmatprep.subr.mxu0 0.0
    %3943 = vmatpush1.msra.mxu0 0.0
    %3944 = vmatprep.subr.mxu0 0.0
    %3945 = vmatpush1.msra.mxu0 0.0
    %3946 = vmatprep.subr.mxu0 0.0
    %3947 = vmatpush1.msra.mxu0 0.0
    %3948 = vmatprep.subr.mxu0 0.0
    %3949 = vmatpush1.msra.mxu0 0.0
    %3950 = vmatprep.subr.mxu0 0.0
    %3951 = vmatpush1.msra.mxu0 0.0
    %3952 = vmatprep.subr.mxu0 0.0
    %3953 = vmatpush1.msra.mxu0 0.0
    %3954 = vmatprep.subr.mxu0 0.0
    %3955 = vmatpush1.msra.mxu0 0.0
    %3956 = vmatprep.subr.mxu0 0.0
    %3957 = vmatpush1.msra.mxu0 0.0
    %3958 = vmatprep.subr.mxu0 0.0
    %3959 = vmatpush1.msra.mxu0 %v3912
    %3960 = vmatprep.subr.mxu0 0.0
    %3961 = vmatpush1.msra.mxu0 %v3911
    %3962 = vmatprep.subr.mxu0 0.0
    %3963 = vmatpush1.msra.mxu0 %v3910
    %3964 = vmatprep.subr.mxu0 0.0
    %3965 = vmatpush1.msra.mxu0 %v3909
    %3966 = vmatprep.subr.mxu0 0.0
    %3967 = vmatpush2.msra.mxu0 0.0
    %3968 = vmatprep.subr.mxu0 0.0
    %3969 = vmatpush2.msra.mxu0 0.0
    %3970 = vmatprep.subr.mxu0 0.0
    %3971 = vmatpush2.msra.mxu0 0.0
    %3972 = vmatprep.subr.mxu0 0.0
    %3973 = vmatpush2.msra.mxu0 0.0
    %3974 = vmatprep.subr.mxu0 0.0
    %3975 = vmatpush2.msra.mxu0 0.0
    %3976 = vmatprep.subr.mxu0 0.0
    %3977 = vmatpush2.msra.mxu0 0.0
    %3978 = vmatprep.subr.mxu0 0.0
    %3979 = vmatpush2.msra.mxu0 0.0
    %3980 = vmatprep.subr.mxu0 0.0
    %3981 = vmatpush2.msra.mxu0 0.0
    %3982 = vmatprep.subr.mxu0 0.0
    %3983 = vmatpush2.msra.mxu0 0.0
    %3984 = vmatprep.subr.mxu0 0.0
    %3985 = vmatpush2.msra.mxu0 0.0
    %3986 = vmatprep.subr.mxu0 0.0
    %3987 = vmatpush2.msra.mxu0 0.0
    %3988 = vmatprep.subr.mxu0 0.0
    %3989 = vmatpush2.msra.mxu0 0.0
    %3990 = vmatprep.subr.mxu0 0.0
    %3991 = vmatpush2.msra.mxu0 0.0
    %3992 = vmatprep.subr.mxu0 0.0
    %3993 = vmatpush2.msra.mxu0 0.0
    %3994 = vmatprep.subr.mxu0 0.0
    %3995 = vmatpush2.msra.mxu0 0.0
    %3996 = vmatprep.subr.mxu0 0.0
    %3997 = vmatpush2.msra.mxu0 0.0
    %3998 = vmatprep.mubr.f32.mxu0 0.0
    %3999 = vmatmul.mubr.f32.gmra.mxu0 %v3929
    %v4000 = vpop.f32.mrf.mxu0
    %v4001 = vadd.f32 %v3926, %v4000
    %v4002 = vpop.f32.mrf.mxu0
    %4003 = vmatprep.mubr.f32.mxu0 0.0
    %4004 = vmatmul.mubr.f32.gmra.mxu0 %v3932
    %v4005 = vpop.f32.mrf.mxu0
    %v4006 = vadd.f32 %v3926, %v4005
    %v4007 = vpop.f32.mrf.mxu0
    %4008 = vdwg.mxu0
    %4009 = vmatprep.subr.mxu0 0.0
    %4010 = vmatpush1.msra.mxu0 0.0
    %4011 = vmatprep.subr.mxu0 0.0
    %4012 = vmatpush1.msra.mxu0 0.0
    %4013 = vmatprep.subr.mxu0 0.0
    %4014 = vmatpush1.msra.mxu0 0.0
    %4015 = vmatprep.subr.mxu0 0.0
    %4016 = vmatpush1.msra.mxu0 0.0
    %4017 = vmatprep.subr.mxu0 0.0
    %4018 = vmatpush1.msra.mxu0 0.0
    %4019 = vmatprep.subr.mxu0 0.0
    %4020 = vmatpush1.msra.mxu0 0.0
    %4021 = vmatprep.subr.mxu0 0.0
    %4022 = vmatpush1.msra.mxu0 0.0
    %4023 = vmatprep.subr.mxu0 0.0
    %4024 = vmatpush1.msra.mxu0 0.0
    %4025 = vmatprep.subr.mxu0 0.0
    %4026 = vmatpush1.msra.mxu0 0.0
    %4027 = vmatprep.subr.mxu0 0.0
    %4028 = vmatpush1.msra.mxu0 0.0
    %4029 = vmatprep.subr.mxu0 0.0
    %4030 = vmatpush1.msra.mxu0 0.0
    %4031 = vmatprep.subr.mxu0 0.0
    %4032 = vmatpush1.msra.mxu0 0.0
    %4033 = vmatprep.subr.mxu0 0.0
    %4034 = vmatpush1.msra.mxu0 %v3917
    %4035 = vmatprep.subr.mxu0 0.0
    %4036 = vmatpush1.msra.mxu0 %v3916
    %4037 = vmatprep.subr.mxu0 0.0
    %4038 = vmatpush1.msra.mxu0 %v3915
    %4039 = vmatprep.subr.mxu0 0.0
    %4040 = vmatpush1.msra.mxu0 %v3914
    %4041 = vmatprep.subr.mxu0 0.0
    %4042 = vmatpush2.msra.mxu0 0.0
    %4043 = vmatprep.subr.mxu0 0.0
    %4044 = vmatpush2.msra.mxu0 0.0
    %4045 = vmatprep.subr.mxu0 0.0
    %4046 = vmatpush2.msra.mxu0 0.0
    %4047 = vmatprep.subr.mxu0 0.0
    %4048 = vmatpush2.msra.mxu0 0.0
    %4049 = vmatprep.subr.mxu0 0.0
    %4050 = vmatpush2.msra.mxu0 0.0
    %4051 = vmatprep.subr.mxu0 0.0
    %4052 = vmatpush2.msra.mxu0 0.0
    %4053 = vmatprep.subr.mxu0 0.0
    %4054 = vmatpush2.msra.mxu0 0.0
    %4055 = vmatprep.subr.mxu0 0.0
    %4056 = vmatpush2.msra.mxu0 0.0
    %4057 = vmatprep.subr.mxu0 0.0
    %4058 = vmatpush2.msra.mxu0 0.0
    %4059 = vmatprep.subr.mxu0 0.0
    %4060 = vmatpush2.msra.mxu0 0.0
    %4061 = vmatprep.subr.mxu0 0.0
    %4062 = vmatpush2.msra.mxu0 0.0
    %4063 = vmatprep.subr.mxu0 0.0
    %4064 = vmatpush2.msra.mxu0 0.0
    %4065 = vmatprep.subr.mxu0 0.0
    %4066 = vmatpush2.msra.mxu0 0.0
    %4067 = vmatprep.subr.mxu0 0.0
    %4068 = vmatpush2.msra.mxu0 0.0
    %4069 = vmatprep.subr.mxu0 0.0
    %4070 = vmatpush2.msra.mxu0 0.0
    %4071 = vmatprep.subr.mxu0 0.0
    %4072 = vmatpush2.msra.mxu0 0.0
    %4073 = vmatprep.mubr.f32.mxu0 0.0
    %4074 = vmatmul.mubr.f32.gmra.mxu0 %v159
    %v4075 = vpop.f32.mrf.mxu0
    %v4076 = vadd.f32 0.0, %v4075
    %v4077 = vpop.f32.mrf.mxu0
    %4078 = vdwg.mxu0
    %v4079 = vadd.f32 %v4001, %v4076
    %v4080 = vmul.f32 %v4079, 0.5
    %v4081 = vsel %vm59, %v4079, %v4080
    %v4082 = vtanh.pop %v4081
    %v4083 = vmul.f32 %v4082, 0.5
    %v4084 = vadd.f32 %v4083, 0.5
    %v4085 = vsel %vm59, %v4082, %v4084
    %v4086 = vmul.f32 %v4085, 0.0
    %4088 = vrot.lane.b32.xlu0 %v4085, 64
    %v4089 = vpop.permute.xlu0 %4088
    %v4091 = vmul.f32 %v4085, %v4089
    %4093 = vrot.lane.b32.xlu0 %v4091, 32
    %v4094 = vpop.permute.xlu0 %4093
    %v4096 = vadd.f32 %v4086, %v4094
    %v4097 = vtanh.pop %v4096
    %4099 = vrot.lane.b32.xlu0 %v4097, 64
    %v4100 = vpop.permute.xlu0 %4099
    %v4102 = vmul.f32 %v4085, %v4100
    %4104 = vrot.lane.b32.xlu0 %v4102, 32
    %v4105 = vpop.permute.xlu0 %4104
    %v4106 = vsel %vm52, %v4105, 0
    %4108 = vmatprep.subr.mxu0 0.0
    %4109 = vmatpush1.msra.mxu0 0.0
    %4110 = vmatprep.subr.mxu0 0.0
    %4111 = vmatpush1.msra.mxu0 0.0
    %4112 = vmatprep.subr.mxu0 0.0
    %4113 = vmatpush1.msra.mxu0 0.0
    %4114 = vmatprep.subr.mxu0 0.0
    %4115 = vmatpush1.msra.mxu0 0.0
    %4116 = vmatprep.subr.mxu0 0.0
    %4117 = vmatpush1.msra.mxu0 0.0
    %4118 = vmatprep.subr.mxu0 0.0
    %4119 = vmatpush1.msra.mxu0 0.0
    %4120 = vmatprep.subr.mxu0 0.0
    %4121 = vmatpush1.msra.mxu0 0.0
    %4122 = vmatprep.subr.mxu0 0.0
    %4123 = vmatpush1.msra.mxu0 0.0
    %4124 = vmatprep.subr.mxu0 0.0
    %4125 = vmatpush1.msra.mxu0 0.0
    %4126 = vmatprep.subr.mxu0 0.0
    %4127 = vmatpush1.msra.mxu0 0.0
    %4128 = vmatprep.subr.mxu0 0.0
    %4129 = vmatpush1.msra.mxu0 0.0
    %4130 = vmatprep.subr.mxu0 0.0
    %4131 = vmatpush1.msra.mxu0 0.0
    %4132 = vmatprep.subr.mxu0 0.0
    %4133 = vmatpush1.msra.mxu0 %v3917
    %4134 = vmatprep.subr.mxu0 0.0
    %4135 = vmatpush1.msra.mxu0 %v3916
    %4136 = vmatprep.subr.mxu0 0.0
    %4137 = vmatpush1.msra.mxu0 %v3915
    %4138 = vmatprep.subr.mxu0 0.0
    %4139 = vmatpush1.msra.mxu0 %v3914
    %4140 = vmatprep.subr.mxu0 0.0
    %4141 = vmatpush2.msra.mxu0 0.0
    %4142 = vmatprep.subr.mxu0 0.0
    %4143 = vmatpush2.msra.mxu0 0.0
    %4144 = vmatprep.subr.mxu0 0.0
    %4145 = vmatpush2.msra.mxu0 0.0
    %4146 = vmatprep.subr.mxu0 0.0
    %4147 = vmatpush2.msra.mxu0 0.0
    %4148 = vmatprep.subr.mxu0 0.0
    %4149 = vmatpush2.msra.mxu0 0.0
    %4150 = vmatprep.subr.mxu0 0.0
    %4151 = vmatpush2.msra.mxu0 0.0
    %4152 = vmatprep.subr.mxu0 0.0
    %4153 = vmatpush2.msra.mxu0 0.0
    %4154 = vmatprep.subr.mxu0 0.0
    %4155 = vmatpush2.msra.mxu0 0.0
    %4156 = vmatprep.subr.mxu0 0.0
    %4157 = vmatpush2.msra.mxu0 0.0
    %4158 = vmatprep.subr.mxu0 0.0
    %4159 = vmatpush2.msra.mxu0 0.0
    %4160 = vmatprep.subr.mxu0 0.0
    %4161 = vmatpush2.msra.mxu0 0.0
    %4162 = vmatprep.subr.mxu0 0.0
    %4163 = vmatpush2.msra.mxu0 0.0
    %4164 = vmatprep.subr.mxu0 0.0
    %4165 = vmatpush2.msra.mxu0 0.0
    %4166 = vmatprep.subr.mxu0 0.0
    %4167 = vmatpush2.msra.mxu0 0.0
    %4168 = vmatprep.subr.mxu0 0.0
    %4169 = vmatpush2.msra.mxu0 0.0
    %4170 = vmatprep.subr.mxu0 0.0
    %4171 = vmatpush2.msra.mxu0 0.0
    %4172 = vmatprep.mubr.f32.mxu0 0.0
    %4173 = vmatmul.mubr.f32.gmra.mxu0 %v4106
    %v4174 = vpop.f32.mrf.mxu0
    %v4175 = vadd.f32 0.0, %v4174
    %v4176 = vpop.f32.mrf.mxu0
    %4177 = vdwg.mxu0
    %v4179 = vrot.slane %v4175, 6
    %v4181 = vadd.f32 %v4001, %v4179
    %v4182 = vmul.f32 %v4181, 0.5
    %v4183 = vsel %vm59, %v4181, %v4182
    %v4184 = vtanh.pop %v4183
    %v4185 = vmul.f32 %v4184, 0.5
    %v4186 = vadd.f32 %v4185, 0.5
    %v4187 = vsel %vm59, %v4184, %v4186
    %v4189 = vrot.slane %v4096, 6
    %v4191 = vmul.f32 %v4187, %v4189
    %4193 = vrot.lane.b32.xlu0 %v4187, 64
    %v4194 = vpop.permute.xlu0 %4193
    %v4196 = vmul.f32 %v4187, %v4194
    %4198 = vrot.lane.b32.xlu0 %v4196, 32
    %v4199 = vpop.permute.xlu0 %4198
    %v4201 = vadd.f32 %v4191, %v4199
    %v4202 = vtanh.pop %v4201
    %4204 = vrot.lane.b32.xlu0 %v4202, 64
    %v4205 = vpop.permute.xlu0 %4204
    %v4207 = vmul.f32 %v4187, %v4205
    %v4209 = vrot.slane %v4207, 2
    %4210 = vrot.lane.b32.xlu0 %v4209, 32
    %v4211 = vpop.permute.xlu0 %4210
    %v4212 = vsel %vm52, %v4211, 0
    %4214 = vmatprep.subr.mxu0 0.0
    %4215 = vmatpush1.msra.mxu0 0.0
    %4216 = vmatprep.subr.mxu0 0.0
    %4217 = vmatpush1.msra.mxu0 0.0
    %4218 = vmatprep.subr.mxu0 0.0
    %4219 = vmatpush1.msra.mxu0 0.0
    %4220 = vmatprep.subr.mxu0 0.0
    %4221 = vmatpush1.msra.mxu0 0.0
    %4222 = vmatprep.subr.mxu0 0.0
    %4223 = vmatpush1.msra.mxu0 0.0
    %4224 = vmatprep.subr.mxu0 0.0
    %4225 = vmatpush1.msra.mxu0 0.0
    %4226 = vmatprep.subr.mxu0 0.0
    %4227 = vmatpush1.msra.mxu0 0.0
    %4228 = vmatprep.subr.mxu0 0.0
    %4229 = vmatpush1.msra.mxu0 0.0
    %4230 = vmatprep.subr.mxu0 0.0
    %4231 = vmatpush1.msra.mxu0 0.0
    %4232 = vmatprep.subr.mxu0 0.0
    %4233 = vmatpush1.msra.mxu0 0.0
    %4234 = vmatprep.subr.mxu0 0.0
    %4235 = vmatpush1.msra.mxu0 0.0
    %4236 = vmatprep.subr.mxu0 0.0
    %4237 = vmatpush1.msra.mxu0 0.0
    %4238 = vmatprep.subr.mxu0 0.0
    %4239 = vmatpush1.msra.mxu0 %v3917
    %4240 = vmatprep.subr.mxu0 0.0
    %4241 = vmatpush1.msra.mxu0 %v3916
    %4242 = vmatprep.subr.mxu0 0.0
    %4243 = vmatpush1.msra.mxu0 %v3915
    %4244 = vmatprep.subr.mxu0 0.0
    %4245 = vmatpush1.msra.mxu0 %v3914
    %4246 = vmatprep.subr.mxu0 0.0
    %4247 = vmatpush2.msra.mxu0 0.0
    %4248 = vmatprep.subr.mxu0 0.0
    %4249 = vmatpush2.msra.mxu0 0.0
    %4250 = vmatprep.subr.mxu0 0.0
    %4251 = vmatpush2.msra.mxu0 0.0
    %4252 = vmatprep.subr.mxu0 0.0
    %4253 = vmatpush2.msra.mxu0 0.0
    %4254 = vmatprep.subr.mxu0 0.0
    %4255 = vmatpush2.msra.mxu0 0.0
    %4256 = vmatprep.subr.mxu0 0.0
    %4257 = vmatpush2.msra.mxu0 0.0
    %4258 = vmatprep.subr.mxu0 0.0
    %4259 = vmatpush2.msra.mxu0 0.0
    %4260 = vmatprep.subr.mxu0 0.0
    %4261 = vmatpush2.msra.mxu0 0.0
    %4262 = vmatprep.subr.mxu0 0.0
    %4263 = vmatpush2.msra.mxu0 0.0
    %4264 = vmatprep.subr.mxu0 0.0
    %4265 = vmatpush2.msra.mxu0 0.0
    %4266 = vmatprep.subr.mxu0 0.0
    %4267 = vmatpush2.msra.mxu0 0.0
    %4268 = vmatprep.subr.mxu0 0.0
    %4269 = vmatpush2.msra.mxu0 0.0
    %4270 = vmatprep.subr.mxu0 0.0
    %4271 = vmatpush2.msra.mxu0 0.0
    %4272 = vmatprep.subr.mxu0 0.0
    %4273 = vmatpush2.msra.mxu0 0.0
    %4274 = vmatprep.subr.mxu0 0.0
    %4275 = vmatpush2.msra.mxu0 0.0
    %4276 = vmatprep.subr.mxu0 0.0
    %4277 = vmatpush2.msra.mxu0 0.0
    %4278 = vmatprep.mubr.f32.mxu0 0.0
    %4279 = vmatmul.mubr.f32.gmra.mxu0 %v4212
    %v4280 = vpop.f32.mrf.mxu0
    %v4281 = vadd.f32 0.0, %v4280
    %v4282 = vpop.f32.mrf.mxu0
    %4283 = vdwg.mxu0
    %v4285 = vrot.slane %v4281, 4
    %v4287 = vadd.f32 %v4001, %v4285
    %v4288 = vmul.f32 %v4287, 0.5
    %v4289 = vsel %vm59, %v4287, %v4288
    %v4290 = vtanh.pop %v4289
    %v4291 = vmul.f32 %v4290, 0.5
    %v4292 = vadd.f32 %v4291, 0.5
    %v4293 = vsel %vm59, %v4290, %v4292
    %v4295 = vrot.slane %v4201, 6
    %v4297 = vmul.f32 %v4293, %v4295
    %4299 = vrot.lane.b32.xlu0 %v4293, 64
    %v4300 = vpop.permute.xlu0 %4299
    %v4302 = vmul.f32 %v4293, %v4300
    %4304 = vrot.lane.b32.xlu0 %v4302, 32
    %v4305 = vpop.permute.xlu0 %4304
    %v4307 = vadd.f32 %v4297, %v4305
    %v4308 = vtanh.pop %v4307
    %4310 = vrot.lane.b32.xlu0 %v4308, 64
    %v4311 = vpop.permute.xlu0 %4310
    %v4313 = vmul.f32 %v4293, %v4311
    %v4315 = vrot.slane %v4313, 4
    %4316 = vrot.lane.b32.xlu0 %v4315, 32
    %v4317 = vpop.permute.xlu0 %4316
    %v4318 = vsel %vm52, %v4317, 0
    %4320 = vmatprep.subr.mxu0 0.0
    %4321 = vmatpush1.msra.mxu0 0.0
    %4322 = vmatprep.subr.mxu0 0.0
    %4323 = vmatpush1.msra.mxu0 0.0
    %4324 = vmatprep.subr.mxu0 0.0
    %4325 = vmatpush1.msra.mxu0 0.0
    %4326 = vmatprep.subr.mxu0 0.0
    %4327 = vmatpush1.msra.mxu0 0.0
    %4328 = vmatprep.subr.mxu0 0.0
    %4329 = vmatpush1.msra.mxu0 0.0
    %4330 = vmatprep.subr.mxu0 0.0
    %4331 = vmatpush1.msra.mxu0 0.0
    %4332 = vmatprep.subr.mxu0 0.0
    %4333 = vmatpush1.msra.mxu0 0.0
    %4334 = vmatprep.subr.mxu0 0.0
    %4335 = vmatpush1.msra.mxu0 0.0
    %4336 = vmatprep.subr.mxu0 0.0
    %4337 = vmatpush1.msra.mxu0 0.0
    %4338 = vmatprep.subr.mxu0 0.0
    %4339 = vmatpush1.msra.mxu0 0.0
    %4340 = vmatprep.subr.mxu0 0.0
    %4341 = vmatpush1.msra.mxu0 0.0
    %4342 = vmatprep.subr.mxu0 0.0
    %4343 = vmatpush1.msra.mxu0 0.0
    %4344 = vmatprep.subr.mxu0 0.0
    %4345 = vmatpush1.msra.mxu0 %v3917
    %4346 = vmatprep.subr.mxu0 0.0
    %4347 = vmatpush1.msra.mxu0 %v3916
    %4348 = vmatprep.subr.mxu0 0.0
    %4349 = vmatpush1.msra.mxu0 %v3915
    %4350 = vmatprep.subr.mxu0 0.0
    %4351 = vmatpush1.msra.mxu0 %v3914
    %4352 = vmatprep.subr.mxu0 0.0
    %4353 = vmatpush2.msra.mxu0 0.0
    %4354 = vmatprep.subr.mxu0 0.0
    %4355 = vmatpush2.msra.mxu0 0.0
    %4356 = vmatprep.subr.mxu0 0.0
    %4357 = vmatpush2.msra.mxu0 0.0
    %4358 = vmatprep.subr.mxu0 0.0
    %4359 = vmatpush2.msra.mxu0 0.0
    %4360 = vmatprep.subr.mxu0 0.0
    %4361 = vmatpush2.msra.mxu0 0.0
    %4362 = vmatprep.subr.mxu0 0.0
    %4363 = vmatpush2.msra.mxu0 0.0
    %4364 = vmatprep.subr.mxu0 0.0
    %4365 = vmatpush2.msra.mxu0 0.0
    %4366 = vmatprep.subr.mxu0 0.0
    %4367 = vmatpush2.msra.mxu0 0.0
    %4368 = vmatprep.subr.mxu0 0.0
    %4369 = vmatpush2.msra.mxu0 0.0
    %4370 = vmatprep.subr.mxu0 0.0
    %4371 = vmatpush2.msra.mxu0 0.0
    %4372 = vmatprep.subr.mxu0 0.0
    %4373 = vmatpush2.msra.mxu0 0.0
    %4374 = vmatprep.subr.mxu0 0.0
    %4375 = vmatpush2.msra.mxu0 0.0
    %4376 = vmatprep.subr.mxu0 0.0
    %4377 = vmatpush2.msra.mxu0 0.0
    %4378 = vmatprep.subr.mxu0 0.0
    %4379 = vmatpush2.msra.mxu0 0.0
    %4380 = vmatprep.subr.mxu0 0.0
    %4381 = vmatpush2.msra.mxu0 0.0
    %4382 = vmatprep.subr.mxu0 0.0
    %4383 = vmatpush2.msra.mxu0 0.0
    %4384 = vmatprep.mubr.f32.mxu0 0.0
    %4385 = vmatmul.mubr.f32.gmra.mxu0 %v4318
    %v4386 = vpop.f32.mrf.mxu0
    %v4387 = vadd.f32 0.0, %v4386
    %v4388 = vpop.f32.mrf.mxu0
    %4389 = vdwg.mxu0
    %v4391 = vrot.slane %v4387, 2
    %v4393 = vadd.f32 %v4001, %v4391
    %v4394 = vmul.f32 %v4393, 0.5
    %v4395 = vsel %vm59, %v4393, %v4394
    %v4396 = vtanh.pop %v4395
    %v4397 = vmul.f32 %v4396, 0.5
    %v4398 = vadd.f32 %v4397, 0.5
    %v4399 = vsel %vm59, %v4396, %v4398
    %v4401 = vrot.slane %v4307, 6
    %v4403 = vmul.f32 %v4399, %v4401
    %4405 = vrot.lane.b32.xlu0 %v4399, 64
    %v4406 = vpop.permute.xlu0 %4405
    %v4408 = vmul.f32 %v4399, %v4406
    %4410 = vrot.lane.b32.xlu0 %v4408, 32
    %v4411 = vpop.permute.xlu0 %4410
    %v4413 = vadd.f32 %v4403, %v4411
    %v4414 = vtanh.pop %v4413
    %4416 = vrot.lane.b32.xlu0 %v4414, 64
    %v4417 = vpop.permute.xlu0 %4416
    %v4419 = vmul.f32 %v4399, %v4417
    %v4421 = vrot.slane %v4419, 6
    %4422 = vrot.lane.b32.xlu0 %v4421, 32
    %v4423 = vpop.permute.xlu0 %4422
    %v4424 = vsel %vm52, %v4423, 0
    %4426 = vmatprep.subr.mxu0 0.0
    %4427 = vmatpush1.msra.mxu0 0.0
    %4428 = vmatprep.subr.mxu0 0.0
    %4429 = vmatpush1.msra.mxu0 0.0
    %4430 = vmatprep.subr.mxu0 0.0
    %4431 = vmatpush1.msra.mxu0 0.0
    %4432 = vmatprep.subr.mxu0 0.0
    %4433 = vmatpush1.msra.mxu0 0.0
    %4434 = vmatprep.subr.mxu0 0.0
    %4435 = vmatpush1.msra.mxu0 0.0
    %4436 = vmatprep.subr.mxu0 0.0
    %4437 = vmatpush1.msra.mxu0 0.0
    %4438 = vmatprep.subr.mxu0 0.0
    %4439 = vmatpush1.msra.mxu0 0.0
    %4440 = vmatprep.subr.mxu0 0.0
    %4441 = vmatpush1.msra.mxu0 0.0
    %4442 = vmatprep.subr.mxu0 0.0
    %4443 = vmatpush1.msra.mxu0 0.0
    %4444 = vmatprep.subr.mxu0 0.0
    %4445 = vmatpush1.msra.mxu0 0.0
    %4446 = vmatprep.subr.mxu0 0.0
    %4447 = vmatpush1.msra.mxu0 0.0
    %4448 = vmatprep.subr.mxu0 0.0
    %4449 = vmatpush1.msra.mxu0 0.0
    %4450 = vmatprep.subr.mxu0 0.0
    %4451 = vmatpush1.msra.mxu0 %v3917
    %4452 = vmatprep.subr.mxu0 0.0
    %4453 = vmatpush1.msra.mxu0 %v3916
    %4454 = vmatprep.subr.mxu0 0.0
    %4455 = vmatpush1.msra.mxu0 %v3915
    %4456 = vmatprep.subr.mxu0 0.0
    %4457 = vmatpush1.msra.mxu0 %v3914
    %4458 = vmatprep.subr.mxu0 0.0
    %4459 = vmatpush2.msra.mxu0 0.0
    %4460 = vmatprep.subr.mxu0 0.0
    %4461 = vmatpush2.msra.mxu0 0.0
    %4462 = vmatprep.subr.mxu0 0.0
    %4463 = vmatpush2.msra.mxu0 0.0
    %4464 = vmatprep.subr.mxu0 0.0
    %4465 = vmatpush2.msra.mxu0 0.0
    %4466 = vmatprep.subr.mxu0 0.0
    %4467 = vmatpush2.msra.mxu0 0.0
    %4468 = vmatprep.subr.mxu0 0.0
    %4469 = vmatpush2.msra.mxu0 0.0
    %4470 = vmatprep.subr.mxu0 0.0
    %4471 = vmatpush2.msra.mxu0 0.0
    %4472 = vmatprep.subr.mxu0 0.0
    %4473 = vmatpush2.msra.mxu0 0.0
    %4474 = vmatprep.subr.mxu0 0.0
    %4475 = vmatpush2.msra.mxu0 0.0
    %4476 = vmatprep.subr.mxu0 0.0
    %4477 = vmatpush2.msra.mxu0 0.0
    %4478 = vmatprep.subr.mxu0 0.0
    %4479 = vmatpush2.msra.mxu0 0.0
    %4480 = vmatprep.subr.mxu0 0.0
    %4481 = vmatpush2.msra.mxu0 0.0
    %4482 = vmatprep.subr.mxu0 0.0
    %4483 = vmatpush2.msra.mxu0 0.0
    %4484 = vmatprep.subr.mxu0 0.0
    %4485 = vmatpush2.msra.mxu0 0.0
    %4486 = vmatprep.subr.mxu0 0.0
    %4487 = vmatpush2.msra.mxu0 0.0
    %4488 = vmatprep.subr.mxu0 0.0
    %4489 = vmatpush2.msra.mxu0 0.0
    %4490 = vmatprep.mubr.f32.mxu0 0.0
    %4491 = vmatmul.mubr.f32.gmra.mxu0 %v4424
    %v4492 = vpop.f32.mrf.mxu0
    %v4493 = vadd.f32 0.0, %v4492
    %v4494 = vpop.f32.mrf.mxu0
    %4495 = vdwg.mxu0
    %v4496 = vadd.f32 %v4006, %v4493
    %v4497 = vmul.f32 %v4496, 0.5
    %v4498 = vsel %vm59, %v4496, %v4497
    %v4499 = vtanh.pop %v4498
    %v4500 = vmul.f32 %v4499, 0.5
    %v4501 = vadd.f32 %v4500, 0.5
    %v4502 = vsel %vm59, %v4499, %v4501
    %v4504 = vrot.slane %v4413, 6
    %v4506 = vmul.f32 %v4502, %v4504
    %4508 = vrot.lane.b32.xlu0 %v4502, 64
    %v4509 = vpop.permute.xlu0 %4508
    %v4511 = vmul.f32 %v4502, %v4509
    %4513 = vrot.lane.b32.xlu0 %v4511, 32
    %v4514 = vpop.permute.xlu0 %4513
    %v4516 = vadd.f32 %v4506, %v4514
    %v4517 = vtanh.pop %v4516
    %4519 = vrot.lane.b32.xlu0 %v4517, 64
    %v4520 = vpop.permute.xlu0 %4519
    %v4522 = vmul.f32 %v4502, %v4520
    %4524 = vrot.lane.b32.xlu0 %v4522, 32
    %v4525 = vpop.permute.xlu0 %4524
    %v4526 = vsel %vm52, %v4525, 0
    %4528 = vmatprep.subr.mxu0 0.0
    %4529 = vmatpush1.msra.mxu0 0.0
    %4530 = vmatprep.subr.mxu0 0.0
    %4531 = vmatpush1.msra.mxu0 0.0
    %4532 = vmatprep.subr.mxu0 0.0
    %4533 = vmatpush1.msra.mxu0 0.0
    %4534 = vmatprep.subr.mxu0 0.0
    %4535 = vmatpush1.msra.mxu0 0.0
    %4536 = vmatprep.subr.mxu0 0.0
    %4537 = vmatpush1.msra.mxu0 0.0
    %4538 = vmatprep.subr.mxu0 0.0
    %4539 = vmatpush1.msra.mxu0 0.0
    %4540 = vmatprep.subr.mxu0 0.0
    %4541 = vmatpush1.msra.mxu0 0.0
    %4542 = vmatprep.subr.mxu0 0.0
    %4543 = vmatpush1.msra.mxu0 0.0
    %4544 = vmatprep.subr.mxu0 0.0
    %4545 = vmatpush1.msra.mxu0 0.0
    %4546 = vmatprep.subr.mxu0 0.0
    %4547 = vmatpush1.msra.mxu0 0.0
    %4548 = vmatprep.subr.mxu0 0.0
    %4549 = vmatpush1.msra.mxu0 0.0
    %4550 = vmatprep.subr.mxu0 0.0
    %4551 = vmatpush1.msra.mxu0 0.0
    %4552 = vmatprep.subr.mxu0 0.0
    %4553 = vmatpush1.msra.mxu0 %v3917
    %4554 = vmatprep.subr.mxu0 0.0
    %4555 = vmatpush1.msra.mxu0 %v3916
    %4556 = vmatprep.subr.mxu0 0.0
    %4557 = vmatpush1.msra.mxu0 %v3915
    %4558 = vmatprep.subr.mxu0 0.0
    %4559 = vmatpush1.msra.mxu0 %v3914
    %4560 = vmatprep.subr.mxu0 0.0
    %4561 = vmatpush2.msra.mxu0 0.0
    %4562 = vmatprep.subr.mxu0 0.0
    %4563 = vmatpush2.msra.mxu0 0.0
    %4564 = vmatprep.subr.mxu0 0.0
    %4565 = vmatpush2.msra.mxu0 0.0
    %4566 = vmatprep.subr.mxu0 0.0
    %4567 = vmatpush2.msra.mxu0 0.0
    %4568 = vmatprep.subr.mxu0 0.0
    %4569 = vmatpush2.msra.mxu0 0.0
    %4570 = vmatprep.subr.mxu0 0.0
    %4571 = vmatpush2.msra.mxu0 0.0
    %4572 = vmatprep.subr.mxu0 0.0
    %4573 = vmatpush2.msra.mxu0 0.0
    %4574 = vmatprep.subr.mxu0 0.0
    %4575 = vmatpush2.msra.mxu0 0.0
    %4576 = vmatprep.subr.mxu0 0.0
    %4577 = vmatpush2.msra.mxu0 0.0
    %4578 = vmatprep.subr.mxu0 0.0
    %4579 = vmatpush2.msra.mxu0 0.0
    %4580 = vmatprep.subr.mxu0 0.0
    %4581 = vmatpush2.msra.mxu0 0.0
    %4582 = vmatprep.subr.mxu0 0.0
    %4583 = vmatpush2.msra.mxu0 0.0
    %4584 = vmatprep.subr.mxu0 0.0
    %4585 = vmatpush2.msra.mxu0 0.0
    %4586 = vmatprep.subr.mxu0 0.0
    %4587 = vmatpush2.msra.mxu0 0.0
    %4588 = vmatprep.subr.mxu0 0.0
    %4589 = vmatpush2.msra.mxu0 0.0
    %4590 = vmatprep.subr.mxu0 0.0
    %4591 = vmatpush2.msra.mxu0 0.0
    %4592 = vmatprep.mubr.f32.mxu0 0.0
    %4593 = vmatmul.mubr.f32.gmra.mxu0 %v4526
    %v4594 = vpop.f32.mrf.mxu0
    %v4595 = vadd.f32 0.0, %v4594
    %v4596 = vpop.f32.mrf.mxu0
    %4597 = vdwg.mxu0
    %v4599 = vrot.slane %v4595, 6
    %v4601 = vadd.f32 %v4006, %v4599
    %v4602 = vmul.f32 %v4601, 0.5
    %v4603 = vsel %vm59, %v4601, %v4602
    %v4604 = vtanh.pop %v4603
    %v4605 = vmul.f32 %v4604, 0.5
    %v4606 = vadd.f32 %v4605, 0.5
    %v4607 = vsel %vm59, %v4604, %v4606
    %v4609 = vrot.slane %v4516, 6
    %v4611 = vmul.f32 %v4607, %v4609
    %4613 = vrot.lane.b32.xlu0 %v4607, 64
    %v4614 = vpop.permute.xlu0 %4613
    %v4616 = vmul.f32 %v4607, %v4614
    %4618 = vrot.lane.b32.xlu0 %v4616, 32
    %v4619 = vpop.permute.xlu0 %4618
    %v4621 = vadd.f32 %v4611, %v4619
    %v4622 = vtanh.pop %v4621
    %4624 = vrot.lane.b32.xlu0 %v4622, 64
    %v4625 = vpop.permute.xlu0 %4624
    %v4627 = vmul.f32 %v4607, %v4625
    %v4629 = vrot.slane %v4627, 2
    %4630 = vrot.lane.b32.xlu0 %v4629, 32
    %v4631 = vpop.permute.xlu0 %4630
    %v4632 = vsel %vm52, %v4631, 0
    %4634 = vmatprep.subr.mxu0 0.0
    %4635 = vmatpush1.msra.mxu0 0.0
    %4636 = vmatprep.subr.mxu0 0.0
    %4637 = vmatpush1.msra.mxu0 0.0
    %4638 = vmatprep.subr.mxu0 0.0
    %4639 = vmatpush1.msra.mxu0 0.0
    %4640 = vmatprep.subr.mxu0 0.0
    %4641 = vmatpush1.msra.mxu0 0.0
    %4642 = vmatprep.subr.mxu0 0.0
    %4643 = vmatpush1.msra.mxu0 0.0
    %4644 = vmatprep.subr.mxu0 0.0
    %4645 = vmatpush1.msra.mxu0 0.0
    %4646 = vmatprep.subr.mxu0 0.0
    %4647 = vmatpush1.msra.mxu0 0.0
    %4648 = vmatprep.subr.mxu0 0.0
    %4649 = vmatpush1.msra.mxu0 0.0
    %4650 = vmatprep.subr.mxu0 0.0
    %4651 = vmatpush1.msra.mxu0 0.0
    %4652 = vmatprep.subr.mxu0 0.0
    %4653 = vmatpush1.msra.mxu0 0.0
    %4654 = vmatprep.subr.mxu0 0.0
    %4655 = vmatpush1.msra.mxu0 0.0
    %4656 = vmatprep.subr.mxu0 0.0
    %4657 = vmatpush1.msra.mxu0 0.0
    %4658 = vmatprep.subr.mxu0 0.0
    %4659 = vmatpush1.msra.mxu0 %v3917
    %4660 = vmatprep.subr.mxu0 0.0
    %4661 = vmatpush1.msra.mxu0 %v3916
    %4662 = vmatprep.subr.mxu0 0.0
    %4663 = vmatpush1.msra.mxu0 %v3915
    %4664 = vmatprep.subr.mxu0 0.0
    %4665 = vmatpush1.msra.mxu0 %v3914
    %4666 = vmatprep.subr.mxu0 0.0
    %4667 = vmatpush2.msra.mxu0 0.0
    %4668 = vmatprep.subr.mxu0 0.0
    %4669 = vmatpush2.msra.mxu0 0.0
    %4670 = vmatprep.subr.mxu0 0.0
    %4671 = vmatpush2.msra.mxu0 0.0
    %4672 = vmatprep.subr.mxu0 0.0
    %4673 = vmatpush2.msra.mxu0 0.0
    %4674 = vmatprep.subr.mxu0 0.0
    %4675 = vmatpush2.msra.mxu0 0.0
    %4676 = vmatprep.subr.mxu0 0.0
    %4677 = vmatpush2.msra.mxu0 0.0
    %4678 = vmatprep.subr.mxu0 0.0
    %4679 = vmatpush2.msra.mxu0 0.0
    %4680 = vmatprep.subr.mxu0 0.0
    %4681 = vmatpush2.msra.mxu0 0.0
    %4682 = vmatprep.subr.mxu0 0.0
    %4683 = vmatpush2.msra.mxu0 0.0
    %4684 = vmatprep.subr.mxu0 0.0
    %4685 = vmatpush2.msra.mxu0 0.0
    %4686 = vmatprep.subr.mxu0 0.0
    %4687 = vmatpush2.msra.mxu0 0.0
    %4688 = vmatprep.subr.mxu0 0.0
    %4689 = vmatpush2.msra.mxu0 0.0
    %4690 = vmatprep.subr.mxu0 0.0
    %4691 = vmatpush2.msra.mxu0 0.0
    %4692 = vmatprep.subr.mxu0 0.0
    %4693 = vmatpush2.msra.mxu0 0.0
    %4694 = vmatprep.subr.mxu0 0.0
    %4695 = vmatpush2.msra.mxu0 0.0
    %4696 = vmatprep.subr.mxu0 0.0
    %4697 = vmatpush2.msra.mxu0 0.0
    %4698 = vmatprep.mubr.f32.mxu0 0.0
    %4699 = vmatmul.mubr.f32.gmra.mxu0 %v4632
    %v4700 = vpop.f32.mrf.mxu0
    %v4701 = vadd.f32 0.0, %v4700
    %v4702 = vpop.f32.mrf.mxu0
    %4703 = vdwg.mxu0
    %v4705 = vrot.slane %v4701, 4
    %v4707 = vadd.f32 %v4006, %v4705
    %v4708 = vmul.f32 %v4707, 0.5
    %v4709 = vsel %vm59, %v4707, %v4708
    %v4710 = vtanh.pop %v4709
    %v4711 = vmul.f32 %v4710, 0.5
    %v4712 = vadd.f32 %v4711, 0.5
    %v4713 = vsel %vm59, %v4710, %v4712
    %v4715 = vrot.slane %v4621, 6
    %v4717 = vmul.f32 %v4713, %v4715
    %4719 = vrot.lane.b32.xlu0 %v4713, 64
    %v4720 = vpop.permute.xlu0 %4719
    %v4722 = vmul.f32 %v4713, %v4720
    %4724 = vrot.lane.b32.xlu0 %v4722, 32
    %v4725 = vpop.permute.xlu0 %4724
    %v4727 = vadd.f32 %v4717, %v4725
    %v4728 = vtanh.pop %v4727
    %4730 = vrot.lane.b32.xlu0 %v4728, 64
    %v4731 = vpop.permute.xlu0 %4730
    %v4733 = vmul.f32 %v4713, %v4731
    %v4735 = vrot.slane %v4733, 4
    %4736 = vrot.lane.b32.xlu0 %v4735, 32
    %v4737 = vpop.permute.xlu0 %4736
    %v4738 = vsel %vm52, %v4737, 0
    %4740 = vmatprep.subr.mxu0 0.0
    %4741 = vmatpush1.msra.mxu0 0.0
    %4742 = vmatprep.subr.mxu0 0.0
    %4743 = vmatpush1.msra.mxu0 0.0
    %4744 = vmatprep.subr.mxu0 0.0
    %4745 = vmatpush1.msra.mxu0 0.0
    %4746 = vmatprep.subr.mxu0 0.0
    %4747 = vmatpush1.msra.mxu0 0.0
    %4748 = vmatprep.subr.mxu0 0.0
    %4749 = vmatpush1.msra.mxu0 0.0
    %4750 = vmatprep.subr.mxu0 0.0
    %4751 = vmatpush1.msra.mxu0 0.0
    %4752 = vmatprep.subr.mxu0 0.0
    %4753 = vmatpush1.msra.mxu0 0.0
    %4754 = vmatprep.subr.mxu0 0.0
    %4755 = vmatpush1.msra.mxu0 0.0
    %4756 = vmatprep.subr.mxu0 0.0
    %4757 = vmatpush1.msra.mxu0 0.0
    %4758 = vmatprep.subr.mxu0 0.0
    %4759 = vmatpush1.msra.mxu0 0.0
    %4760 = vmatprep.subr.mxu0 0.0
    %4761 = vmatpush1.msra.mxu0 0.0
    %4762 = vmatprep.subr.mxu0 0.0
    %4763 = vmatpush1.msra.mxu0 0.0
    %4764 = vmatprep.subr.mxu0 0.0
    %4765 = vmatpush1.msra.mxu0 %v3917
    %4766 = vmatprep.subr.mxu0 0.0
    %4767 = vmatpush1.msra.mxu0 %v3916
    %4768 = vmatprep.subr.mxu0 0.0
    %4769 = vmatpush1.msra.mxu0 %v3915
    %4770 = vmatprep.subr.mxu0 0.0
    %4771 = vmatpush1.msra.mxu0 %v3914
    %4772 = vmatprep.subr.mxu0 0.0
    %4773 = vmatpush2.msra.mxu0 0.0
    %4774 = vmatprep.subr.mxu0 0.0
    %4775 = vmatpush2.msra.mxu0 0.0
    %4776 = vmatprep.subr.mxu0 0.0
    %4777 = vmatpush2.msra.mxu0 0.0
    %4778 = vmatprep.subr.mxu0 0.0
    %4779 = vmatpush2.msra.mxu0 0.0
    %4780 = vmatprep.subr.mxu0 0.0
    %4781 = vmatpush2.msra.mxu0 0.0
    %4782 = vmatprep.subr.mxu0 0.0
    %4783 = vmatpush2.msra.mxu0 0.0
    %4784 = vmatprep.subr.mxu0 0.0
    %4785 = vmatpush2.msra.mxu0 0.0
    %4786 = vmatprep.subr.mxu0 0.0
    %4787 = vmatpush2.msra.mxu0 0.0
    %4788 = vmatprep.subr.mxu0 0.0
    %4789 = vmatpush2.msra.mxu0 0.0
    %4790 = vmatprep.subr.mxu0 0.0
    %4791 = vmatpush2.msra.mxu0 0.0
    %4792 = vmatprep.subr.mxu0 0.0
    %4793 = vmatpush2.msra.mxu0 0.0
    %4794 = vmatprep.subr.mxu0 0.0
    %4795 = vmatpush2.msra.mxu0 0.0
    %4796 = vmatprep.subr.mxu0 0.0
    %4797 = vmatpush2.msra.mxu0 0.0
    %4798 = vmatprep.subr.mxu0 0.0
    %4799 = vmatpush2.msra.mxu0 0.0
    %4800 = vmatprep.subr.mxu0 0.0
    %4801 = vmatpush2.msra.mxu0 0.0
    %4802 = vmatprep.subr.mxu0 0.0
    %4803 = vmatpush2.msra.mxu0 0.0
    %4804 = vmatprep.mubr.f32.mxu0 0.0
    %4805 = vmatmul.mubr.f32.gmra.mxu0 %v4738
    %v4806 = vpop.f32.mrf.mxu0
    %v4807 = vadd.f32 0.0, %v4806
    %v4808 = vpop.f32.mrf.mxu0
    %4809 = vdwg.mxu0
    %v4811 = vrot.slane %v4807, 2
    %v4813 = vadd.f32 %v4006, %v4811
    %v4814 = vmul.f32 %v4813, 0.5
    %v4815 = vsel %vm59, %v4813, %v4814
    %v4816 = vtanh.pop %v4815
    %v4817 = vmul.f32 %v4816, 0.5
    %v4818 = vadd.f32 %v4817, 0.5
    %v4819 = vsel %vm59, %v4816, %v4818
    %v4821 = vrot.slane %v4727, 6
    %v4823 = vmul.f32 %v4819, %v4821
    %4825 = vrot.lane.b32.xlu0 %v4819, 64
    %v4826 = vpop.permute.xlu0 %4825
    %v4828 = vmul.f32 %v4819, %v4826
    %4830 = vrot.lane.b32.xlu0 %v4828, 32
    %v4831 = vpop.permute.xlu0 %4830
    %v4833 = vadd.f32 %v4823, %v4831
    %v4834 = vtanh.pop %v4833
    %4836 = vrot.lane.b32.xlu0 %v4834, 64
    %v4837 = vpop.permute.xlu0 %4836
    %v4839 = vmul.f32 %v4819, %v4837
    %v4840 = vld [vmem:[%s4] sm:$0xff]
    %v4841 = vld [vmem:[%s4 + $0x8] sm:$0xff]
    %v4842 = vld [vmem:[%s4 + $0x10] sm:$0xff]
    %v4843 = vld [vmem:[%s4 + $0x18] sm:$0xff]
    %v4844 = vld [vmem:[%s5] sm:$0x1]
    %v4846 = vlaneseq
    %v4847 = vshrl.u32 %v4846, 7
    %v4848 = vsub.s32 0, %v4847
    %v4849 = vrot.slane %v4844, %v4848
    %v4852 = vrot.slane %v4839, 6
    %4853 = vrot.lane.b32.xlu0 %v4852, 32
    %v4854 = vpop.permute.xlu0 %4853
    %v4855 = vsel %vm52, %v4854, 0
    %4857 = vmatprep.subr.mxu0 0.0
    %4858 = vmatpush1.msra.mxu0 0.0
    %4859 = vmatprep.subr.mxu0 0.0
    %4860 = vmatpush1.msra.mxu0 0.0
    %4861 = vmatprep.subr.mxu0 0.0
    %4862 = vmatpush1.msra.mxu0 0.0
    %4863 = vmatprep.subr.mxu0 0.0
    %4864 = vmatpush1.msra.mxu0 0.0
    %4865 = vmatprep.subr.mxu0 0.0
    %4866 = vmatpush1.msra.mxu0 0.0
    %4867 = vmatprep.subr.mxu0 0.0
    %4868 = vmatpush1.msra.mxu0 0.0
    %4869 = vmatprep.subr.mxu0 0.0
    %4870 = vmatpush1.msra.mxu0 0.0
    %4871 = vmatprep.subr.mxu0 0.0
    %4872 = vmatpush1.msra.mxu0 0.0
    %4873 = vmatprep.subr.mxu0 0.0
    %4874 = vmatpush1.msra.mxu0 0.0
    %4875 = vmatprep.subr.mxu0 0.0
    %4876 = vmatpush1.msra.mxu0 0.0
    %4877 = vmatprep.subr.mxu0 0.0
    %4878 = vmatpush1.msra.mxu0 0.0
    %4879 = vmatprep.subr.mxu0 0.0
    %4880 = vmatpush1.msra.mxu0 0.0
    %4881 = vmatprep.subr.mxu0 0.0
    %4882 = vmatpush1.msra.mxu0 %v4843
    %4883 = vmatprep.subr.mxu0 0.0
    %4884 = vmatpush1.msra.mxu0 %v4842
    %4885 = vmatprep.subr.mxu0 0.0
    %4886 = vmatpush1.msra.mxu0 %v4841
    %4887 = vmatprep.subr.mxu0 0.0
    %4888 = vmatpush1.msra.mxu0 %v4840
    %4889 = vmatprep.subr.mxu0 0.0
    %4890 = vmatpush2.msra.mxu0 0.0
    %4891 = vmatprep.subr.mxu0 0.0
    %4892 = vmatpush2.msra.mxu0 0.0
    %4893 = vmatprep.subr.mxu0 0.0
    %4894 = vmatpush2.msra.mxu0 0.0
    %4895 = vmatprep.subr.mxu0 0.0
    %4896 = vmatpush2.msra.mxu0 0.0
    %4897 = vmatprep.subr.mxu0 0.0
    %4898 = vmatpush2.msra.mxu0 0.0
    %4899 = vmatprep.subr.mxu0 0.0
    %4900 = vmatpush2.msra.mxu0 0.0
    %4901 = vmatprep.subr.mxu0 0.0
    %4902 = vmatpush2.msra.mxu0 0.0
    %4903 = vmatprep.subr.mxu0 0.0
    %4904 = vmatpush2.msra.mxu0 0.0
    %4905 = vmatprep.subr.mxu0 0.0
    %4906 = vmatpush2.msra.mxu0 0.0
    %4907 = vmatprep.subr.mxu0 0.0
    %4908 = vmatpush2.msra.mxu0 0.0
    %4909 = vmatprep.subr.mxu0 0.0
    %4910 = vmatpush2.msra.mxu0 0.0
    %4911 = vmatprep.subr.mxu0 0.0
    %4912 = vmatpush2.msra.mxu0 0.0
    %4913 = vmatprep.subr.mxu0 0.0
    %4914 = vmatpush2.msra.mxu0 0.0
    %4915 = vmatprep.subr.mxu0 0.0
    %4916 = vmatpush2.msra.mxu0 0.0
    %4917 = vmatprep.subr.mxu0 0.0
    %4918 = vmatpush2.msra.mxu0 0.0
    %4919 = vmatprep.subr.mxu0 0.0
    %4920 = vmatpush2.msra.mxu0 0.0
    %4921 = vmatprep.mubr.f32.mxu0 0.0
    %4922 = vmatmul.mubr.f32.gmra.mxu0 %v4855
    %v4923 = vpop.f32.mrf.mxu0
    %v4924 = vadd.f32 %v4849, %v4923
    %v4925 = vpop.f32.mrf.mxu0
    %4926 = vdwg.mxu0
    %vm4927 = vcmask 25600
    %4928 = vst.msk [vmem:[#allocation8] sm:$0x3] %vm4927, %v4924
    // Predicated region
    $region34: #{lstm_model_forward.1} parent=1 // pred_check
      _
    $region35: #{lstm_model_forward.1} parent=1 // pred_check_branch
      %4930 = sbr.rel (0) target = $region37
    $region36: #{lstm_model_forward.1} parent=1 // pred_region
      %s4932 = ssub.s32 32, 32
      %4933 = vsyncadd [#allocation5], %s4932
      %s4935 = sshll.u32 [#allocation8], 4
      %s4936 = int_to_ptr.vmem [resolvable:$true] %s4935
      %4938 = dma.vmem_to_hbm [thread:$0]  %s4936, 32, %s6, [#allocation5]
    $region37: #{lstm_model_forward.1} parent=1 // pred_fallthru
      _
    // Predicated region
    $region38: #{lstm_model_forward.1} parent=1 // pred_check
      _
    $region39: #{lstm_model_forward.1} parent=1 // pred_check_branch
      %4940 = sbr.rel (0) target = $region41
    $region40: #{lstm_model_forward.1} parent=1 // pred_region
      %4941 = dma.done [#allocation5], 32
    $region41: #{lstm_model_forward.1} parent=1 // pred_fallthru
      _
    %4942 = vsyncpa [#allocation4], 1
    %4943 = vsyncpa [#allocation7], 1
    %4944 = vsyncpa [#allocation5], 1

</llo_original>
